<compile_context>
chip_gen: v6e
topology: v6e:2x2x1
jax: 0.10.0
libtpu: 0.0.40
codegen_flags: <defaults>
</compile_context>

<pallas_src>
import functools

import jax
import jax.numpy as jnp
from jax.experimental import pallas as pl
from jax.experimental.pallas import tpu as pltpu


CONV_CFG = [  # (Cin, Cout, k, stride, pad) -- stride is always 2
    (1, 4, 4, 2, 1),
    (4, 8, 4, 2, 1),
    (8, 16, 4, 2, 1),
    (16, 32, 4, 2, 1),
    (32, 64, 4, 2, 1),
    (64, 128, 2, 2, 0),
]
INPUT_HW = 64  # encoder requires 64x64 input (1x1 spatial after 6 convs)


# ----------------------------------------------------------------------------
# Fused kernel: entire forward pass in one invocation (no grid).
# ----------------------------------------------------------------------------
def _fused_kernel(nconv, ks, *refs):
    x_ref = refs[0]
    s_refs = refs[1:1 + nconv]                      # (k, B*Ho, B*H)   per conv
    a_refs = refs[1 + nconv:1 + 2 * nconv]          # (k, W*Cin, Wo*Cout)
    cb_refs = refs[1 + 2 * nconv:1 + 3 * nconv]     # (1, Wo*Cout)
    (fc1w_ref, fc1b_ref, w0_ref, b0_ref, w1_ref, b1_ref, w2_ref, b2_ref,
     o_ref) = refs[1 + 3 * nconv:]

    x = x_ref[...]                                  # (B*H, W*Cin) merged layout
    for li in range(nconv):
        y = cb_refs[li][...]                        # (1, 128) bias row, broadcasts
        for di in range(ks[li]):
            rows = jnp.dot(s_refs[li][di], x,       # stride-2 row taps + pad
                           preferred_element_type=jnp.float32)
            y = y + jnp.dot(rows, a_refs[li][di],   # col taps + channel contract
                            preferred_element_type=jnp.float32)
        x = jnp.where(y > 0, y, 0.01 * y)           # LeakyReLU(0.01)

    # x is now (B, 128) == torch.flatten(conv6_out, start_dim=1)
    feat = jax.nn.sigmoid(
        jnp.dot(x, fc1w_ref[...], preferred_element_type=jnp.float32)
        + fc1b_ref[...])                            # (B, 64)

    # Batched reward heads (concat / block-diagonal weights).
    h = jnp.maximum(
        jnp.dot(feat, w0_ref[...], preferred_element_type=jnp.float32)
        + b0_ref[...], 0.0)
    h = jnp.maximum(
        jnp.dot(h, w1_ref[...], preferred_element_type=jnp.float32)
        + b1_ref[...], 0.0)
    o_ref[...] = jax.nn.sigmoid(
        jnp.dot(h, w2_ref[...], preferred_element_type=jnp.float32)
        + b2_ref[...])                              # (B, n_rewards)


# ----------------------------------------------------------------------------
# Weight / index packing (pure JAX, tiny, runs under the same jit).
# ----------------------------------------------------------------------------
def _row_select_mats(B, H, Ho, k, p):
    """S_di[b*Ho+oh, b'*H+h] = 1 iff b==b' and h == 2*oh + di - p (else 0)."""
    rows = jnp.arange(B * Ho)
    cols = jnp.arange(B * H)
    b_r, oh_r = rows // Ho, rows % Ho
    b_c, h_c = cols // H, cols % H
    mats = []
    for di in range(k):
        hit = (b_r[:, None] == b_c[None, :]) & (
            h_c[None, :] == 2 * oh_r[:, None] + (di - p))
        mats.append(hit.astype(jnp.float32))
    return jnp.stack(mats, axis=0)                  # (k, B*Ho, B*H)


def _col_weight_mats(weight, W_in, Wo, p):
    """A_di[w*Cin+ci, ow*Cout+co] = weight[co,ci,di,w+p-2*ow] (0 if tap OOB)."""
    Cout, Cin, kh, kw = weight.shape
    w_idx = jnp.arange(W_in)
    ow_idx = jnp.arange(Wo)
    dj = w_idx[:, None] - 2 * ow_idx[None, :] + p   # (W_in, Wo)
    valid = (dj >= 0) & (dj < kw)
    dj_c = jnp.clip(dj, 0, kw - 1)
    mats = []
    for di in range(kh):
        wd = weight[:, :, di, :]                    # (Cout, Cin, kw)
        g = wd[:, :, dj_c]                          # (Cout, Cin, W_in, Wo)
        g = jnp.where(valid[None, None, :, :], g, 0.0)
        a = jnp.transpose(g, (2, 1, 3, 0)).reshape(W_in * Cin, Wo * Cout)
        mats.append(a)
    return jnp.stack(mats, axis=0)                  # (kh, W_in*Cin, Wo*Cout)


# ----------------------------------------------------------------------------
# Forward pass = test_RewardGen.forward
# ----------------------------------------------------------------------------
@jax.jit
def reward_gen_forward(params, x):
    B = x.shape[0]
    n_rewards = len(params["heads"])
    H = INPUT_HW
    assert x.shape == (B, 1, H, H)

    # Pack conv layers into (S, A, bias-row) operands.
    s_ops, a_ops, cb_ops, ks = [], [], [], []
    h = H
    for (cin, cout, k, s, p), c in zip(CONV_CFG, params["convs"]):
        ho = (h + 2 * p - k) // s + 1
        s_ops.append(_row_select_mats(B, h, ho, k, p))
        a_ops.append(_col_weight_mats(c["w"], h, ho, p))
        cb_ops.append(jnp.tile(c["b"], ho).reshape(1, ho * cout))
        ks.append(k)
        h = ho

    # Pack fc1 + batched reward heads.
    fc1_w, fc1_b = params["fc1"]
    heads = params["heads"]
    w0 = jnp.concatenate([l[0][0] for l in heads], axis=1)          # (64, 32*nr)
    b0 = jnp.concatenate([l[0][1] for l in heads]).reshape(1, -1)
    w1 = jax.scipy.linalg.block_diag(*[l[1][0] for l in heads])     # (32nr, 32nr)
    b1 = jnp.concatenate([l[1][1] for l in heads]).reshape(1, -1)
    w2 = jax.scipy.linalg.block_diag(*[l[2][0] for l in heads])     # (32nr, nr)
    b2 = jnp.concatenate([l[2][1] for l in heads]).reshape(1, -1)

    x0 = x.reshape(B * H, H)          # merged (B*H, W*Cin) layout, Cin == 1

    operands = ([x0] + s_ops + a_ops + cb_ops
                + [fc1_w, fc1_b.reshape(1, -1), w0, b0, w1, b1, w2, b2])

    out_bn = pl.pallas_call(
        functools.partial(_fused_kernel, len(CONV_CFG), tuple(ks)),
        out_shape=jax.ShapeDtypeStruct((B, n_rewards), jnp.float32),
        in_specs=[pl.BlockSpec(memory_space=pltpu.MemorySpace.VMEM)]
        * len(operands),
        out_specs=pl.BlockSpec(memory_space=pltpu.MemorySpace.VMEM),
    )(*operands)

    # torch.cat([head_r(x) for r in range(nr)], dim=0): row index = r*B + b.
    return out_bn.T.reshape(n_rewards * B, 1)


# ----------------------------------------------------------------------------
# Plain-JAX reference (for in-script validation of the fused kernel).
# ----------------------------------------------------------------------------
def reference_forward(params, x):
    h = x
    for (cin, cout, k, s, p), c in zip(CONV_CFG, params["convs"]):
        h = jax.lax.conv_general_dilated(
            h, c["w"], window_strides=(s, s), padding=[(p, p), (p, p)],
            dimension_numbers=("NCHW", "OIHW", "NCHW"),
            precision=jax.lax.Precision.HIGHEST)
        h = h + c["b"].reshape(1, -1, 1, 1)
        h = jnp.where(h > 0, h, 0.01 * h)
    B = h.shape[0]
    h = h.reshape(B, -1)
    fc1_w, fc1_b = params["fc1"]
    feat = jax.nn.sigmoid(h @ fc1_w + fc1_b)
    outs = []
    for (w0, b0), (w1, b1), (w2, b2) in params["heads"]:
        y = jnp.maximum(feat @ w0 + b0, 0.0)
        y = jnp.maximum(y @ w1 + b1, 0.0)
        outs.append(jax.nn.sigmoid(y @ w2 + b2))
    return jnp.concatenate(outs, axis=0)


# ----------------------------------------------------------------------------
# Deterministic parameter construction
# ----------------------------------------------------------------------------
def make_params(n_rewards, key):
    def nxt():
        nonlocal key
        key, sub = jax.random.split(key)
        return sub

    convs = []
    for (cin, cout, k, s, p) in CONV_CFG:
        w = jax.random.normal(nxt(), (cout, cin, k, k), jnp.float32) * 0.1
        b = jax.random.normal(nxt(), (cout,), jnp.float32) * 0.05
        convs.append(dict(w=w, b=b))

    fc1_w = jax.random.normal(nxt(), (128, 64), jnp.float32) * 0.1
    fc1_b = jax.random.normal(nxt(), (64,), jnp.float32) * 0.05

    heads = []
    for _ in range(n_rewards):
        layers = []
        for (din, dout) in [(64, 32), (32, 32), (32, 1)]:
            w = jax.random.normal(nxt(), (din, dout), jnp.float32) * 0.1
            b = jax.random.normal(nxt(), (dout,), jnp.float32) * 0.05
            layers.append((w, b))
        heads.append(layers)

    return dict(convs=convs, fc1=(fc1_w, fc1_b), heads=heads)


if __name__ == "__main__":
    B, n_rewards = 2, 3
    key = jax.random.PRNGKey(0)
    key, pkey, xkey = jax.random.split(key, 3)
    params = make_params(n_rewards, pkey)
    x = jax.random.normal(xkey, (B, 1, INPUT_HW, INPUT_HW), jnp.float32)

    out = reward_gen_forward(params, x)
    out = jax.block_until_ready(out)
    assert out.shape == (n_rewards * B, 1), out.shape
    assert bool(jnp.all(jnp.isfinite(out)))

    # Validate the fused Pallas kernel against the plain-JAX reference.
    with jax.default_matmul_precision("float32"):
        ref = reference_forward(params, x)
    assert bool(jnp.allclose(out, ref, atol=2e-2, rtol=0.0)), (
        float(jnp.max(jnp.abs(out - ref))))

    print("KERNEL_OK")
</pallas_src>

<mosaic_0001>
module attributes {stable_mosaic.version = 11 : i64} {
  func.func @_fused_kernel(%arg0: memref<128x64xf32, #tpu.memory_space<vmem>>, %arg1: memref<4x64x128xf32, #tpu.memory_space<vmem>>, %arg2: memref<4x32x64xf32, #tpu.memory_space<vmem>>, %arg3: memref<4x16x32xf32, #tpu.memory_space<vmem>>, %arg4: memref<4x8x16xf32, #tpu.memory_space<vmem>>, %arg5: memref<4x4x8xf32, #tpu.memory_space<vmem>>, %arg6: memref<2x2x4xf32, #tpu.memory_space<vmem>>, %arg7: memref<4x64x128xf32, #tpu.memory_space<vmem>>, %arg8: memref<4x128x128xf32, #tpu.memory_space<vmem>>, %arg9: memref<4x128x128xf32, #tpu.memory_space<vmem>>, %arg10: memref<4x128x128xf32, #tpu.memory_space<vmem>>, %arg11: memref<4x128x128xf32, #tpu.memory_space<vmem>>, %arg12: memref<2x128x128xf32, #tpu.memory_space<vmem>>, %arg13: memref<1x128xf32, #tpu.memory_space<vmem>>, %arg14: memref<1x128xf32, #tpu.memory_space<vmem>>, %arg15: memref<1x128xf32, #tpu.memory_space<vmem>>, %arg16: memref<1x128xf32, #tpu.memory_space<vmem>>, %arg17: memref<1x128xf32, #tpu.memory_space<vmem>>, %arg18: memref<1x128xf32, #tpu.memory_space<vmem>>, %arg19: memref<128x64xf32, #tpu.memory_space<vmem>>, %arg20: memref<1x64xf32, #tpu.memory_space<vmem>>, %arg21: memref<64x96xf32, #tpu.memory_space<vmem>>, %arg22: memref<1x96xf32, #tpu.memory_space<vmem>>, %arg23: memref<96x96xf32, #tpu.memory_space<vmem>>, %arg24: memref<1x96xf32, #tpu.memory_space<vmem>>, %arg25: memref<96x3xf32, #tpu.memory_space<vmem>>, %arg26: memref<1x3xf32, #tpu.memory_space<vmem>>, %arg27: memref<2x3xf32, #tpu.memory_space<vmem>>) attributes {dimension_semantics = [], scalar_prefetch = 0 : i64, scratch_operands = 0 : i64, tpu.core_type = #tpu.core_type<tc>} {
    %c0 = arith.constant 0 : index
    %c0_0 = arith.constant 0 : index
    %0 = vector.load %arg0[%c0, %c0_0] : memref<128x64xf32, #tpu.memory_space<vmem>>, vector<128x64xf32>
    %c0_1 = arith.constant 0 : index
    %c0_2 = arith.constant 0 : index
    %1 = vector.load %arg13[%c0_1, %c0_2] : memref<1x128xf32, #tpu.memory_space<vmem>>, vector<1x128xf32>
    %c0_3 = arith.constant 0 : index
    %c0_4 = arith.constant 0 : index
    %c0_5 = arith.constant 0 : index
    %2 = vector.load %arg1[%c0_3, %c0_4, %c0_5] : memref<4x64x128xf32, #tpu.memory_space<vmem>>, vector<1x64x128xf32>
    %3 = vector.shape_cast %2 : vector<1x64x128xf32> to vector<64x128xf32>
    %cst = arith.constant dense<0.000000e+00> : vector<64x64xf32>
    %4 = tpu.matmul %3, %0, %cst {dimension_numbers = #tpu.dot_dimension_numbers<[1], [0], [0], [1], [0, 0, 1, 1], [], []>} : vector<64x128xf32>, vector<128x64xf32>, vector<64x64xf32> -> vector<64x64xf32>
    %c0_6 = arith.constant 0 : index
    %c0_7 = arith.constant 0 : index
    %c0_8 = arith.constant 0 : index
    %5 = vector.load %arg7[%c0_6, %c0_7, %c0_8] : memref<4x64x128xf32, #tpu.memory_space<vmem>>, vector<1x64x128xf32>
    %6 = vector.shape_cast %5 : vector<1x64x128xf32> to vector<64x128xf32>
    %cst_9 = arith.constant dense<0.000000e+00> : vector<64x128xf32>
    %7 = tpu.matmul %4, %6, %cst_9 {dimension_numbers = #tpu.dot_dimension_numbers<[1], [0], [0], [1], [0, 0, 1, 1], [], []>} : vector<64x64xf32>, vector<64x128xf32>, vector<64x128xf32> -> vector<64x128xf32>
    %8 = vector.broadcast %1 : vector<1x128xf32> to vector<64x128xf32>
    %9 = arith.addf %8, %7 : vector<64x128xf32>
    %c1 = arith.constant 1 : index
    %c0_10 = arith.constant 0 : index
    %c0_11 = arith.constant 0 : index
    %10 = vector.load %arg1[%c1, %c0_10, %c0_11] : memref<4x64x128xf32, #tpu.memory_space<vmem>>, vector<1x64x128xf32>
    %11 = vector.shape_cast %10 : vector<1x64x128xf32> to vector<64x128xf32>
    %cst_12 = arith.constant dense<0.000000e+00> : vector<64x64xf32>
    %12 = tpu.matmul %11, %0, %cst_12 {dimension_numbers = #tpu.dot_dimension_numbers<[1], [0], [0], [1], [0, 0, 1, 1], [], []>} : vector<64x128xf32>, vector<128x64xf32>, vector<64x64xf32> -> vector<64x64xf32>
    %c1_13 = arith.constant 1 : index
    %c0_14 = arith.constant 0 : index
    %c0_15 = arith.constant 0 : index
    %13 = vector.load %arg7[%c1_13, %c0_14, %c0_15] : memref<4x64x128xf32, #tpu.memory_space<vmem>>, vector<1x64x128xf32>
    %14 = vector.shape_cast %13 : vector<1x64x128xf32> to vector<64x128xf32>
    %cst_16 = arith.constant dense<0.000000e+00> : vector<64x128xf32>
    %15 = tpu.matmul %12, %14, %cst_16 {dimension_numbers = #tpu.dot_dimension_numbers<[1], [0], [0], [1], [0, 0, 1, 1], [], []>} : vector<64x64xf32>, vector<64x128xf32>, vector<64x128xf32> -> vector<64x128xf32>
    %16 = arith.addf %9, %15 : vector<64x128xf32>
    %c2 = arith.constant 2 : index
    %c0_17 = arith.constant 0 : index
    %c0_18 = arith.constant 0 : index
    %17 = vector.load %arg1[%c2, %c0_17, %c0_18] : memref<4x64x128xf32, #tpu.memory_space<vmem>>, vector<1x64x128xf32>
    %18 = vector.shape_cast %17 : vector<1x64x128xf32> to vector<64x128xf32>
    %cst_19 = arith.constant dense<0.000000e+00> : vector<64x64xf32>
    %19 = tpu.matmul %18, %0, %cst_19 {dimension_numbers = #tpu.dot_dimension_numbers<[1], [0], [0], [1], [0, 0, 1, 1], [], []>} : vector<64x128xf32>, vector<128x64xf32>, vector<64x64xf32> -> vector<64x64xf32>
    %c2_20 = arith.constant 2 : index
    %c0_21 = arith.constant 0 : index
    %c0_22 = arith.constant 0 : index
    %20 = vector.load %arg7[%c2_20, %c0_21, %c0_22] : memref<4x64x128xf32, #tpu.memory_space<vmem>>, vector<1x64x128xf32>
    %21 = vector.shape_cast %20 : vector<1x64x128xf32> to vector<64x128xf32>
    %cst_23 = arith.constant dense<0.000000e+00> : vector<64x128xf32>
    %22 = tpu.matmul %19, %21, %cst_23 {dimension_numbers = #tpu.dot_dimension_numbers<[1], [0], [0], [1], [0, 0, 1, 1], [], []>} : vector<64x64xf32>, vector<64x128xf32>, vector<64x128xf32> -> vector<64x128xf32>
    %23 = arith.addf %16, %22 : vector<64x128xf32>
    %c3 = arith.constant 3 : index
    %c0_24 = arith.constant 0 : index
    %c0_25 = arith.constant 0 : index
    %24 = vector.load %arg1[%c3, %c0_24, %c0_25] : memref<4x64x128xf32, #tpu.memory_space<vmem>>, vector<1x64x128xf32>
    %25 = vector.shape_cast %24 : vector<1x64x128xf32> to vector<64x128xf32>
    %cst_26 = arith.constant dense<0.000000e+00> : vector<64x64xf32>
    %26 = tpu.matmul %25, %0, %cst_26 {dimension_numbers = #tpu.dot_dimension_numbers<[1], [0], [0], [1], [0, 0, 1, 1], [], []>} : vector<64x128xf32>, vector<128x64xf32>, vector<64x64xf32> -> vector<64x64xf32>
    %c3_27 = arith.constant 3 : index
    %c0_28 = arith.constant 0 : index
    %c0_29 = arith.constant 0 : index
    %27 = vector.load %arg7[%c3_27, %c0_28, %c0_29] : memref<4x64x128xf32, #tpu.memory_space<vmem>>, vector<1x64x128xf32>
    %28 = vector.shape_cast %27 : vector<1x64x128xf32> to vector<64x128xf32>
    %cst_30 = arith.constant dense<0.000000e+00> : vector<64x128xf32>
    %29 = tpu.matmul %26, %28, %cst_30 {dimension_numbers = #tpu.dot_dimension_numbers<[1], [0], [0], [1], [0, 0, 1, 1], [], []>} : vector<64x64xf32>, vector<64x128xf32>, vector<64x128xf32> -> vector<64x128xf32>
    %30 = arith.addf %23, %29 : vector<64x128xf32>
    %cst_31 = arith.constant 0.000000e+00 : f32
    %31 = vector.broadcast %cst_31 : f32 to vector<64x128xf32>
    %32 = arith.cmpf ogt, %30, %31 : vector<64x128xf32>
    %cst_32 = arith.constant 0.00999999977 : f32
    %33 = vector.broadcast %cst_32 : f32 to vector<64x128xf32>
    %34 = arith.mulf %33, %30 : vector<64x128xf32>
    %35 = arith.select %32, %30, %34 : vector<64x128xi1>, vector<64x128xf32>
    %c0_33 = arith.constant 0 : index
    %c0_34 = arith.constant 0 : index
    %36 = vector.load %arg14[%c0_33, %c0_34] : memref<1x128xf32, #tpu.memory_space<vmem>>, vector<1x128xf32>
    %c0_35 = arith.constant 0 : index
    %c0_36 = arith.constant 0 : index
    %c0_37 = arith.constant 0 : index
    %37 = vector.load %arg2[%c0_35, %c0_36, %c0_37] : memref<4x32x64xf32, #tpu.memory_space<vmem>>, vector<1x32x64xf32>
    %38 = vector.shape_cast %37 : vector<1x32x64xf32> to vector<32x64xf32>
    %cst_38 = arith.constant dense<0.000000e+00> : vector<32x128xf32>
    %39 = tpu.matmul %38, %35, %cst_38 {dimension_numbers = #tpu.dot_dimension_numbers<[1], [0], [0], [1], [0, 0, 1, 1], [], []>} : vector<32x64xf32>, vector<64x128xf32>, vector<32x128xf32> -> vector<32x128xf32>
    %c0_39 = arith.constant 0 : index
    %c0_40 = arith.constant 0 : index
    %c0_41 = arith.constant 0 : index
    %40 = vector.load %arg8[%c0_39, %c0_40, %c0_41] : memref<4x128x128xf32, #tpu.memory_space<vmem>>, vector<1x128x128xf32>
    %41 = vector.shape_cast %40 : vector<1x128x128xf32> to vector<128x128xf32>
    %cst_42 = arith.constant dense<0.000000e+00> : vector<32x128xf32>
    %42 = tpu.matmul %39, %41, %cst_42 {dimension_numbers = #tpu.dot_dimension_numbers<[1], [0], [0], [1], [0, 0, 1, 1], [], []>} : vector<32x128xf32>, vector<128x128xf32>, vector<32x128xf32> -> vector<32x128xf32>
    %43 = vector.broadcast %36 : vector<1x128xf32> to vector<32x128xf32>
    %44 = arith.addf %43, %42 : vector<32x128xf32>
    %c1_43 = arith.constant 1 : index
    %c0_44 = arith.constant 0 : index
    %c0_45 = arith.constant 0 : index
    %45 = vector.load %arg2[%c1_43, %c0_44, %c0_45] : memref<4x32x64xf32, #tpu.memory_space<vmem>>, vector<1x32x64xf32>
    %46 = vector.shape_cast %45 : vector<1x32x64xf32> to vector<32x64xf32>
    %cst_46 = arith.constant dense<0.000000e+00> : vector<32x128xf32>
    %47 = tpu.matmul %46, %35, %cst_46 {dimension_numbers = #tpu.dot_dimension_numbers<[1], [0], [0], [1], [0, 0, 1, 1], [], []>} : vector<32x64xf32>, vector<64x128xf32>, vector<32x128xf32> -> vector<32x128xf32>
    %c1_47 = arith.constant 1 : index
    %c0_48 = arith.constant 0 : index
    %c0_49 = arith.constant 0 : index
    %48 = vector.load %arg8[%c1_47, %c0_48, %c0_49] : memref<4x128x128xf32, #tpu.memory_space<vmem>>, vector<1x128x128xf32>
    %49 = vector.shape_cast %48 : vector<1x128x128xf32> to vector<128x128xf32>
    %cst_50 = arith.constant dense<0.000000e+00> : vector<32x128xf32>
    %50 = tpu.matmul %47, %49, %cst_50 {dimension_numbers = #tpu.dot_dimension_numbers<[1], [0], [0], [1], [0, 0, 1, 1], [], []>} : vector<32x128xf32>, vector<128x128xf32>, vector<32x128xf32> -> vector<32x128xf32>
    %51 = arith.addf %44, %50 : vector<32x128xf32>
    %c2_51 = arith.constant 2 : index
    %c0_52 = arith.constant 0 : index
    %c0_53 = arith.constant 0 : index
    %52 = vector.load %arg2[%c2_51, %c0_52, %c0_53] : memref<4x32x64xf32, #tpu.memory_space<vmem>>, vector<1x32x64xf32>
    %53 = vector.shape_cast %52 : vector<1x32x64xf32> to vector<32x64xf32>
    %cst_54 = arith.constant dense<0.000000e+00> : vector<32x128xf32>
    %54 = tpu.matmul %53, %35, %cst_54 {dimension_numbers = #tpu.dot_dimension_numbers<[1], [0], [0], [1], [0, 0, 1, 1], [], []>} : vector<32x64xf32>, vector<64x128xf32>, vector<32x128xf32> -> vector<32x128xf32>
    %c2_55 = arith.constant 2 : index
    %c0_56 = arith.constant 0 : index
    %c0_57 = arith.constant 0 : index
    %55 = vector.load %arg8[%c2_55, %c0_56, %c0_57] : memref<4x128x128xf32, #tpu.memory_space<vmem>>, vector<1x128x128xf32>
    %56 = vector.shape_cast %55 : vector<1x128x128xf32> to vector<128x128xf32>
    %cst_58 = arith.constant dense<0.000000e+00> : vector<32x128xf32>
    %57 = tpu.matmul %54, %56, %cst_58 {dimension_numbers = #tpu.dot_dimension_numbers<[1], [0], [0], [1], [0, 0, 1, 1], [], []>} : vector<32x128xf32>, vector<128x128xf32>, vector<32x128xf32> -> vector<32x128xf32>
    %58 = arith.addf %51, %57 : vector<32x128xf32>
    %c3_59 = arith.constant 3 : index
    %c0_60 = arith.constant 0 : index
    %c0_61 = arith.constant 0 : index
    %59 = vector.load %arg2[%c3_59, %c0_60, %c0_61] : memref<4x32x64xf32, #tpu.memory_space<vmem>>, vector<1x32x64xf32>
    %60 = vector.shape_cast %59 : vector<1x32x64xf32> to vector<32x64xf32>
    %cst_62 = arith.constant dense<0.000000e+00> : vector<32x128xf32>
    %61 = tpu.matmul %60, %35, %cst_62 {dimension_numbers = #tpu.dot_dimension_numbers<[1], [0], [0], [1], [0, 0, 1, 1], [], []>} : vector<32x64xf32>, vector<64x128xf32>, vector<32x128xf32> -> vector<32x128xf32>
    %c3_63 = arith.constant 3 : index
    %c0_64 = arith.constant 0 : index
    %c0_65 = arith.constant 0 : index
    %62 = vector.load %arg8[%c3_63, %c0_64, %c0_65] : memref<4x128x128xf32, #tpu.memory_space<vmem>>, vector<1x128x128xf32>
    %63 = vector.shape_cast %62 : vector<1x128x128xf32> to vector<128x128xf32>
    %cst_66 = arith.constant dense<0.000000e+00> : vector<32x128xf32>
    %64 = tpu.matmul %61, %63, %cst_66 {dimension_numbers = #tpu.dot_dimension_numbers<[1], [0], [0], [1], [0, 0, 1, 1], [], []>} : vector<32x128xf32>, vector<128x128xf32>, vector<32x128xf32> -> vector<32x128xf32>
    %65 = arith.addf %58, %64 : vector<32x128xf32>
    %cst_67 = arith.constant 0.000000e+00 : f32
    %66 = vector.broadcast %cst_67 : f32 to vector<32x128xf32>
    %67 = arith.cmpf ogt, %65, %66 : vector<32x128xf32>
    %cst_68 = arith.constant 0.00999999977 : f32
    %68 = vector.broadcast %cst_68 : f32 to vector<32x128xf32>
    %69 = arith.mulf %68, %65 : vector<32x128xf32>
    %70 = arith.select %67, %65, %69 : vector<32x128xi1>, vector<32x128xf32>
    %c0_69 = arith.constant 0 : index
    %c0_70 = arith.constant 0 : index
    %71 = vector.load %arg15[%c0_69, %c0_70] : memref<1x128xf32, #tpu.memory_space<vmem>>, vector<1x128xf32>
    %c0_71 = arith.constant 0 : index
    %c0_72 = arith.constant 0 : index
    %c0_73 = arith.constant 0 : index
    %72 = vector.load %arg3[%c0_71, %c0_72, %c0_73] : memref<4x16x32xf32, #tpu.memory_space<vmem>>, vector<1x16x32xf32>
    %73 = vector.shape_cast %72 : vector<1x16x32xf32> to vector<16x32xf32>
    %cst_74 = arith.constant dense<0.000000e+00> : vector<16x128xf32>
    %74 = tpu.matmul %73, %70, %cst_74 {dimension_numbers = #tpu.dot_dimension_numbers<[1], [0], [0], [1], [0, 0, 1, 1], [], []>} : vector<16x32xf32>, vector<32x128xf32>, vector<16x128xf32> -> vector<16x128xf32>
    %c0_75 = arith.constant 0 : index
    %c0_76 = arith.constant 0 : index
    %c0_77 = arith.constant 0 : index
    %75 = vector.load %arg9[%c0_75, %c0_76, %c0_77] : memref<4x128x128xf32, #tpu.memory_space<vmem>>, vector<1x128x128xf32>
    %76 = vector.shape_cast %75 : vector<1x128x128xf32> to vector<128x128xf32>
    %cst_78 = arith.constant dense<0.000000e+00> : vector<16x128xf32>
    %77 = tpu.matmul %74, %76, %cst_78 {dimension_numbers = #tpu.dot_dimension_numbers<[1], [0], [0], [1], [0, 0, 1, 1], [], []>} : vector<16x128xf32>, vector<128x128xf32>, vector<16x128xf32> -> vector<16x128xf32>
    %78 = vector.broadcast %71 : vector<1x128xf32> to vector<16x128xf32>
    %79 = arith.addf %78, %77 : vector<16x128xf32>
    %c1_79 = arith.constant 1 : index
    %c0_80 = arith.constant 0 : index
    %c0_81 = arith.constant 0 : index
    %80 = vector.load %arg3[%c1_79, %c0_80, %c0_81] : memref<4x16x32xf32, #tpu.memory_space<vmem>>, vector<1x16x32xf32>
    %81 = vector.shape_cast %80 : vector<1x16x32xf32> to vector<16x32xf32>
    %cst_82 = arith.constant dense<0.000000e+00> : vector<16x128xf32>
    %82 = tpu.matmul %81, %70, %cst_82 {dimension_numbers = #tpu.dot_dimension_numbers<[1], [0], [0], [1], [0, 0, 1, 1], [], []>} : vector<16x32xf32>, vector<32x128xf32>, vector<16x128xf32> -> vector<16x128xf32>
    %c1_83 = arith.constant 1 : index
    %c0_84 = arith.constant 0 : index
    %c0_85 = arith.constant 0 : index
    %83 = vector.load %arg9[%c1_83, %c0_84, %c0_85] : memref<4x128x128xf32, #tpu.memory_space<vmem>>, vector<1x128x128xf32>
    %84 = vector.shape_cast %83 : vector<1x128x128xf32> to vector<128x128xf32>
    %cst_86 = arith.constant dense<0.000000e+00> : vector<16x128xf32>
    %85 = tpu.matmul %82, %84, %cst_86 {dimension_numbers = #tpu.dot_dimension_numbers<[1], [0], [0], [1], [0, 0, 1, 1], [], []>} : vector<16x128xf32>, vector<128x128xf32>, vector<16x128xf32> -> vector<16x128xf32>
    %86 = arith.addf %79, %85 : vector<16x128xf32>
    %c2_87 = arith.constant 2 : index
    %c0_88 = arith.constant 0 : index
    %c0_89 = arith.constant 0 : index
    %87 = vector.load %arg3[%c2_87, %c0_88, %c0_89] : memref<4x16x32xf32, #tpu.memory_space<vmem>>, vector<1x16x32xf32>
    %88 = vector.shape_cast %87 : vector<1x16x32xf32> to vector<16x32xf32>
    %cst_90 = arith.constant dense<0.000000e+00> : vector<16x128xf32>
    %89 = tpu.matmul %88, %70, %cst_90 {dimension_numbers = #tpu.dot_dimension_numbers<[1], [0], [0], [1], [0, 0, 1, 1], [], []>} : vector<16x32xf32>, vector<32x128xf32>, vector<16x128xf32> -> vector<16x128xf32>
    %c2_91 = arith.constant 2 : index
    %c0_92 = arith.constant 0 : index
    %c0_93 = arith.constant 0 : index
    %90 = vector.load %arg9[%c2_91, %c0_92, %c0_93] : memref<4x128x128xf32, #tpu.memory_space<vmem>>, vector<1x128x128xf32>
    %91 = vector.shape_cast %90 : vector<1x128x128xf32> to vector<128x128xf32>
    %cst_94 = arith.constant dense<0.000000e+00> : vector<16x128xf32>
    %92 = tpu.matmul %89, %91, %cst_94 {dimension_numbers = #tpu.dot_dimension_numbers<[1], [0], [0], [1], [0, 0, 1, 1], [], []>} : vector<16x128xf32>, vector<128x128xf32>, vector<16x128xf32> -> vector<16x128xf32>
    %93 = arith.addf %86, %92 : vector<16x128xf32>
    %c3_95 = arith.constant 3 : index
    %c0_96 = arith.constant 0 : index
    %c0_97 = arith.constant 0 : index
    %94 = vector.load %arg3[%c3_95, %c0_96, %c0_97] : memref<4x16x32xf32, #tpu.memory_space<vmem>>, vector<1x16x32xf32>
    %95 = vector.shape_cast %94 : vector<1x16x32xf32> to vector<16x32xf32>
    %cst_98 = arith.constant dense<0.000000e+00> : vector<16x128xf32>
    %96 = tpu.matmul %95, %70, %cst_98 {dimension_numbers = #tpu.dot_dimension_numbers<[1], [0], [0], [1], [0, 0, 1, 1], [], []>} : vector<16x32xf32>, vector<32x128xf32>, vector<16x128xf32> -> vector<16x128xf32>
    %c3_99 = arith.constant 3 : index
    %c0_100 = arith.constant 0 : index
    %c0_101 = arith.constant 0 : index
    %97 = vector.load %arg9[%c3_99, %c0_100, %c0_101] : memref<4x128x128xf32, #tpu.memory_space<vmem>>, vector<1x128x128xf32>
    %98 = vector.shape_cast %97 : vector<1x128x128xf32> to vector<128x128xf32>
    %cst_102 = arith.constant dense<0.000000e+00> : vector<16x128xf32>
    %99 = tpu.matmul %96, %98, %cst_102 {dimension_numbers = #tpu.dot_dimension_numbers<[1], [0], [0], [1], [0, 0, 1, 1], [], []>} : vector<16x128xf32>, vector<128x128xf32>, vector<16x128xf32> -> vector<16x128xf32>
    %100 = arith.addf %93, %99 : vector<16x128xf32>
    %cst_103 = arith.constant 0.000000e+00 : f32
    %101 = vector.broadcast %cst_103 : f32 to vector<16x128xf32>
    %102 = arith.cmpf ogt, %100, %101 : vector<16x128xf32>
    %cst_104 = arith.constant 0.00999999977 : f32
    %103 = vector.broadcast %cst_104 : f32 to vector<16x128xf32>
    %104 = arith.mulf %103, %100 : vector<16x128xf32>
    %105 = arith.select %102, %100, %104 : vector<16x128xi1>, vector<16x128xf32>
    %c0_105 = arith.constant 0 : index
    %c0_106 = arith.constant 0 : index
    %106 = vector.load %arg16[%c0_105, %c0_106] : memref<1x128xf32, #tpu.memory_space<vmem>>, vector<1x128xf32>
    %c0_107 = arith.constant 0 : index
    %c0_108 = arith.constant 0 : index
    %c0_109 = arith.constant 0 : index
    %107 = vector.load %arg4[%c0_107, %c0_108, %c0_109] : memref<4x8x16xf32, #tpu.memory_space<vmem>>, vector<1x8x16xf32>
    %108 = vector.shape_cast %107 : vector<1x8x16xf32> to vector<8x16xf32>
    %cst_110 = arith.constant dense<0.000000e+00> : vector<8x128xf32>
    %109 = tpu.matmul %108, %105, %cst_110 {dimension_numbers = #tpu.dot_dimension_numbers<[1], [0], [0], [1], [0, 0, 1, 1], [], []>} : vector<8x16xf32>, vector<16x128xf32>, vector<8x128xf32> -> vector<8x128xf32>
    %c0_111 = arith.constant 0 : index
    %c0_112 = arith.constant 0 : index
    %c0_113 = arith.constant 0 : index
    %110 = vector.load %arg10[%c0_111, %c0_112, %c0_113] : memref<4x128x128xf32, #tpu.memory_space<vmem>>, vector<1x128x128xf32>
    %111 = vector.shape_cast %110 : vector<1x128x128xf32> to vector<128x128xf32>
    %cst_114 = arith.constant dense<0.000000e+00> : vector<8x128xf32>
    %112 = tpu.matmul %109, %111, %cst_114 {dimension_numbers = #tpu.dot_dimension_numbers<[1], [0], [0], [1], [0, 0, 1, 1], [], []>} : vector<8x128xf32>, vector<128x128xf32>, vector<8x128xf32> -> vector<8x128xf32>
    %113 = vector.broadcast %106 : vector<1x128xf32> to vector<8x128xf32>
    %114 = arith.addf %113, %112 : vector<8x128xf32>
    %c1_115 = arith.constant 1 : index
    %c0_116 = arith.constant 0 : index
    %c0_117 = arith.constant 0 : index
    %115 = vector.load %arg4[%c1_115, %c0_116, %c0_117] : memref<4x8x16xf32, #tpu.memory_space<vmem>>, vector<1x8x16xf32>
    %116 = vector.shape_cast %115 : vector<1x8x16xf32> to vector<8x16xf32>
    %cst_118 = arith.constant dense<0.000000e+00> : vector<8x128xf32>
    %117 = tpu.matmul %116, %105, %cst_118 {dimension_numbers = #tpu.dot_dimension_numbers<[1], [0], [0], [1], [0, 0, 1, 1], [], []>} : vector<8x16xf32>, vector<16x128xf32>, vector<8x128xf32> -> vector<8x128xf32>
    %c1_119 = arith.constant 1 : index
    %c0_120 = arith.constant 0 : index
    %c0_121 = arith.constant 0 : index
    %118 = vector.load %arg10[%c1_119, %c0_120, %c0_121] : memref<4x128x128xf32, #tpu.memory_space<vmem>>, vector<1x128x128xf32>
    %119 = vector.shape_cast %118 : vector<1x128x128xf32> to vector<128x128xf32>
    %cst_122 = arith.constant dense<0.000000e+00> : vector<8x128xf32>
    %120 = tpu.matmul %117, %119, %cst_122 {dimension_numbers = #tpu.dot_dimension_numbers<[1], [0], [0], [1], [0, 0, 1, 1], [], []>} : vector<8x128xf32>, vector<128x128xf32>, vector<8x128xf32> -> vector<8x128xf32>
    %121 = arith.addf %114, %120 : vector<8x128xf32>
    %c2_123 = arith.constant 2 : index
    %c0_124 = arith.constant 0 : index
    %c0_125 = arith.constant 0 : index
    %122 = vector.load %arg4[%c2_123, %c0_124, %c0_125] : memref<4x8x16xf32, #tpu.memory_space<vmem>>, vector<1x8x16xf32>
    %123 = vector.shape_cast %122 : vector<1x8x16xf32> to vector<8x16xf32>
    %cst_126 = arith.constant dense<0.000000e+00> : vector<8x128xf32>
    %124 = tpu.matmul %123, %105, %cst_126 {dimension_numbers = #tpu.dot_dimension_numbers<[1], [0], [0], [1], [0, 0, 1, 1], [], []>} : vector<8x16xf32>, vector<16x128xf32>, vector<8x128xf32> -> vector<8x128xf32>
    %c2_127 = arith.constant 2 : index
    %c0_128 = arith.constant 0 : index
    %c0_129 = arith.constant 0 : index
    %125 = vector.load %arg10[%c2_127, %c0_128, %c0_129] : memref<4x128x128xf32, #tpu.memory_space<vmem>>, vector<1x128x128xf32>
    %126 = vector.shape_cast %125 : vector<1x128x128xf32> to vector<128x128xf32>
    %cst_130 = arith.constant dense<0.000000e+00> : vector<8x128xf32>
    %127 = tpu.matmul %124, %126, %cst_130 {dimension_numbers = #tpu.dot_dimension_numbers<[1], [0], [0], [1], [0, 0, 1, 1], [], []>} : vector<8x128xf32>, vector<128x128xf32>, vector<8x128xf32> -> vector<8x128xf32>
    %128 = arith.addf %121, %127 : vector<8x128xf32>
    %c3_131 = arith.constant 3 : index
    %c0_132 = arith.constant 0 : index
    %c0_133 = arith.constant 0 : index
    %129 = vector.load %arg4[%c3_131, %c0_132, %c0_133] : memref<4x8x16xf32, #tpu.memory_space<vmem>>, vector<1x8x16xf32>
    %130 = vector.shape_cast %129 : vector<1x8x16xf32> to vector<8x16xf32>
    %cst_134 = arith.constant dense<0.000000e+00> : vector<8x128xf32>
    %131 = tpu.matmul %130, %105, %cst_134 {dimension_numbers = #tpu.dot_dimension_numbers<[1], [0], [0], [1], [0, 0, 1, 1], [], []>} : vector<8x16xf32>, vector<16x128xf32>, vector<8x128xf32> -> vector<8x128xf32>
    %c3_135 = arith.constant 3 : index
    %c0_136 = arith.constant 0 : index
    %c0_137 = arith.constant 0 : index
    %132 = vector.load %arg10[%c3_135, %c0_136, %c0_137] : memref<4x128x128xf32, #tpu.memory_space<vmem>>, vector<1x128x128xf32>
    %133 = vector.shape_cast %132 : vector<1x128x128xf32> to vector<128x128xf32>
    %cst_138 = arith.constant dense<0.000000e+00> : vector<8x128xf32>
    %134 = tpu.matmul %131, %133, %cst_138 {dimension_numbers = #tpu.dot_dimension_numbers<[1], [0], [0], [1], [0, 0, 1, 1], [], []>} : vector<8x128xf32>, vector<128x128xf32>, vector<8x128xf32> -> vector<8x128xf32>
    %135 = arith.addf %128, %134 : vector<8x128xf32>
    %cst_139 = arith.constant 0.000000e+00 : f32
    %136 = vector.broadcast %cst_139 : f32 to vector<8x128xf32>
    %137 = arith.cmpf ogt, %135, %136 : vector<8x128xf32>
    %cst_140 = arith.constant 0.00999999977 : f32
    %138 = vector.broadcast %cst_140 : f32 to vector<8x128xf32>
    %139 = arith.mulf %138, %135 : vector<8x128xf32>
    %140 = arith.select %137, %135, %139 : vector<8x128xi1>, vector<8x128xf32>
    %c0_141 = arith.constant 0 : index
    %c0_142 = arith.constant 0 : index
    %141 = vector.load %arg17[%c0_141, %c0_142] : memref<1x128xf32, #tpu.memory_space<vmem>>, vector<1x128xf32>
    %c0_143 = arith.constant 0 : index
    %c0_144 = arith.constant 0 : index
    %c0_145 = arith.constant 0 : index
    %142 = vector.load %arg5[%c0_143, %c0_144, %c0_145] : memref<4x4x8xf32, #tpu.memory_space<vmem>>, vector<1x4x8xf32>
    %143 = vector.shape_cast %142 : vector<1x4x8xf32> to vector<4x8xf32>
    %cst_146 = arith.constant dense<0.000000e+00> : vector<4x128xf32>
    %144 = tpu.matmul %143, %140, %cst_146 {dimension_numbers = #tpu.dot_dimension_numbers<[1], [0], [0], [1], [0, 0, 1, 1], [], []>} : vector<4x8xf32>, vector<8x128xf32>, vector<4x128xf32> -> vector<4x128xf32>
    %c0_147 = arith.constant 0 : index
    %c0_148 = arith.constant 0 : index
    %c0_149 = arith.constant 0 : index
    %145 = vector.load %arg11[%c0_147, %c0_148, %c0_149] : memref<4x128x128xf32, #tpu.memory_space<vmem>>, vector<1x128x128xf32>
    %146 = vector.shape_cast %145 : vector<1x128x128xf32> to vector<128x128xf32>
    %cst_150 = arith.constant dense<0.000000e+00> : vector<4x128xf32>
    %147 = tpu.matmul %144, %146, %cst_150 {dimension_numbers = #tpu.dot_dimension_numbers<[1], [0], [0], [1], [0, 0, 1, 1], [], []>} : vector<4x128xf32>, vector<128x128xf32>, vector<4x128xf32> -> vector<4x128xf32>
    %148 = vector.broadcast %141 : vector<1x128xf32> to vector<4x128xf32>
    %149 = arith.addf %148, %147 : vector<4x128xf32>
    %c1_151 = arith.constant 1 : index
    %c0_152 = arith.constant 0 : index
    %c0_153 = arith.constant 0 : index
    %150 = vector.load %arg5[%c1_151, %c0_152, %c0_153] : memref<4x4x8xf32, #tpu.memory_space<vmem>>, vector<1x4x8xf32>
    %151 = vector.shape_cast %150 : vector<1x4x8xf32> to vector<4x8xf32>
    %cst_154 = arith.constant dense<0.000000e+00> : vector<4x128xf32>
    %152 = tpu.matmul %151, %140, %cst_154 {dimension_numbers = #tpu.dot_dimension_numbers<[1], [0], [0], [1], [0, 0, 1, 1], [], []>} : vector<4x8xf32>, vector<8x128xf32>, vector<4x128xf32> -> vector<4x128xf32>
    %c1_155 = arith.constant 1 : index
    %c0_156 = arith.constant 0 : index
    %c0_157 = arith.constant 0 : index
    %153 = vector.load %arg11[%c1_155, %c0_156, %c0_157] : memref<4x128x128xf32, #tpu.memory_space<vmem>>, vector<1x128x128xf32>
    %154 = vector.shape_cast %153 : vector<1x128x128xf32> to vector<128x128xf32>
    %cst_158 = arith.constant dense<0.000000e+00> : vector<4x128xf32>
    %155 = tpu.matmul %152, %154, %cst_158 {dimension_numbers = #tpu.dot_dimension_numbers<[1], [0], [0], [1], [0, 0, 1, 1], [], []>} : vector<4x128xf32>, vector<128x128xf32>, vector<4x128xf32> -> vector<4x128xf32>
    %156 = arith.addf %149, %155 : vector<4x128xf32>
    %c2_159 = arith.constant 2 : index
    %c0_160 = arith.constant 0 : index
    %c0_161 = arith.constant 0 : index
    %157 = vector.load %arg5[%c2_159, %c0_160, %c0_161] : memref<4x4x8xf32, #tpu.memory_space<vmem>>, vector<1x4x8xf32>
    %158 = vector.shape_cast %157 : vector<1x4x8xf32> to vector<4x8xf32>
    %cst_162 = arith.constant dense<0.000000e+00> : vector<4x128xf32>
    %159 = tpu.matmul %158, %140, %cst_162 {dimension_numbers = #tpu.dot_dimension_numbers<[1], [0], [0], [1], [0, 0, 1, 1], [], []>} : vector<4x8xf32>, vector<8x128xf32>, vector<4x128xf32> -> vector<4x128xf32>
    %c2_163 = arith.constant 2 : index
    %c0_164 = arith.constant 0 : index
    %c0_165 = arith.constant 0 : index
    %160 = vector.load %arg11[%c2_163, %c0_164, %c0_165] : memref<4x128x128xf32, #tpu.memory_space<vmem>>, vector<1x128x128xf32>
    %161 = vector.shape_cast %160 : vector<1x128x128xf32> to vector<128x128xf32>
    %cst_166 = arith.constant dense<0.000000e+00> : vector<4x128xf32>
    %162 = tpu.matmul %159, %161, %cst_166 {dimension_numbers = #tpu.dot_dimension_numbers<[1], [0], [0], [1], [0, 0, 1, 1], [], []>} : vector<4x128xf32>, vector<128x128xf32>, vector<4x128xf32> -> vector<4x128xf32>
    %163 = arith.addf %156, %162 : vector<4x128xf32>
    %c3_167 = arith.constant 3 : index
    %c0_168 = arith.constant 0 : index
    %c0_169 = arith.constant 0 : index
    %164 = vector.load %arg5[%c3_167, %c0_168, %c0_169] : memref<4x4x8xf32, #tpu.memory_space<vmem>>, vector<1x4x8xf32>
    %165 = vector.shape_cast %164 : vector<1x4x8xf32> to vector<4x8xf32>
    %cst_170 = arith.constant dense<0.000000e+00> : vector<4x128xf32>
    %166 = tpu.matmul %165, %140, %cst_170 {dimension_numbers = #tpu.dot_dimension_numbers<[1], [0], [0], [1], [0, 0, 1, 1], [], []>} : vector<4x8xf32>, vector<8x128xf32>, vector<4x128xf32> -> vector<4x128xf32>
    %c3_171 = arith.constant 3 : index
    %c0_172 = arith.constant 0 : index
    %c0_173 = arith.constant 0 : index
    %167 = vector.load %arg11[%c3_171, %c0_172, %c0_173] : memref<4x128x128xf32, #tpu.memory_space<vmem>>, vector<1x128x128xf32>
    %168 = vector.shape_cast %167 : vector<1x128x128xf32> to vector<128x128xf32>
    %cst_174 = arith.constant dense<0.000000e+00> : vector<4x128xf32>
    %169 = tpu.matmul %166, %168, %cst_174 {dimension_numbers = #tpu.dot_dimension_numbers<[1], [0], [0], [1], [0, 0, 1, 1], [], []>} : vector<4x128xf32>, vector<128x128xf32>, vector<4x128xf32> -> vector<4x128xf32>
    %170 = arith.addf %163, %169 : vector<4x128xf32>
    %cst_175 = arith.constant 0.000000e+00 : f32
    %171 = vector.broadcast %cst_175 : f32 to vector<4x128xf32>
    %172 = arith.cmpf ogt, %170, %171 : vector<4x128xf32>
    %cst_176 = arith.constant 0.00999999977 : f32
    %173 = vector.broadcast %cst_176 : f32 to vector<4x128xf32>
    %174 = arith.mulf %173, %170 : vector<4x128xf32>
    %175 = arith.select %172, %170, %174 : vector<4x128xi1>, vector<4x128xf32>
    %c0_177 = arith.constant 0 : index
    %c0_178 = arith.constant 0 : index
    %176 = vector.load %arg18[%c0_177, %c0_178] : memref<1x128xf32, #tpu.memory_space<vmem>>, vector<1x128xf32>
    %c0_179 = arith.constant 0 : index
    %c0_180 = arith.constant 0 : index
    %c0_181 = arith.constant 0 : index
    %177 = vector.load %arg6[%c0_179, %c0_180, %c0_181] : memref<2x2x4xf32, #tpu.memory_space<vmem>>, vector<1x2x4xf32>
    %178 = vector.shape_cast %177 : vector<1x2x4xf32> to vector<2x4xf32>
    %cst_182 = arith.constant dense<0.000000e+00> : vector<2x128xf32>
    %179 = tpu.matmul %178, %175, %cst_182 {dimension_numbers = #tpu.dot_dimension_numbers<[1], [0], [0], [1], [0, 0, 1, 1], [], []>} : vector<2x4xf32>, vector<4x128xf32>, vector<2x128xf32> -> vector<2x128xf32>
    %c0_183 = arith.constant 0 : index
    %c0_184 = arith.constant 0 : index
    %c0_185 = arith.constant 0 : index
    %180 = vector.load %arg12[%c0_183, %c0_184, %c0_185] : memref<2x128x128xf32, #tpu.memory_space<vmem>>, vector<1x128x128xf32>
    %181 = vector.shape_cast %180 : vector<1x128x128xf32> to vector<128x128xf32>
    %cst_186 = arith.constant dense<0.000000e+00> : vector<2x128xf32>
    %182 = tpu.matmul %179, %181, %cst_186 {dimension_numbers = #tpu.dot_dimension_numbers<[1], [0], [0], [1], [0, 0, 1, 1], [], []>} : vector<2x128xf32>, vector<128x128xf32>, vector<2x128xf32> -> vector<2x128xf32>
    %183 = vector.broadcast %176 : vector<1x128xf32> to vector<2x128xf32>
    %184 = arith.addf %183, %182 : vector<2x128xf32>
    %c1_187 = arith.constant 1 : index
    %c0_188 = arith.constant 0 : index
    %c0_189 = arith.constant 0 : index
    %185 = vector.load %arg6[%c1_187, %c0_188, %c0_189] : memref<2x2x4xf32, #tpu.memory_space<vmem>>, vector<1x2x4xf32>
    %186 = vector.shape_cast %185 : vector<1x2x4xf32> to vector<2x4xf32>
    %cst_190 = arith.constant dense<0.000000e+00> : vector<2x128xf32>
    %187 = tpu.matmul %186, %175, %cst_190 {dimension_numbers = #tpu.dot_dimension_numbers<[1], [0], [0], [1], [0, 0, 1, 1], [], []>} : vector<2x4xf32>, vector<4x128xf32>, vector<2x128xf32> -> vector<2x128xf32>
    %c1_191 = arith.constant 1 : index
    %c0_192 = arith.constant 0 : index
    %c0_193 = arith.constant 0 : index
    %188 = vector.load %arg12[%c1_191, %c0_192, %c0_193] : memref<2x128x128xf32, #tpu.memory_space<vmem>>, vector<1x128x128xf32>
    %189 = vector.shape_cast %188 : vector<1x128x128xf32> to vector<128x128xf32>
    %cst_194 = arith.constant dense<0.000000e+00> : vector<2x128xf32>
    %190 = tpu.matmul %187, %189, %cst_194 {dimension_numbers = #tpu.dot_dimension_numbers<[1], [0], [0], [1], [0, 0, 1, 1], [], []>} : vector<2x128xf32>, vector<128x128xf32>, vector<2x128xf32> -> vector<2x128xf32>
    %191 = arith.addf %184, %190 : vector<2x128xf32>
    %cst_195 = arith.constant 0.000000e+00 : f32
    %192 = vector.broadcast %cst_195 : f32 to vector<2x128xf32>
    %193 = arith.cmpf ogt, %191, %192 : vector<2x128xf32>
    %cst_196 = arith.constant 0.00999999977 : f32
    %194 = vector.broadcast %cst_196 : f32 to vector<2x128xf32>
    %195 = arith.mulf %194, %191 : vector<2x128xf32>
    %196 = arith.select %193, %191, %195 : vector<2x128xi1>, vector<2x128xf32>
    %c0_197 = arith.constant 0 : index
    %c0_198 = arith.constant 0 : index
    %197 = vector.load %arg19[%c0_197, %c0_198] : memref<128x64xf32, #tpu.memory_space<vmem>>, vector<128x64xf32>
    %cst_199 = arith.constant dense<0.000000e+00> : vector<2x64xf32>
    %198 = tpu.matmul %196, %197, %cst_199 {dimension_numbers = #tpu.dot_dimension_numbers<[1], [0], [0], [1], [0, 0, 1, 1], [], []>} : vector<2x128xf32>, vector<128x64xf32>, vector<2x64xf32> -> vector<2x64xf32>
    %c0_200 = arith.constant 0 : index
    %c0_201 = arith.constant 0 : index
    %199 = vector.load %arg20[%c0_200, %c0_201] : memref<1x64xf32, #tpu.memory_space<vmem>>, vector<1x64xf32>
    %200 = vector.broadcast %199 : vector<1x64xf32> to vector<2x64xf32>
    %201 = arith.addf %198, %200 : vector<2x64xf32>
    %202 = arith.negf %201 : vector<2x64xf32>
    %203 = math.exp %202 : vector<2x64xf32>
    %cst_202 = arith.constant 1.000000e+00 : f32
    %204 = vector.broadcast %cst_202 : f32 to vector<2x64xf32>
    %205 = arith.addf %204, %203 : vector<2x64xf32>
    %206 = arith.divf %204, %205 : vector<2x64xf32>
    %c0_203 = arith.constant 0 : index
    %c0_204 = arith.constant 0 : index
    %207 = vector.load %arg21[%c0_203, %c0_204] : memref<64x96xf32, #tpu.memory_space<vmem>>, vector<64x96xf32>
    %cst_205 = arith.constant dense<0.000000e+00> : vector<2x96xf32>
    %208 = tpu.matmul %206, %207, %cst_205 {dimension_numbers = #tpu.dot_dimension_numbers<[1], [0], [0], [1], [0, 0, 1, 1], [], []>} : vector<2x64xf32>, vector<64x96xf32>, vector<2x96xf32> -> vector<2x96xf32>
    %c0_206 = arith.constant 0 : index
    %c0_207 = arith.constant 0 : index
    %209 = vector.load %arg22[%c0_206, %c0_207] : memref<1x96xf32, #tpu.memory_space<vmem>>, vector<1x96xf32>
    %210 = vector.broadcast %209 : vector<1x96xf32> to vector<2x96xf32>
    %211 = arith.addf %208, %210 : vector<2x96xf32>
    %cst_208 = arith.constant 0.000000e+00 : f32
    %212 = vector.broadcast %cst_208 : f32 to vector<2x96xf32>
    %213 = arith.maximumf %211, %212 : vector<2x96xf32>
    %c0_209 = arith.constant 0 : index
    %c0_210 = arith.constant 0 : index
    %214 = vector.load %arg23[%c0_209, %c0_210] : memref<96x96xf32, #tpu.memory_space<vmem>>, vector<96x96xf32>
    %cst_211 = arith.constant dense<0.000000e+00> : vector<2x96xf32>
    %215 = tpu.matmul %213, %214, %cst_211 {dimension_numbers = #tpu.dot_dimension_numbers<[1], [0], [0], [1], [0, 0, 1, 1], [], []>} : vector<2x96xf32>, vector<96x96xf32>, vector<2x96xf32> -> vector<2x96xf32>
    %c0_212 = arith.constant 0 : index
    %c0_213 = arith.constant 0 : index
    %216 = vector.load %arg24[%c0_212, %c0_213] : memref<1x96xf32, #tpu.memory_space<vmem>>, vector<1x96xf32>
    %217 = vector.broadcast %216 : vector<1x96xf32> to vector<2x96xf32>
    %218 = arith.addf %215, %217 : vector<2x96xf32>
    %cst_214 = arith.constant 0.000000e+00 : f32
    %219 = vector.broadcast %cst_214 : f32 to vector<2x96xf32>
    %220 = arith.maximumf %218, %219 : vector<2x96xf32>
    %c0_215 = arith.constant 0 : index
    %c0_216 = arith.constant 0 : index
    %221 = vector.load %arg25[%c0_215, %c0_216] : memref<96x3xf32, #tpu.memory_space<vmem>>, vector<96x3xf32>
    %cst_217 = arith.constant dense<0.000000e+00> : vector<2x3xf32>
    %222 = tpu.matmul %220, %221, %cst_217 {dimension_numbers = #tpu.dot_dimension_numbers<[1], [0], [0], [1], [0, 0, 1, 1], [], []>} : vector<2x96xf32>, vector<96x3xf32>, vector<2x3xf32> -> vector<2x3xf32>
    %c0_218 = arith.constant 0 : index
    %c0_219 = arith.constant 0 : index
    %223 = vector.load %arg26[%c0_218, %c0_219] : memref<1x3xf32, #tpu.memory_space<vmem>>, vector<1x3xf32>
    %224 = vector.broadcast %223 : vector<1x3xf32> to vector<2x3xf32>
    %225 = arith.addf %222, %224 : vector<2x3xf32>
    %226 = arith.negf %225 : vector<2x3xf32>
    %227 = math.exp %226 : vector<2x3xf32>
    %cst_220 = arith.constant 1.000000e+00 : f32
    %228 = vector.broadcast %cst_220 : f32 to vector<2x3xf32>
    %229 = arith.addf %228, %227 : vector<2x3xf32>
    %230 = arith.divf %228, %229 : vector<2x3xf32>
    %c0_221 = arith.constant 0 : index
    %c0_222 = arith.constant 0 : index
    %231 = vector.load %arg27[%c0_221, %c0_222] : memref<2x3xf32, #tpu.memory_space<vmem>>, vector<2x3xf32>
    tpu.vector_store %arg27[%c0_221, %c0_222], %230 {strides = array<i32>} : memref<2x3xf32, #tpu.memory_space<vmem>>, vector<2x3xf32>,
    return
  }
}

</mosaic_0001>

<llo_original>
// kernel: tile.29
$region0: #{tile.29}
  #allocation0 [shape = 's32[1]{0}', space=sflag, size = 0x4, scoped, tag = 'scoped memory for tile.29']
  %s0 = inlined_call_operand.vmem [shape: f32[4], index: 0, kind: input, shape index: {}]
  %s1 = inlined_call_operand.vmem [shape: f32[32,4], index: 1, kind: output, shape index: {}]
  // Predicated region
  $region2: #{tile.29} parent=0 // pred_check
    _
  $region3: #{tile.29} parent=0 // pred_check_branch
    %3 = sbr.rel (0) target = $region5
  $region4: #{tile.29} parent=0 // pred_region
    _
  $region5: #{tile.29} parent=0 // pred_fallthru
    _
  %v4 = vld [vmem:[%s0] ss:$0 sm:$0xff]
  %5 = vst [vmem:[%s1] sm:$0xff] %v4
  %s6 = scalar_lea.vmem %s1, 8
  %7 = vst [vmem:[%s6] sm:$0xff] %v4
  %s8 = scalar_lea.vmem %s1, 16
  %9 = vst [vmem:[%s8] sm:$0xff] %v4
  %s10 = scalar_lea.vmem %s1, 24
  %11 = vst [vmem:[%s10] sm:$0xff] %v4

// kernel: tile.30
$region0: #{tile.30}
  %s0 = inlined_call_operand.vmem [shape: f32[32,4], index: 0, kind: input, shape index: {}]
  %s1 = inlined_call_operand.vmem [shape: f32[1,128], index: 1, kind: output, shape index: {}]
  $region1: #{tile.30} parent=0
    #allocation0 [shape = 'u8[4096]{0}', space=vmem, size = 0x1000, scoped, tag = 'scoped mem for output reshape']
    %v2 = vld [vmem:[%s0] sm:$0x1]
    %vm3 = vcmask 31744
    %4 = vst.msk [vmem:[#allocation0] sm:$0x1] %vm3, %v2
    %s5 = scalar_lea.vmem %s0, 31
    %v6 = vld [vmem:[%s5] sm:$0x1]
    %7 = vrot.lane.b32.xlu0 %v6, 124
    %v8 = vpop.permute.xlu0 %7
    %vm9 = vcmask 1048544
    %10 = vst.msk [vmem:[#allocation0] sm:$0x1] %vm9, %v8
    %s11 = scalar_lea.vmem %s0, 30
    %v12 = vld [vmem:[%s11] sm:$0x1]
    %13 = vrot.lane.b32.xlu0 %v12, 120
    %v14 = vpop.permute.xlu0 %13
    %vm15 = vcmask 1015744
    %16 = vst.msk [vmem:[#allocation0] sm:$0x1] %vm15, %v14
    %s17 = scalar_lea.vmem %s0, 29
    %v18 = vld [vmem:[%s17] sm:$0x1]
    %19 = vrot.lane.b32.xlu0 %v18, 116
    %v20 = vpop.permute.xlu0 %19
    %vm21 = vcmask 982944
    %22 = vst.msk [vmem:[#allocation0] sm:$0x1] %vm21, %v20
    %s23 = scalar_lea.vmem %s0, 28
    %v24 = vld [vmem:[%s23] sm:$0x1]
    %25 = vrot.lane.b32.xlu0 %v24, 112
    %v26 = vpop.permute.xlu0 %25
    %vm27 = vcmask 950144
    %28 = vst.msk [vmem:[#allocation0] sm:$0x1] %vm27, %v26
    %s29 = scalar_lea.vmem %s0, 27
    %v30 = vld [vmem:[%s29] sm:$0x1]
    %31 = vrot.lane.b32.xlu0 %v30, 108
    %v32 = vpop.permute.xlu0 %31
    %vm33 = vcmask 917344
    %34 = vst.msk [vmem:[#allocation0] sm:$0x1] %vm33, %v32
    %s35 = scalar_lea.vmem %s0, 26
    %v36 = vld [vmem:[%s35] sm:$0x1]
    %37 = vrot.lane.b32.xlu0 %v36, 104
    %v38 = vpop.permute.xlu0 %37
    %vm39 = vcmask 884544
    %40 = vst.msk [vmem:[#allocation0] sm:$0x1] %vm39, %v38
    %s41 = scalar_lea.vmem %s0, 25
    %v42 = vld [vmem:[%s41] sm:$0x1]
    %43 = vrot.lane.b32.xlu0 %v42, 100
    %v44 = vpop.permute.xlu0 %43
    %vm45 = vcmask 851744
    %46 = vst.msk [vmem:[#allocation0] sm:$0x1] %vm45, %v44
    %s47 = scalar_lea.vmem %s0, 24
    %v48 = vld [vmem:[%s47] sm:$0x1]
    %49 = vrot.lane.b32.xlu0 %v48, 96
    %v50 = vpop.permute.xlu0 %49
    %vm51 = vcmask 818944
    %52 = vst.msk [vmem:[#allocation0] sm:$0x1] %vm51, %v50
    %s53 = scalar_lea.vmem %s0, 23
    %v54 = vld [vmem:[%s53] sm:$0x1]
    %55 = vrot.lane.b32.xlu0 %v54, 92
    %v56 = vpop.permute.xlu0 %55
    %vm57 = vcmask 786144
    %58 = vst.msk [vmem:[#allocation0] sm:$0x1] %vm57, %v56
    %s59 = scalar_lea.vmem %s0, 22
    %v60 = vld [vmem:[%s59] sm:$0x1]
    %61 = vrot.lane.b32.xlu0 %v60, 88
    %v62 = vpop.permute.xlu0 %61
    %vm63 = vcmask 753344
    %64 = vst.msk [vmem:[#allocation0] sm:$0x1] %vm63, %v62
    %s65 = scalar_lea.vmem %s0, 21
    %v66 = vld [vmem:[%s65] sm:$0x1]
    %67 = vrot.lane.b32.xlu0 %v66, 84
    %v68 = vpop.permute.xlu0 %67
    %vm69 = vcmask 720544
    %70 = vst.msk [vmem:[#allocation0] sm:$0x1] %vm69, %v68
    %s71 = scalar_lea.vmem %s0, 20
    %v72 = vld [vmem:[%s71] sm:$0x1]
    %73 = vrot.lane.b32.xlu0 %v72, 80
    %v74 = vpop.permute.xlu0 %73
    %vm75 = vcmask 687744
    %76 = vst.msk [vmem:[#allocation0] sm:$0x1] %vm75, %v74
    %s77 = scalar_lea.vmem %s0, 19
    %v78 = vld [vmem:[%s77] sm:$0x1]
    %79 = vrot.lane.b32.xlu0 %v78, 76
    %v80 = vpop.permute.xlu0 %79
    %vm81 = vcmask 654944
    %82 = vst.msk [vmem:[#allocation0] sm:$0x1] %vm81, %v80
    %s83 = scalar_lea.vmem %s0, 18
    %v84 = vld [vmem:[%s83] sm:$0x1]
    %85 = vrot.lane.b32.xlu0 %v84, 72
    %v86 = vpop.permute.xlu0 %85
    %vm87 = vcmask 622144
    %88 = vst.msk [vmem:[#allocation0] sm:$0x1] %vm87, %v86
    %s89 = scalar_lea.vmem %s0, 17
    %v90 = vld [vmem:[%s89] sm:$0x1]
    %91 = vrot.lane.b32.xlu0 %v90, 68
    %v92 = vpop.permute.xlu0 %91
    %vm93 = vcmask 589344
    %94 = vst.msk [vmem:[#allocation0] sm:$0x1] %vm93, %v92
    %s95 = scalar_lea.vmem %s0, 16
    %v96 = vld [vmem:[%s95] sm:$0x1]
    %97 = vrot.lane.b32.xlu0 %v96, 64
    %v98 = vpop.permute.xlu0 %97
    %vm99 = vcmask 556544
    %100 = vst.msk [vmem:[#allocation0] sm:$0x1] %vm99, %v98
    %s101 = scalar_lea.vmem %s0, 15
    %v102 = vld [vmem:[%s101] sm:$0x1]
    %103 = vrot.lane.b32.xlu0 %v102, 60
    %v104 = vpop.permute.xlu0 %103
    %vm105 = vcmask 523744
    %106 = vst.msk [vmem:[#allocation0] sm:$0x1] %vm105, %v104
    %s107 = scalar_lea.vmem %s0, 14
    %v108 = vld [vmem:[%s107] sm:$0x1]
    %109 = vrot.lane.b32.xlu0 %v108, 56
    %v110 = vpop.permute.xlu0 %109
    %vm111 = vcmask 490944
    %112 = vst.msk [vmem:[#allocation0] sm:$0x1] %vm111, %v110
    %s113 = scalar_lea.vmem %s0, 13
    %v114 = vld [vmem:[%s113] sm:$0x1]
    %115 = vrot.lane.b32.xlu0 %v114, 52
    %v116 = vpop.permute.xlu0 %115
    %vm117 = vcmask 458144
    %118 = vst.msk [vmem:[#allocation0] sm:$0x1] %vm117, %v116
    %s119 = scalar_lea.vmem %s0, 12
    %v120 = vld [vmem:[%s119] sm:$0x1]
    %121 = vrot.lane.b32.xlu0 %v120, 48
    %v122 = vpop.permute.xlu0 %121
    %vm123 = vcmask 425344
    %124 = vst.msk [vmem:[#allocation0] sm:$0x1] %vm123, %v122
    %s125 = scalar_lea.vmem %s0, 11
    %v126 = vld [vmem:[%s125] sm:$0x1]
    %127 = vrot.lane.b32.xlu0 %v126, 44
    %v128 = vpop.permute.xlu0 %127
    %vm129 = vcmask 392544
    %130 = vst.msk [vmem:[#allocation0] sm:$0x1] %vm129, %v128
    %s131 = scalar_lea.vmem %s0, 10
    %v132 = vld [vmem:[%s131] sm:$0x1]
    %133 = vrot.lane.b32.xlu0 %v132, 40
    %v134 = vpop.permute.xlu0 %133
    %vm135 = vcmask 359744
    %136 = vst.msk [vmem:[#allocation0] sm:$0x1] %vm135, %v134
    %s137 = scalar_lea.vmem %s0, 9
    %v138 = vld [vmem:[%s137] sm:$0x1]
    %139 = vrot.lane.b32.xlu0 %v138, 36
    %v140 = vpop.permute.xlu0 %139
    %vm141 = vcmask 326944
    %142 = vst.msk [vmem:[#allocation0] sm:$0x1] %vm141, %v140
    %s143 = scalar_lea.vmem %s0, 8
    %v144 = vld [vmem:[%s143] sm:$0x1]
    %145 = vrot.lane.b32.xlu0 %v144, 32
    %v146 = vpop.permute.xlu0 %145
    %vm147 = vcmask 294144
    %148 = vst.msk [vmem:[#allocation0] sm:$0x1] %vm147, %v146
    %s149 = scalar_lea.vmem %s0, 7
    %v150 = vld [vmem:[%s149] sm:$0x1]
    %151 = vrot.lane.b32.xlu0 %v150, 28
    %v152 = vpop.permute.xlu0 %151
    %vm153 = vcmask 261344
    %154 = vst.msk [vmem:[#allocation0] sm:$0x1] %vm153, %v152
    %s155 = scalar_lea.vmem %s0, 6
    %v156 = vld [vmem:[%s155] sm:$0x1]
    %157 = vrot.lane.b32.xlu0 %v156, 24
    %v158 = vpop.permute.xlu0 %157
    %vm159 = vcmask 228544
    %160 = vst.msk [vmem:[#allocation0] sm:$0x1] %vm159, %v158
    %s161 = scalar_lea.vmem %s0, 5
    %v162 = vld [vmem:[%s161] sm:$0x1]
    %163 = vrot.lane.b32.xlu0 %v162, 20
    %v164 = vpop.permute.xlu0 %163
    %vm165 = vcmask 195744
    %166 = vst.msk [vmem:[#allocation0] sm:$0x1] %vm165, %v164
    %s167 = scalar_lea.vmem %s0, 4
    %v168 = vld [vmem:[%s167] sm:$0x1]
    %169 = vrot.lane.b32.xlu0 %v168, 16
    %v170 = vpop.permute.xlu0 %169
    %vm171 = vcmask 162944
    %172 = vst.msk [vmem:[#allocation0] sm:$0x1] %vm171, %v170
    %s173 = scalar_lea.vmem %s0, 3
    %v174 = vld [vmem:[%s173] sm:$0x1]
    %175 = vrot.lane.b32.xlu0 %v174, 12
    %v176 = vpop.permute.xlu0 %175
    %vm177 = vcmask 130144
    %178 = vst.msk [vmem:[#allocation0] sm:$0x1] %vm177, %v176
    %s179 = scalar_lea.vmem %s0, 2
    %v180 = vld [vmem:[%s179] sm:$0x1]
    %181 = vrot.lane.b32.xlu0 %v180, 8
    %v182 = vpop.permute.xlu0 %181
    %vm183 = vcmask 97344
    %184 = vst.msk [vmem:[#allocation0] sm:$0x1] %vm183, %v182
    %s185 = scalar_lea.vmem %s0, 1
    %v186 = vld [vmem:[%s185] sm:$0x1]
    %187 = vrot.lane.b32.xlu0 %v186, 4
    %v188 = vpop.permute.xlu0 %187
    %vm189 = vcmask 64544
    %190 = vst.msk [vmem:[#allocation0] sm:$0x1] %vm189, %v188
    %s192 = sshll.u32 1, 1
    %s193 = ssub.s32 %s192, 1
    %v195 = vld [vmem:[#allocation0] sm:%s193]
    %s196 = sshll.u32 1, 1
    %s197 = ssub.s32 %s196, 1
    %198 = vst [vmem:[%s1] sm:%s197] %v195

// kernel: tile.34
$region0: #{tile.34}
  #allocation0 [shape = 's32[1]{0}', space=sflag, size = 0x4, scoped, tag = 'scoped memory for tile.34']
  %s0 = inlined_call_operand.vmem [shape: f32[8], index: 0, kind: input, shape index: {}]
  %s1 = inlined_call_operand.vmem [shape: f32[16,8], index: 1, kind: output, shape index: {}]
  // Predicated region
  $region2: #{tile.34} parent=0 // pred_check
    _
  $region3: #{tile.34} parent=0 // pred_check_branch
    %3 = sbr.rel (0) target = $region5
  $region4: #{tile.34} parent=0 // pred_region
    _
  $region5: #{tile.34} parent=0 // pred_fallthru
    _
  %v4 = vld [vmem:[%s0] ss:$0 sm:$0xff]
  %5 = vst [vmem:[%s1] sm:$0xff] %v4
  %s6 = scalar_lea.vmem %s1, 8
  %7 = vst [vmem:[%s6] sm:$0xff] %v4

// kernel: tile.35
$region0: #{tile.35}
  %s0 = inlined_call_operand.vmem [shape: f32[16,8], index: 0, kind: input, shape index: {}]
  %s1 = inlined_call_operand.vmem [shape: f32[1,128], index: 1, kind: output, shape index: {}]
  $region1: #{tile.35} parent=0
    #allocation0 [shape = 'u8[4096]{0}', space=vmem, size = 0x1000, scoped, tag = 'scoped mem for output reshape']
    %v2 = vld [vmem:[%s0] sm:$0x1]
    %vm3 = vcmask 64512
    %4 = vst.msk [vmem:[#allocation0] sm:$0x1] %vm3, %v2
    %s5 = scalar_lea.vmem %s0, 15
    %v6 = vld [vmem:[%s5] sm:$0x1]
    %7 = vrot.lane.b32.xlu0 %v6, 120
    %v8 = vpop.permute.xlu0 %7
    %vm9 = vcmask 1048512
    %10 = vst.msk [vmem:[#allocation0] sm:$0x1] %vm9, %v8
    %s11 = scalar_lea.vmem %s0, 14
    %v12 = vld [vmem:[%s11] sm:$0x1]
    %13 = vrot.lane.b32.xlu0 %v12, 112
    %v14 = vpop.permute.xlu0 %13
    %vm15 = vcmask 982912
    %16 = vst.msk [vmem:[#allocation0] sm:$0x1] %vm15, %v14
    %s17 = scalar_lea.vmem %s0, 13
    %v18 = vld [vmem:[%s17] sm:$0x1]
    %19 = vrot.lane.b32.xlu0 %v18, 104
    %v20 = vpop.permute.xlu0 %19
    %vm21 = vcmask 917312
    %22 = vst.msk [vmem:[#allocation0] sm:$0x1] %vm21, %v20
    %s23 = scalar_lea.vmem %s0, 12
    %v24 = vld [vmem:[%s23] sm:$0x1]
    %25 = vrot.lane.b32.xlu0 %v24, 96
    %v26 = vpop.permute.xlu0 %25
    %vm27 = vcmask 851712
    %28 = vst.msk [vmem:[#allocation0] sm:$0x1] %vm27, %v26
    %s29 = scalar_lea.vmem %s0, 11
    %v30 = vld [vmem:[%s29] sm:$0x1]
    %31 = vrot.lane.b32.xlu0 %v30, 88
    %v32 = vpop.permute.xlu0 %31
    %vm33 = vcmask 786112
    %34 = vst.msk [vmem:[#allocation0] sm:$0x1] %vm33, %v32
    %s35 = scalar_lea.vmem %s0, 10
    %v36 = vld [vmem:[%s35] sm:$0x1]
    %37 = vrot.lane.b32.xlu0 %v36, 80
    %v38 = vpop.permute.xlu0 %37
    %vm39 = vcmask 720512
    %40 = vst.msk [vmem:[#allocation0] sm:$0x1] %vm39, %v38
    %s41 = scalar_lea.vmem %s0, 9
    %v42 = vld [vmem:[%s41] sm:$0x1]
    %43 = vrot.lane.b32.xlu0 %v42, 72
    %v44 = vpop.permute.xlu0 %43
    %vm45 = vcmask 654912
    %46 = vst.msk [vmem:[#allocation0] sm:$0x1] %vm45, %v44
    %s47 = scalar_lea.vmem %s0, 8
    %v48 = vld [vmem:[%s47] sm:$0x1]
    %49 = vrot.lane.b32.xlu0 %v48, 64
    %v50 = vpop.permute.xlu0 %49
    %vm51 = vcmask 589312
    %52 = vst.msk [vmem:[#allocation0] sm:$0x1] %vm51, %v50
    %s53 = scalar_lea.vmem %s0, 7
    %v54 = vld [vmem:[%s53] sm:$0x1]
    %55 = vrot.lane.b32.xlu0 %v54, 56
    %v56 = vpop.permute.xlu0 %55
    %vm57 = vcmask 523712
    %58 = vst.msk [vmem:[#allocation0] sm:$0x1] %vm57, %v56
    %s59 = scalar_lea.vmem %s0, 6
    %v60 = vld [vmem:[%s59] sm:$0x1]
    %61 = vrot.lane.b32.xlu0 %v60, 48
    %v62 = vpop.permute.xlu0 %61
    %vm63 = vcmask 458112
    %64 = vst.msk [vmem:[#allocation0] sm:$0x1] %vm63, %v62
    %s65 = scalar_lea.vmem %s0, 5
    %v66 = vld [vmem:[%s65] sm:$0x1]
    %67 = vrot.lane.b32.xlu0 %v66, 40
    %v68 = vpop.permute.xlu0 %67
    %vm69 = vcmask 392512
    %70 = vst.msk [vmem:[#allocation0] sm:$0x1] %vm69, %v68
    %s71 = scalar_lea.vmem %s0, 4
    %v72 = vld [vmem:[%s71] sm:$0x1]
    %73 = vrot.lane.b32.xlu0 %v72, 32
    %v74 = vpop.permute.xlu0 %73
    %vm75 = vcmask 326912
    %76 = vst.msk [vmem:[#allocation0] sm:$0x1] %vm75, %v74
    %s77 = scalar_lea.vmem %s0, 3
    %v78 = vld [vmem:[%s77] sm:$0x1]
    %79 = vrot.lane.b32.xlu0 %v78, 24
    %v80 = vpop.permute.xlu0 %79
    %vm81 = vcmask 261312
    %82 = vst.msk [vmem:[#allocation0] sm:$0x1] %vm81, %v80
    %s83 = scalar_lea.vmem %s0, 2
    %v84 = vld [vmem:[%s83] sm:$0x1]
    %85 = vrot.lane.b32.xlu0 %v84, 16
    %v86 = vpop.permute.xlu0 %85
    %vm87 = vcmask 195712
    %88 = vst.msk [vmem:[#allocation0] sm:$0x1] %vm87, %v86
    %s89 = scalar_lea.vmem %s0, 1
    %v90 = vld [vmem:[%s89] sm:$0x1]
    %91 = vrot.lane.b32.xlu0 %v90, 8
    %v92 = vpop.permute.xlu0 %91
    %vm93 = vcmask 130112
    %94 = vst.msk [vmem:[#allocation0] sm:$0x1] %vm93, %v92
    %s96 = sshll.u32 1, 1
    %s97 = ssub.s32 %s96, 1
    %v99 = vld [vmem:[#allocation0] sm:%s97]
    %s100 = sshll.u32 1, 1
    %s101 = ssub.s32 %s100, 1
    %102 = vst [vmem:[%s1] sm:%s101] %v99

// kernel: tile.39
$region0: #{tile.39}
  #allocation0 [shape = 's32[1]{0}', space=sflag, size = 0x4, scoped, tag = 'scoped memory for tile.39']
  %s0 = inlined_call_operand.vmem [shape: f32[16], index: 0, kind: input, shape index: {}]
  %s1 = inlined_call_operand.vmem [shape: f32[8,16], index: 1, kind: output, shape index: {}]
  // Predicated region
  $region2: #{tile.39} parent=0 // pred_check
    _
  $region3: #{tile.39} parent=0 // pred_check_branch
    %3 = sbr.rel (0) target = $region5
  $region4: #{tile.39} parent=0 // pred_region
    _
  $region5: #{tile.39} parent=0 // pred_fallthru
    _
  %v4 = vld [vmem:[%s0] ss:$0 sm:$0xff]
  %5 = vst [vmem:[%s1] sm:$0xff] %v4

// kernel: tile.40
$region0: #{tile.40}
  %s0 = inlined_call_operand.vmem [shape: f32[8,16], index: 0, kind: input, shape index: {}]
  %s1 = inlined_call_operand.vmem [shape: f32[1,128], index: 1, kind: output, shape index: {}]
  $region1: #{tile.40} parent=0
    #allocation0 [shape = 'u8[4096]{0}', space=vmem, size = 0x1000, scoped, tag = 'scoped mem for output reshape']
    %v2 = vld [vmem:[%s0] sm:$0x1]
    %vm3 = vcmask 130048
    %4 = vst.msk [vmem:[#allocation0] sm:$0x1] %vm3, %v2
    %s5 = scalar_lea.vmem %s0, 7
    %v6 = vld [vmem:[%s5] sm:$0x1]
    %7 = vrot.lane.b32.xlu0 %v6, 112
    %v8 = vpop.permute.xlu0 %7
    %vm9 = vcmask 1048448
    %10 = vst.msk [vmem:[#allocation0] sm:$0x1] %vm9, %v8
    %s11 = scalar_lea.vmem %s0, 6
    %v12 = vld [vmem:[%s11] sm:$0x1]
    %13 = vrot.lane.b32.xlu0 %v12, 96
    %v14 = vpop.permute.xlu0 %13
    %vm15 = vcmask 917248
    %16 = vst.msk [vmem:[#allocation0] sm:$0x1] %vm15, %v14
    %s17 = scalar_lea.vmem %s0, 5
    %v18 = vld [vmem:[%s17] sm:$0x1]
    %19 = vrot.lane.b32.xlu0 %v18, 80
    %v20 = vpop.permute.xlu0 %19
    %vm21 = vcmask 786048
    %22 = vst.msk [vmem:[#allocation0] sm:$0x1] %vm21, %v20
    %s23 = scalar_lea.vmem %s0, 4
    %v24 = vld [vmem:[%s23] sm:$0x1]
    %25 = vrot.lane.b32.xlu0 %v24, 64
    %v26 = vpop.permute.xlu0 %25
    %vm27 = vcmask 654848
    %28 = vst.msk [vmem:[#allocation0] sm:$0x1] %vm27, %v26
    %s29 = scalar_lea.vmem %s0, 3
    %v30 = vld [vmem:[%s29] sm:$0x1]
    %31 = vrot.lane.b32.xlu0 %v30, 48
    %v32 = vpop.permute.xlu0 %31
    %vm33 = vcmask 523648
    %34 = vst.msk [vmem:[#allocation0] sm:$0x1] %vm33, %v32
    %s35 = scalar_lea.vmem %s0, 2
    %v36 = vld [vmem:[%s35] sm:$0x1]
    %37 = vrot.lane.b32.xlu0 %v36, 32
    %v38 = vpop.permute.xlu0 %37
    %vm39 = vcmask 392448
    %40 = vst.msk [vmem:[#allocation0] sm:$0x1] %vm39, %v38
    %s41 = scalar_lea.vmem %s0, 1
    %v42 = vld [vmem:[%s41] sm:$0x1]
    %43 = vrot.lane.b32.xlu0 %v42, 16
    %v44 = vpop.permute.xlu0 %43
    %vm45 = vcmask 261248
    %46 = vst.msk [vmem:[#allocation0] sm:$0x1] %vm45, %v44
    %s48 = sshll.u32 1, 1
    %s49 = ssub.s32 %s48, 1
    %v51 = vld [vmem:[#allocation0] sm:%s49]
    %s52 = sshll.u32 1, 1
    %s53 = ssub.s32 %s52, 1
    %54 = vst [vmem:[%s1] sm:%s53] %v51

// kernel: tile.44
$region0: #{tile.44}
  #allocation0 [shape = 's32[1]{0}', space=sflag, size = 0x4, scoped, tag = 'scoped memory for tile.44']
  %s0 = inlined_call_operand.vmem [shape: f32[32], index: 0, kind: input, shape index: {}]
  %s1 = inlined_call_operand.vmem [shape: f32[4,32], index: 1, kind: output, shape index: {}]
  // Predicated region
  $region2: #{tile.44} parent=0 // pred_check
    _
  $region3: #{tile.44} parent=0 // pred_check_branch
    %3 = sbr.rel (0) target = $region5
  $region4: #{tile.44} parent=0 // pred_region
    _
  $region5: #{tile.44} parent=0 // pred_fallthru
    _
  %v4 = vld [vmem:[%s0] ss:$0 sm:$0xff]
  %5 = vst [vmem:[%s1] sm:$0xf] %v4

// kernel: tile.45
$region0: #{tile.45}
  %s0 = inlined_call_operand.vmem [shape: f32[4,32], index: 0, kind: input, shape index: {}]
  %s1 = inlined_call_operand.vmem [shape: f32[1,128], index: 1, kind: output, shape index: {}]
  $region1: #{tile.45} parent=0
    #allocation0 [shape = 'u8[4096]{0}', space=vmem, size = 0x1000, scoped, tag = 'scoped mem for output reshape']
    #allocation1 [shape = 'u8[4096]{0}', space=vmem, size = 0x1000, scoped, tag = 'scoped mem for input reshape']
    %s3 = sshll.u32 1, 4
    %s4 = ssub.s32 %s3, 1
    %v5 = vld [vmem:[%s0] sm:%s4]
    %6 = vst [vmem:[#allocation1] sm:%s4] %v5
    %v7 = vld [vmem:[#allocation1] sm:$0x1]
    %vm8 = vcmask 261120
    %9 = vst.msk [vmem:[#allocation0] sm:$0x1] %vm8, %v7
    %s10 = scalar_lea.vmem [#allocation1], 3
    %v11 = vld [vmem:[%s10] sm:$0x1]
    %12 = vrot.lane.b32.xlu0 %v11, 96
    %v13 = vpop.permute.xlu0 %12
    %vm14 = vcmask 1048320
    %15 = vst.msk [vmem:[#allocation0] sm:$0x1] %vm14, %v13
    %s16 = scalar_lea.vmem [#allocation1], 2
    %v17 = vld [vmem:[%s16] sm:$0x1]
    %18 = vrot.lane.b32.xlu0 %v17, 64
    %v19 = vpop.permute.xlu0 %18
    %vm20 = vcmask 785920
    %21 = vst.msk [vmem:[#allocation0] sm:$0x1] %vm20, %v19
    %s22 = scalar_lea.vmem [#allocation1], 1
    %v23 = vld [vmem:[%s22] sm:$0x1]
    %24 = vrot.lane.b32.xlu0 %v23, 32
    %v25 = vpop.permute.xlu0 %24
    %vm26 = vcmask 523520
    %27 = vst.msk [vmem:[#allocation0] sm:$0x1] %vm26, %v25
    %s29 = sshll.u32 1, 1
    %s30 = ssub.s32 %s29, 1
    %v32 = vld [vmem:[#allocation0] sm:%s30]
    %s33 = sshll.u32 1, 1
    %s34 = ssub.s32 %s33, 1
    %35 = vst [vmem:[%s1] sm:%s34] %v32

// kernel: tile.49
$region0: #{tile.49}
  #allocation0 [shape = 's32[1]{0}', space=sflag, size = 0x4, scoped, tag = 'scoped memory for tile.49']
  %s0 = inlined_call_operand.vmem [shape: f32[64], index: 0, kind: input, shape index: {}]
  %s1 = inlined_call_operand.vmem [shape: f32[2,64], index: 1, kind: output, shape index: {}]
  // Predicated region
  $region2: #{tile.49} parent=0 // pred_check
    _
  $region3: #{tile.49} parent=0 // pred_check_branch
    %3 = sbr.rel (0) target = $region5
  $region4: #{tile.49} parent=0 // pred_region
    _
  $region5: #{tile.49} parent=0 // pred_fallthru
    _
  %v4 = vld [vmem:[%s0] ss:$0 sm:$0xff]
  %5 = vst [vmem:[%s1] sm:$0x3] %v4

// kernel: tile.50
$region0: #{tile.50}
  %s0 = inlined_call_operand.vmem [shape: f32[2,64], index: 0, kind: input, shape index: {}]
  %s1 = inlined_call_operand.vmem [shape: f32[1,128], index: 1, kind: output, shape index: {}]
  $region1: #{tile.50} parent=0
    #allocation0 [shape = 'u8[4096]{0}', space=vmem, size = 0x1000, scoped, tag = 'scoped mem for output reshape']
    #allocation1 [shape = 'u8[4096]{0}', space=vmem, size = 0x1000, scoped, tag = 'scoped mem for input reshape']
    %s3 = sshll.u32 1, 2
    %s4 = ssub.s32 %s3, 1
    %v5 = vld [vmem:[%s0] sm:%s4]
    %6 = vst [vmem:[#allocation1] sm:%s4] %v5
    %v7 = vld [vmem:[#allocation1] sm:$0x1]
    %vm8 = vcmask 523264
    %9 = vst.msk [vmem:[#allocation0] sm:$0x1] %vm8, %v7
    %s10 = scalar_lea.vmem [#allocation1], 1
    %v11 = vld [vmem:[%s10] sm:$0x1]
    %12 = vrot.lane.b32.xlu0 %v11, 64
    %v13 = vpop.permute.xlu0 %12
    %vm14 = vcmask 1048064
    %15 = vst.msk [vmem:[#allocation0] sm:$0x1] %vm14, %v13
    %s17 = sshll.u32 1, 1
    %s18 = ssub.s32 %s17, 1
    %v20 = vld [vmem:[#allocation0] sm:%s18]
    %s21 = sshll.u32 1, 1
    %s22 = ssub.s32 %s21, 1
    %23 = vst [vmem:[%s1] sm:%s22] %v20

// kernel: reward_gen_forward.1
$region0: #{reward_gen_forward.1}
  #allocation0 [shape = 'u32[]', space=smem, size = 0x4, offset = 0x4, fixed_abs, tag = 'smem constant byte address 0x4 - core index']
  #allocation1 [shape = 'u32[144,128]{1,0:T(1,128)}', space=vmem, size = 0x12000, scoped, tag = 'internal scratch']
  %s0 = inlined_call_operand.vmem [shape: f32[128,64], index: 0, kind: input, shape index: {}]
  %s1 = inlined_call_operand.vmem [shape: f32[4,64,128], index: 1, kind: input, shape index: {}]
  %s2 = inlined_call_operand.vmem [shape: f32[4,32,64], index: 2, kind: input, shape index: {}]
  %s3 = inlined_call_operand.vmem [shape: f32[4,16,32], index: 3, kind: input, shape index: {}]
  %s4 = inlined_call_operand.vmem [shape: f32[4,8,16], index: 4, kind: input, shape index: {}]
  %s5 = inlined_call_operand.vmem [shape: f32[4,4,8], index: 5, kind: input, shape index: {}]
  %s6 = inlined_call_operand.vmem [shape: f32[2,2,4], index: 6, kind: input, shape index: {}]
  %s7 = inlined_call_operand.vmem [shape: f32[4,64,128], index: 7, kind: input, shape index: {}]
  %s8 = inlined_call_operand.vmem [shape: f32[4,128,128], index: 8, kind: input, shape index: {}]
  %s9 = inlined_call_operand.vmem [shape: f32[4,128,128], index: 9, kind: input, shape index: {}]
  %s10 = inlined_call_operand.vmem [shape: f32[4,128,128], index: 10, kind: input, shape index: {}]
  %s11 = inlined_call_operand.vmem [shape: f32[4,128,128], index: 11, kind: input, shape index: {}]
  %s12 = inlined_call_operand.vmem [shape: f32[2,128,128], index: 12, kind: input, shape index: {}]
  %s13 = inlined_call_operand.vmem [shape: f32[1,128], index: 13, kind: input, shape index: {}]
  %s14 = inlined_call_operand.vmem [shape: f32[1,128], index: 14, kind: input, shape index: {}]
  %s15 = inlined_call_operand.vmem [shape: f32[1,128], index: 15, kind: input, shape index: {}]
  %s16 = inlined_call_operand.vmem [shape: f32[1,128], index: 16, kind: input, shape index: {}]
  %s17 = inlined_call_operand.vmem [shape: f32[1,128], index: 17, kind: input, shape index: {}]
  %s18 = inlined_call_operand.vmem [shape: f32[1,128], index: 18, kind: input, shape index: {}]
  %s19 = inlined_call_operand.vmem [shape: f32[128,64], index: 19, kind: input, shape index: {}]
  %s20 = inlined_call_operand.vmem [shape: f32[1,64], index: 20, kind: input, shape index: {}]
  %s21 = inlined_call_operand.vmem [shape: f32[64,96], index: 21, kind: input, shape index: {}]
  %s22 = inlined_call_operand.vmem [shape: f32[1,96], index: 22, kind: input, shape index: {}]
  %s23 = inlined_call_operand.vmem [shape: f32[96,96], index: 23, kind: input, shape index: {}]
  %s24 = inlined_call_operand.vmem [shape: f32[1,96], index: 24, kind: input, shape index: {}]
  %s25 = inlined_call_operand.vmem [shape: f32[96,3], index: 25, kind: input, shape index: {}]
  %s26 = inlined_call_operand.vmem [shape: f32[1,3], index: 26, kind: input, shape index: {}]
  %s27 = inlined_call_operand.vmem [shape: f32[2,3], index: 27, kind: output, shape index: {}]
  %s28 = sld [smem:[#allocation0]]
  $region118: #{reward_gen_forward.1} parent=0
    _
  %s30 = ssub.s32 1, %s28
  %s31 = scalar_select 0, %s30, %s28
  // Predicated region
  $region2: #{reward_gen_forward.1} parent=0 // pred_check
    _
  $region3: #{reward_gen_forward.1} parent=0 // pred_check_branch
    %33 = sbr.rel (0) target = $region5
  $region4: #{reward_gen_forward.1} parent=0 // pred_region
    _
  $region5: #{reward_gen_forward.1} parent=0 // pred_fallthru
    _
  // Predicated region
  $region6: #{reward_gen_forward.1} parent=0 // pred_check
    _
  $region7: #{reward_gen_forward.1} parent=0 // pred_check_branch
    %35 = sbr.rel (0) target = $region9
  $region8: #{reward_gen_forward.1} parent=0 // pred_region
    _
  $region9: #{reward_gen_forward.1} parent=0 // pred_fallthru
    _
  // Predicated region
  $region10: #{reward_gen_forward.1} parent=0 // pred_check
    _
  $region11: #{reward_gen_forward.1} parent=0 // pred_check_branch
    %37 = sbr.rel (0) target = $region13
  $region12: #{reward_gen_forward.1} parent=0 // pred_region
    _
  $region13: #{reward_gen_forward.1} parent=0 // pred_fallthru
    _
  // Predicated region
  $region14: #{reward_gen_forward.1} parent=0 // pred_check
    _
  $region15: #{reward_gen_forward.1} parent=0 // pred_check_branch
    %39 = sbr.rel (0) target = $region17
  $region16: #{reward_gen_forward.1} parent=0 // pred_region
    _
  $region17: #{reward_gen_forward.1} parent=0 // pred_fallthru
    _
  // Predicated region
  $region18: #{reward_gen_forward.1} parent=0 // pred_check
    _
  $region19: #{reward_gen_forward.1} parent=0 // pred_check_branch
    %41 = sbr.rel (0) target = $region21
  $region20: #{reward_gen_forward.1} parent=0 // pred_region
    _
  $region21: #{reward_gen_forward.1} parent=0 // pred_fallthru
    _
  // Predicated region
  $region22: #{reward_gen_forward.1} parent=0 // pred_check
    _
  $region23: #{reward_gen_forward.1} parent=0 // pred_check_branch
    %43 = sbr.rel (0) target = $region25
  $region24: #{reward_gen_forward.1} parent=0 // pred_region
    _
  $region25: #{reward_gen_forward.1} parent=0 // pred_fallthru
    _
  // Predicated region
  $region26: #{reward_gen_forward.1} parent=0 // pred_check
    _
  $region27: #{reward_gen_forward.1} parent=0 // pred_check_branch
    %45 = sbr.rel (0) target = $region29
  $region28: #{reward_gen_forward.1} parent=0 // pred_region
    _
  $region29: #{reward_gen_forward.1} parent=0 // pred_fallthru
    _
  // Predicated region
  $region30: #{reward_gen_forward.1} parent=0 // pred_check
    _
  $region31: #{reward_gen_forward.1} parent=0 // pred_check_branch
    %47 = sbr.rel (0) target = $region33
  $region32: #{reward_gen_forward.1} parent=0 // pred_region
    _
  $region33: #{reward_gen_forward.1} parent=0 // pred_fallthru
    _
  // Predicated region
  $region34: #{reward_gen_forward.1} parent=0 // pred_check
    _
  $region35: #{reward_gen_forward.1} parent=0 // pred_check_branch
    %49 = sbr.rel (0) target = $region37
  $region36: #{reward_gen_forward.1} parent=0 // pred_region
    _
  $region37: #{reward_gen_forward.1} parent=0 // pred_fallthru
    _
  // Predicated region
  $region38: #{reward_gen_forward.1} parent=0 // pred_check
    _
  $region39: #{reward_gen_forward.1} parent=0 // pred_check_branch
    %51 = sbr.rel (0) target = $region41
  $region40: #{reward_gen_forward.1} parent=0 // pred_region
    _
  $region41: #{reward_gen_forward.1} parent=0 // pred_fallthru
    _
  // Predicated region
  $region42: #{reward_gen_forward.1} parent=0 // pred_check
    _
  $region43: #{reward_gen_forward.1} parent=0 // pred_check_branch
    %53 = sbr.rel (0) target = $region45
  $region44: #{reward_gen_forward.1} parent=0 // pred_region
    _
  $region45: #{reward_gen_forward.1} parent=0 // pred_fallthru
    _
  // Predicated region
  $region46: #{reward_gen_forward.1} parent=0 // pred_check
    _
  $region47: #{reward_gen_forward.1} parent=0 // pred_check_branch
    %55 = sbr.rel (0) target = $region49
  $region48: #{reward_gen_forward.1} parent=0 // pred_region
    _
  $region49: #{reward_gen_forward.1} parent=0 // pred_fallthru
    _
  // Predicated region
  $region50: #{reward_gen_forward.1} parent=0 // pred_check
    _
  $region51: #{reward_gen_forward.1} parent=0 // pred_check_branch
    %57 = sbr.rel (0) target = $region53
  $region52: #{reward_gen_forward.1} parent=0 // pred_region
    _
  $region53: #{reward_gen_forward.1} parent=0 // pred_fallthru
    _
  // Predicated region
  $region54: #{reward_gen_forward.1} parent=0 // pred_check
    _
  $region55: #{reward_gen_forward.1} parent=0 // pred_check_branch
    %59 = sbr.rel (0) target = $region57
  $region56: #{reward_gen_forward.1} parent=0 // pred_region
    _
  $region57: #{reward_gen_forward.1} parent=0 // pred_fallthru
    _
  // Predicated region
  $region58: #{reward_gen_forward.1} parent=0 // pred_check
    _
  $region59: #{reward_gen_forward.1} parent=0 // pred_check_branch
    %61 = sbr.rel (0) target = $region61
  $region60: #{reward_gen_forward.1} parent=0 // pred_region
    _
  $region61: #{reward_gen_forward.1} parent=0 // pred_fallthru
    _
  // Predicated region
  $region62: #{reward_gen_forward.1} parent=0 // pred_check
    _
  $region63: #{reward_gen_forward.1} parent=0 // pred_check_branch
    %63 = sbr.rel (0) target = $region65
  $region64: #{reward_gen_forward.1} parent=0 // pred_region
    _
  $region65: #{reward_gen_forward.1} parent=0 // pred_fallthru
    _
  // Predicated region
  $region66: #{reward_gen_forward.1} parent=0 // pred_check
    _
  $region67: #{reward_gen_forward.1} parent=0 // pred_check_branch
    %65 = sbr.rel (0) target = $region69
  $region68: #{reward_gen_forward.1} parent=0 // pred_region
    _
  $region69: #{reward_gen_forward.1} parent=0 // pred_fallthru
    _
  // Predicated region
  $region70: #{reward_gen_forward.1} parent=0 // pred_check
    _
  $region71: #{reward_gen_forward.1} parent=0 // pred_check_branch
    %67 = sbr.rel (0) target = $region73
  $region72: #{reward_gen_forward.1} parent=0 // pred_region
    _
  $region73: #{reward_gen_forward.1} parent=0 // pred_fallthru
    _
  // Predicated region
  $region74: #{reward_gen_forward.1} parent=0 // pred_check
    _
  $region75: #{reward_gen_forward.1} parent=0 // pred_check_branch
    %69 = sbr.rel (0) target = $region77
  $region76: #{reward_gen_forward.1} parent=0 // pred_region
    _
  $region77: #{reward_gen_forward.1} parent=0 // pred_fallthru
    _
  // Predicated region
  $region78: #{reward_gen_forward.1} parent=0 // pred_check
    _
  $region79: #{reward_gen_forward.1} parent=0 // pred_check_branch
    %71 = sbr.rel (0) target = $region81
  $region80: #{reward_gen_forward.1} parent=0 // pred_region
    _
  $region81: #{reward_gen_forward.1} parent=0 // pred_fallthru
    _
  // Predicated region
  $region82: #{reward_gen_forward.1} parent=0 // pred_check
    _
  $region83: #{reward_gen_forward.1} parent=0 // pred_check_branch
    %73 = sbr.rel (0) target = $region85
  $region84: #{reward_gen_forward.1} parent=0 // pred_region
    _
  $region85: #{reward_gen_forward.1} parent=0 // pred_fallthru
    _
  // Predicated region
  $region86: #{reward_gen_forward.1} parent=0 // pred_check
    _
  $region87: #{reward_gen_forward.1} parent=0 // pred_check_branch
    %75 = sbr.rel (0) target = $region89
  $region88: #{reward_gen_forward.1} parent=0 // pred_region
    _
  $region89: #{reward_gen_forward.1} parent=0 // pred_fallthru
    _
  // Predicated region
  $region90: #{reward_gen_forward.1} parent=0 // pred_check
    _
  $region91: #{reward_gen_forward.1} parent=0 // pred_check_branch
    %77 = sbr.rel (0) target = $region93
  $region92: #{reward_gen_forward.1} parent=0 // pred_region
    _
  $region93: #{reward_gen_forward.1} parent=0 // pred_fallthru
    _
  // Predicated region
  $region94: #{reward_gen_forward.1} parent=0 // pred_check
    _
  $region95: #{reward_gen_forward.1} parent=0 // pred_check_branch
    %79 = sbr.rel (0) target = $region97
  $region96: #{reward_gen_forward.1} parent=0 // pred_region
    _
  $region97: #{reward_gen_forward.1} parent=0 // pred_fallthru
    _
  // Predicated region
  $region98: #{reward_gen_forward.1} parent=0 // pred_check
    _
  $region99: #{reward_gen_forward.1} parent=0 // pred_check_branch
    %81 = sbr.rel (0) target = $region101
  $region100: #{reward_gen_forward.1} parent=0 // pred_region
    _
  $region101: #{reward_gen_forward.1} parent=0 // pred_fallthru
    _
  // Predicated region
  $region102: #{reward_gen_forward.1} parent=0 // pred_check
    _
  $region103: #{reward_gen_forward.1} parent=0 // pred_check_branch
    %83 = sbr.rel (0) target = $region105
  $region104: #{reward_gen_forward.1} parent=0 // pred_region
    _
  $region105: #{reward_gen_forward.1} parent=0 // pred_fallthru
    _
  // Predicated region
  $region106: #{reward_gen_forward.1} parent=0 // pred_check
    _
  $region107: #{reward_gen_forward.1} parent=0 // pred_check_branch
    %85 = sbr.rel (0) target = $region109
  $region108: #{reward_gen_forward.1} parent=0 // pred_region
    _
  $region109: #{reward_gen_forward.1} parent=0 // pred_fallthru
    _
  %v86 = vld [vmem:[%s0] sm:$0xff]
  %v87 = vld [vmem:[%s0 + $0x8] sm:$0xff]
  %v88 = vld [vmem:[%s0 + $0x10] sm:$0xff]
  %v89 = vld [vmem:[%s0 + $0x18] sm:$0xff]
  %v90 = vld [vmem:[%s0 + $0x20] sm:$0xff]
  %v91 = vld [vmem:[%s0 + $0x28] sm:$0xff]
  %v92 = vld [vmem:[%s0 + $0x30] sm:$0xff]
  %v93 = vld [vmem:[%s0 + $0x38] sm:$0xff]
  %v94 = vld [vmem:[%s0 + $0x40] sm:$0xff]
  %v95 = vld [vmem:[%s0 + $0x48] sm:$0xff]
  %v96 = vld [vmem:[%s0 + $0x50] sm:$0xff]
  %v97 = vld [vmem:[%s0 + $0x58] sm:$0xff]
  %v98 = vld [vmem:[%s0 + $0x60] sm:$0xff]
  %v99 = vld [vmem:[%s0 + $0x68] sm:$0xff]
  %v100 = vld [vmem:[%s0 + $0x70] sm:$0xff]
  %v101 = vld [vmem:[%s0 + $0x78] sm:$0xff]
  %v102 = vld [vmem:[%s13] sm:$0x1]
  %v103 = vld [vmem:[%s1] sm:$0xff]
  %v104 = vld [vmem:[%s1 + $0x8] sm:$0xff]
  %v105 = vld [vmem:[%s1 + $0x10] sm:$0xff]
  %v106 = vld [vmem:[%s1 + $0x18] sm:$0xff]
  %v107 = vld [vmem:[%s1 + $0x20] sm:$0xff]
  %v108 = vld [vmem:[%s1 + $0x28] sm:$0xff]
  %v109 = vld [vmem:[%s1 + $0x30] sm:$0xff]
  %v110 = vld [vmem:[%s1 + $0x38] sm:$0xff]
  %111 = vmatprep.subr.mxu0 0.0
  %112 = vmatpush1.msra.mxu0 %v101
  %113 = vmatprep.subr.mxu0 0.0
  %114 = vmatpush1.msra.mxu0 %v100
  %115 = vmatprep.subr.mxu0 0.0
  %116 = vmatpush1.msra.mxu0 %v99
  %117 = vmatprep.subr.mxu0 0.0
  %118 = vmatpush1.msra.mxu0 %v98
  %119 = vmatprep.subr.mxu0 0.0
  %120 = vmatpush1.msra.mxu0 %v97
  %121 = vmatprep.subr.mxu0 0.0
  %122 = vmatpush1.msra.mxu0 %v96
  %123 = vmatprep.subr.mxu0 0.0
  %124 = vmatpush1.msra.mxu0 %v95
  %125 = vmatprep.subr.mxu0 0.0
  %126 = vmatpush1.msra.mxu0 %v94
  %127 = vmatprep.subr.mxu0 0.0
  %128 = vmatpush1.msra.mxu0 %v93
  %129 = vmatprep.subr.mxu0 0.0
  %130 = vmatpush1.msra.mxu0 %v92
  %131 = vmatprep.subr.mxu0 0.0
  %132 = vmatpush1.msra.mxu0 %v91
  %133 = vmatprep.subr.mxu0 0.0
  %134 = vmatpush1.msra.mxu0 %v90
  %135 = vmatprep.subr.mxu0 0.0
  %136 = vmatpush1.msra.mxu0 %v89
  %137 = vmatprep.subr.mxu0 0.0
  %138 = vmatpush1.msra.mxu0 %v88
  %139 = vmatprep.subr.mxu0 0.0
  %140 = vmatpush1.msra.mxu0 %v87
  %141 = vmatprep.subr.mxu0 0.0
  %142 = vmatpush1.msra.mxu0 %v86
  %143 = vmatprep.subr.mxu0 0.0
  %144 = vmatpush2.msra.mxu0 0.0
  %145 = vmatprep.subr.mxu0 0.0
  %146 = vmatpush2.msra.mxu0 0.0
  %147 = vmatprep.subr.mxu0 0.0
  %148 = vmatpush2.msra.mxu0 0.0
  %149 = vmatprep.subr.mxu0 0.0
  %150 = vmatpush2.msra.mxu0 0.0
  %151 = vmatprep.subr.mxu0 0.0
  %152 = vmatpush2.msra.mxu0 0.0
  %153 = vmatprep.subr.mxu0 0.0
  %154 = vmatpush2.msra.mxu0 0.0
  %155 = vmatprep.subr.mxu0 0.0
  %156 = vmatpush2.msra.mxu0 0.0
  %157 = vmatprep.subr.mxu0 0.0
  %158 = vmatpush2.msra.mxu0 0.0
  %159 = vmatprep.subr.mxu0 0.0
  %160 = vmatpush2.msra.mxu0 0.0
  %161 = vmatprep.subr.mxu0 0.0
  %162 = vmatpush2.msra.mxu0 0.0
  %163 = vmatprep.subr.mxu0 0.0
  %164 = vmatpush2.msra.mxu0 0.0
  %165 = vmatprep.subr.mxu0 0.0
  %166 = vmatpush2.msra.mxu0 0.0
  %167 = vmatprep.subr.mxu0 0.0
  %168 = vmatpush2.msra.mxu0 0.0
  %169 = vmatprep.subr.mxu0 0.0
  %170 = vmatpush2.msra.mxu0 0.0
  %171 = vmatprep.subr.mxu0 0.0
  %172 = vmatpush2.msra.mxu0 0.0
  %173 = vmatprep.subr.mxu0 0.0
  %174 = vmatpush2.msra.mxu0 0.0
  %175 = vmatprep.mubr.f32.mxu0 0.0
  %176 = vmatmul.mubr.f32.gmra.mxu0 %v103
  %v177 = vpop.f32.mrf.mxu0
  %v178 = vadd.f32 0.0, %v177
  %v179 = vpop.f32.mrf.mxu0
  %180 = vmatprep.mubr.f32.mxu0 0.0
  %181 = vmatmul.mubr.f32.gmra.mxu0 %v104
  %v182 = vpop.f32.mrf.mxu0
  %v183 = vadd.f32 0.0, %v182
  %v184 = vpop.f32.mrf.mxu0
  %185 = vmatprep.mubr.f32.mxu0 0.0
  %186 = vmatmul.mubr.f32.gmra.mxu0 %v105
  %v187 = vpop.f32.mrf.mxu0
  %v188 = vadd.f32 0.0, %v187
  %v189 = vpop.f32.mrf.mxu0
  %190 = vmatprep.mubr.f32.mxu0 0.0
  %191 = vmatmul.mubr.f32.gmra.mxu0 %v106
  %v192 = vpop.f32.mrf.mxu0
  %v193 = vadd.f32 0.0, %v192
  %v194 = vpop.f32.mrf.mxu0
  %195 = vmatprep.mubr.f32.mxu0 0.0
  %196 = vmatmul.mubr.f32.gmra.mxu0 %v107
  %v197 = vpop.f32.mrf.mxu0
  %v198 = vadd.f32 0.0, %v197
  %v199 = vpop.f32.mrf.mxu0
  %200 = vmatprep.mubr.f32.mxu0 0.0
  %201 = vmatmul.mubr.f32.gmra.mxu0 %v108
  %v202 = vpop.f32.mrf.mxu0
  %v203 = vadd.f32 0.0, %v202
  %v204 = vpop.f32.mrf.mxu0
  %205 = vmatprep.mubr.f32.mxu0 0.0
  %206 = vmatmul.mubr.f32.gmra.mxu0 %v109
  %v207 = vpop.f32.mrf.mxu0
  %v208 = vadd.f32 0.0, %v207
  %v209 = vpop.f32.mrf.mxu0
  %210 = vmatprep.mubr.f32.mxu0 0.0
  %211 = vmatmul.mubr.f32.gmra.mxu0 %v110
  %v212 = vpop.f32.mrf.mxu0
  %v213 = vadd.f32 0.0, %v212
  %v214 = vpop.f32.mrf.mxu0
  %215 = vdwg.mxu0
  %v216 = vld [vmem:[%s7] sm:$0xff]
  %v217 = vld [vmem:[%s7 + $0x8] sm:$0xff]
  %v218 = vld [vmem:[%s7 + $0x10] sm:$0xff]
  %v219 = vld [vmem:[%s7 + $0x18] sm:$0xff]
  %v220 = vld [vmem:[%s7 + $0x20] sm:$0xff]
  %v221 = vld [vmem:[%s7 + $0x28] sm:$0xff]
  %v222 = vld [vmem:[%s7 + $0x30] sm:$0xff]
  %v223 = vld [vmem:[%s7 + $0x38] sm:$0xff]
  %vm224 = vcmask 523264
  %v226 = vsel %vm224, %v178, 0
  %v229 = vsel %vm224, %v183, 0
  %v232 = vsel %vm224, %v188, 0
  %v235 = vsel %vm224, %v193, 0
  %v238 = vsel %vm224, %v198, 0
  %v241 = vsel %vm224, %v203, 0
  %v244 = vsel %vm224, %v208, 0
  %v247 = vsel %vm224, %v213, 0
  %249 = vmatprep.subr.mxu0 0.0
  %250 = vmatpush1.msra.mxu0 0.0
  %251 = vmatprep.subr.mxu0 0.0
  %252 = vmatpush1.msra.mxu0 0.0
  %253 = vmatprep.subr.mxu0 0.0
  %254 = vmatpush1.msra.mxu0 0.0
  %255 = vmatprep.subr.mxu0 0.0
  %256 = vmatpush1.msra.mxu0 0.0
  %257 = vmatprep.subr.mxu0 0.0
  %258 = vmatpush1.msra.mxu0 0.0
  %259 = vmatprep.subr.mxu0 0.0
  %260 = vmatpush1.msra.mxu0 0.0
  %261 = vmatprep.subr.mxu0 0.0
  %262 = vmatpush1.msra.mxu0 0.0
  %263 = vmatprep.subr.mxu0 0.0
  %264 = vmatpush1.msra.mxu0 0.0
  %265 = vmatprep.subr.mxu0 0.0
  %266 = vmatpush1.msra.mxu0 %v223
  %267 = vmatprep.subr.mxu0 0.0
  %268 = vmatpush1.msra.mxu0 %v222
  %269 = vmatprep.subr.mxu0 0.0
  %270 = vmatpush1.msra.mxu0 %v221
  %271 = vmatprep.subr.mxu0 0.0
  %272 = vmatpush1.msra.mxu0 %v220
  %273 = vmatprep.subr.mxu0 0.0
  %274 = vmatpush1.msra.mxu0 %v219
  %275 = vmatprep.subr.mxu0 0.0
  %276 = vmatpush1.msra.mxu0 %v218
  %277 = vmatprep.subr.mxu0 0.0
  %278 = vmatpush1.msra.mxu0 %v217
  %279 = vmatprep.subr.mxu0 0.0
  %280 = vmatpush1.msra.mxu0 %v216
  %281 = vmatprep.subr.mxu0 0.0
  %282 = vmatpush2.msra.mxu0 0.0
  %283 = vmatprep.subr.mxu0 0.0
  %284 = vmatpush2.msra.mxu0 0.0
  %285 = vmatprep.subr.mxu0 0.0
  %286 = vmatpush2.msra.mxu0 0.0
  %287 = vmatprep.subr.mxu0 0.0
  %288 = vmatpush2.msra.mxu0 0.0
  %289 = vmatprep.subr.mxu0 0.0
  %290 = vmatpush2.msra.mxu0 0.0
  %291 = vmatprep.subr.mxu0 0.0
  %292 = vmatpush2.msra.mxu0 0.0
  %293 = vmatprep.subr.mxu0 0.0
  %294 = vmatpush2.msra.mxu0 0.0
  %295 = vmatprep.subr.mxu0 0.0
  %296 = vmatpush2.msra.mxu0 0.0
  %297 = vmatprep.subr.mxu0 0.0
  %298 = vmatpush2.msra.mxu0 0.0
  %299 = vmatprep.subr.mxu0 0.0
  %300 = vmatpush2.msra.mxu0 0.0
  %301 = vmatprep.subr.mxu0 0.0
  %302 = vmatpush2.msra.mxu0 0.0
  %303 = vmatprep.subr.mxu0 0.0
  %304 = vmatpush2.msra.mxu0 0.0
  %305 = vmatprep.subr.mxu0 0.0
  %306 = vmatpush2.msra.mxu0 0.0
  %307 = vmatprep.subr.mxu0 0.0
  %308 = vmatpush2.msra.mxu0 0.0
  %309 = vmatprep.subr.mxu0 0.0
  %310 = vmatpush2.msra.mxu0 0.0
  %311 = vmatprep.subr.mxu0 0.0
  %312 = vmatpush2.msra.mxu0 0.0
  %313 = vmatprep.mubr.f32.mxu0 0.0
  %314 = vmatmul.mubr.f32.gmra.mxu0 %v226
  %v315 = vpop.f32.mrf.mxu0
  %v316 = vadd.f32 0.0, %v315
  %v317 = vpop.f32.mrf.mxu0
  %318 = vmatprep.mubr.f32.mxu0 0.0
  %319 = vmatmul.mubr.f32.gmra.mxu0 %v229
  %v320 = vpop.f32.mrf.mxu0
  %v321 = vadd.f32 0.0, %v320
  %v322 = vpop.f32.mrf.mxu0
  %323 = vmatprep.mubr.f32.mxu0 0.0
  %324 = vmatmul.mubr.f32.gmra.mxu0 %v232
  %v325 = vpop.f32.mrf.mxu0
  %v326 = vadd.f32 0.0, %v325
  %v327 = vpop.f32.mrf.mxu0
  %328 = vmatprep.mubr.f32.mxu0 0.0
  %329 = vmatmul.mubr.f32.gmra.mxu0 %v235
  %v330 = vpop.f32.mrf.mxu0
  %v331 = vadd.f32 0.0, %v330
  %v332 = vpop.f32.mrf.mxu0
  %333 = vmatprep.mubr.f32.mxu0 0.0
  %334 = vmatmul.mubr.f32.gmra.mxu0 %v238
  %v335 = vpop.f32.mrf.mxu0
  %v336 = vadd.f32 0.0, %v335
  %v337 = vpop.f32.mrf.mxu0
  %338 = vmatprep.mubr.f32.mxu0 0.0
  %339 = vmatmul.mubr.f32.gmra.mxu0 %v241
  %v340 = vpop.f32.mrf.mxu0
  %v341 = vadd.f32 0.0, %v340
  %v342 = vpop.f32.mrf.mxu0
  %343 = vmatprep.mubr.f32.mxu0 0.0
  %344 = vmatmul.mubr.f32.gmra.mxu0 %v244
  %v345 = vpop.f32.mrf.mxu0
  %v346 = vadd.f32 0.0, %v345
  %v347 = vpop.f32.mrf.mxu0
  %348 = vmatprep.mubr.f32.mxu0 0.0
  %349 = vmatmul.mubr.f32.gmra.mxu0 %v247
  %v350 = vpop.f32.mrf.mxu0
  %v351 = vadd.f32 0.0, %v350
  %v352 = vpop.f32.mrf.mxu0
  %353 = vdwg.mxu0
  %v355 = vlaneseq
  %v356 = vshrl.u32 %v355, 7
  %v357 = vsub.s32 0, %v356
  %v358 = vrot.slane %v102, %v357
  %v360 = vadd.f32 %v358, %v316
  %v361 = vadd.f32 %v358, %v321
  %v362 = vadd.f32 %v358, %v326
  %v363 = vadd.f32 %v358, %v331
  %v364 = vadd.f32 %v358, %v336
  %v365 = vadd.f32 %v358, %v341
  %v366 = vadd.f32 %v358, %v346
  %v367 = vadd.f32 %v358, %v351
  %s368 = scalar_lea.vmem %s1, 64
  %v369 = vld [vmem:[%s368] sm:$0xff]
  %v370 = vld [vmem:[%s368 + $0x8] sm:$0xff]
  %v371 = vld [vmem:[%s368 + $0x10] sm:$0xff]
  %v372 = vld [vmem:[%s368 + $0x18] sm:$0xff]
  %v373 = vld [vmem:[%s368 + $0x20] sm:$0xff]
  %v374 = vld [vmem:[%s368 + $0x28] sm:$0xff]
  %v375 = vld [vmem:[%s368 + $0x30] sm:$0xff]
  %v376 = vld [vmem:[%s368 + $0x38] sm:$0xff]
  %377 = vmatprep.subr.mxu0 0.0
  %378 = vmatpush1.msra.mxu0 %v101
  %379 = vmatprep.subr.mxu0 0.0
  %380 = vmatpush1.msra.mxu0 %v100
  %381 = vmatprep.subr.mxu0 0.0
  %382 = vmatpush1.msra.mxu0 %v99
  %383 = vmatprep.subr.mxu0 0.0
  %384 = vmatpush1.msra.mxu0 %v98
  %385 = vmatprep.subr.mxu0 0.0
  %386 = vmatpush1.msra.mxu0 %v97
  %387 = vmatprep.subr.mxu0 0.0
  %388 = vmatpush1.msra.mxu0 %v96
  %389 = vmatprep.subr.mxu0 0.0
  %390 = vmatpush1.msra.mxu0 %v95
  %391 = vmatprep.subr.mxu0 0.0
  %392 = vmatpush1.msra.mxu0 %v94
  %393 = vmatprep.subr.mxu0 0.0
  %394 = vmatpush1.msra.mxu0 %v93
  %395 = vmatprep.subr.mxu0 0.0
  %396 = vmatpush1.msra.mxu0 %v92
  %397 = vmatprep.subr.mxu0 0.0
  %398 = vmatpush1.msra.mxu0 %v91
  %399 = vmatprep.subr.mxu0 0.0
  %400 = vmatpush1.msra.mxu0 %v90
  %401 = vmatprep.subr.mxu0 0.0
  %402 = vmatpush1.msra.mxu0 %v89
  %403 = vmatprep.subr.mxu0 0.0
  %404 = vmatpush1.msra.mxu0 %v88
  %405 = vmatprep.subr.mxu0 0.0
  %406 = vmatpush1.msra.mxu0 %v87
  %407 = vmatprep.subr.mxu0 0.0
  %408 = vmatpush1.msra.mxu0 %v86
  %409 = vmatprep.subr.mxu0 0.0
  %410 = vmatpush2.msra.mxu0 0.0
  %411 = vmatprep.subr.mxu0 0.0
  %412 = vmatpush2.msra.mxu0 0.0
  %413 = vmatprep.subr.mxu0 0.0
  %414 = vmatpush2.msra.mxu0 0.0
  %415 = vmatprep.subr.mxu0 0.0
  %416 = vmatpush2.msra.mxu0 0.0
  %417 = vmatprep.subr.mxu0 0.0
  %418 = vmatpush2.msra.mxu0 0.0
  %419 = vmatprep.subr.mxu0 0.0
  %420 = vmatpush2.msra.mxu0 0.0
  %421 = vmatprep.subr.mxu0 0.0
  %422 = vmatpush2.msra.mxu0 0.0
  %423 = vmatprep.subr.mxu0 0.0
  %424 = vmatpush2.msra.mxu0 0.0
  %425 = vmatprep.subr.mxu0 0.0
  %426 = vmatpush2.msra.mxu0 0.0
  %427 = vmatprep.subr.mxu0 0.0
  %428 = vmatpush2.msra.mxu0 0.0
  %429 = vmatprep.subr.mxu0 0.0
  %430 = vmatpush2.msra.mxu0 0.0
  %431 = vmatprep.subr.mxu0 0.0
  %432 = vmatpush2.msra.mxu0 0.0
  %433 = vmatprep.subr.mxu0 0.0
  %434 = vmatpush2.msra.mxu0 0.0
  %435 = vmatprep.subr.mxu0 0.0
  %436 = vmatpush2.msra.mxu0 0.0
  %437 = vmatprep.subr.mxu0 0.0
  %438 = vmatpush2.msra.mxu0 0.0
  %439 = vmatprep.subr.mxu0 0.0
  %440 = vmatpush2.msra.mxu0 0.0
  %441 = vmatprep.mubr.f32.mxu0 0.0
  %442 = vmatmul.mubr.f32.gmra.mxu0 %v369
  %v443 = vpop.f32.mrf.mxu0
  %v444 = vadd.f32 0.0, %v443
  %v445 = vpop.f32.mrf.mxu0
  %446 = vmatprep.mubr.f32.mxu0 0.0
  %447 = vmatmul.mubr.f32.gmra.mxu0 %v370
  %v448 = vpop.f32.mrf.mxu0
  %v449 = vadd.f32 0.0, %v448
  %v450 = vpop.f32.mrf.mxu0
  %451 = vmatprep.mubr.f32.mxu0 0.0
  %452 = vmatmul.mubr.f32.gmra.mxu0 %v371
  %v453 = vpop.f32.mrf.mxu0
  %v454 = vadd.f32 0.0, %v453
  %v455 = vpop.f32.mrf.mxu0
  %456 = vmatprep.mubr.f32.mxu0 0.0
  %457 = vmatmul.mubr.f32.gmra.mxu0 %v372
  %v458 = vpop.f32.mrf.mxu0
  %v459 = vadd.f32 0.0, %v458
  %v460 = vpop.f32.mrf.mxu0
  %461 = vmatprep.mubr.f32.mxu0 0.0
  %462 = vmatmul.mubr.f32.gmra.mxu0 %v373
  %v463 = vpop.f32.mrf.mxu0
  %v464 = vadd.f32 0.0, %v463
  %v465 = vpop.f32.mrf.mxu0
  %466 = vmatprep.mubr.f32.mxu0 0.0
  %467 = vmatmul.mubr.f32.gmra.mxu0 %v374
  %v468 = vpop.f32.mrf.mxu0
  %v469 = vadd.f32 0.0, %v468
  %v470 = vpop.f32.mrf.mxu0
  %471 = vmatprep.mubr.f32.mxu0 0.0
  %472 = vmatmul.mubr.f32.gmra.mxu0 %v375
  %v473 = vpop.f32.mrf.mxu0
  %v474 = vadd.f32 0.0, %v473
  %v475 = vpop.f32.mrf.mxu0
  %476 = vmatprep.mubr.f32.mxu0 0.0
  %477 = vmatmul.mubr.f32.gmra.mxu0 %v376
  %v478 = vpop.f32.mrf.mxu0
  %v479 = vadd.f32 0.0, %v478
  %v480 = vpop.f32.mrf.mxu0
  %481 = vdwg.mxu0
  %s482 = scalar_lea.vmem %s7, 64
  %v483 = vld [vmem:[%s482] sm:$0xff]
  %v484 = vld [vmem:[%s482 + $0x8] sm:$0xff]
  %v485 = vld [vmem:[%s482 + $0x10] sm:$0xff]
  %v486 = vld [vmem:[%s482 + $0x18] sm:$0xff]
  %v487 = vld [vmem:[%s482 + $0x20] sm:$0xff]
  %v488 = vld [vmem:[%s482 + $0x28] sm:$0xff]
  %v489 = vld [vmem:[%s482 + $0x30] sm:$0xff]
  %v490 = vld [vmem:[%s482 + $0x38] sm:$0xff]
  %v492 = vsel %vm224, %v444, 0
  %v495 = vsel %vm224, %v449, 0
  %v498 = vsel %vm224, %v454, 0
  %v501 = vsel %vm224, %v459, 0
  %v504 = vsel %vm224, %v464, 0
  %v507 = vsel %vm224, %v469, 0
  %v510 = vsel %vm224, %v474, 0
  %v513 = vsel %vm224, %v479, 0
  %515 = vmatprep.subr.mxu0 0.0
  %516 = vmatpush1.msra.mxu0 0.0
  %517 = vmatprep.subr.mxu0 0.0
  %518 = vmatpush1.msra.mxu0 0.0
  %519 = vmatprep.subr.mxu0 0.0
  %520 = vmatpush1.msra.mxu0 0.0
  %521 = vmatprep.subr.mxu0 0.0
  %522 = vmatpush1.msra.mxu0 0.0
  %523 = vmatprep.subr.mxu0 0.0
  %524 = vmatpush1.msra.mxu0 0.0
  %525 = vmatprep.subr.mxu0 0.0
  %526 = vmatpush1.msra.mxu0 0.0
  %527 = vmatprep.subr.mxu0 0.0
  %528 = vmatpush1.msra.mxu0 0.0
  %529 = vmatprep.subr.mxu0 0.0
  %530 = vmatpush1.msra.mxu0 0.0
  %531 = vmatprep.subr.mxu0 0.0
  %532 = vmatpush1.msra.mxu0 %v490
  %533 = vmatprep.subr.mxu0 0.0
  %534 = vmatpush1.msra.mxu0 %v489
  %535 = vmatprep.subr.mxu0 0.0
  %536 = vmatpush1.msra.mxu0 %v488
  %537 = vmatprep.subr.mxu0 0.0
  %538 = vmatpush1.msra.mxu0 %v487
  %539 = vmatprep.subr.mxu0 0.0
  %540 = vmatpush1.msra.mxu0 %v486
  %541 = vmatprep.subr.mxu0 0.0
  %542 = vmatpush1.msra.mxu0 %v485
  %543 = vmatprep.subr.mxu0 0.0
  %544 = vmatpush1.msra.mxu0 %v484
  %545 = vmatprep.subr.mxu0 0.0
  %546 = vmatpush1.msra.mxu0 %v483
  %547 = vmatprep.subr.mxu0 0.0
  %548 = vmatpush2.msra.mxu0 0.0
  %549 = vmatprep.subr.mxu0 0.0
  %550 = vmatpush2.msra.mxu0 0.0
  %551 = vmatprep.subr.mxu0 0.0
  %552 = vmatpush2.msra.mxu0 0.0
  %553 = vmatprep.subr.mxu0 0.0
  %554 = vmatpush2.msra.mxu0 0.0
  %555 = vmatprep.subr.mxu0 0.0
  %556 = vmatpush2.msra.mxu0 0.0
  %557 = vmatprep.subr.mxu0 0.0
  %558 = vmatpush2.msra.mxu0 0.0
  %559 = vmatprep.subr.mxu0 0.0
  %560 = vmatpush2.msra.mxu0 0.0
  %561 = vmatprep.subr.mxu0 0.0
  %562 = vmatpush2.msra.mxu0 0.0
  %563 = vmatprep.subr.mxu0 0.0
  %564 = vmatpush2.msra.mxu0 0.0
  %565 = vmatprep.subr.mxu0 0.0
  %566 = vmatpush2.msra.mxu0 0.0
  %567 = vmatprep.subr.mxu0 0.0
  %568 = vmatpush2.msra.mxu0 0.0
  %569 = vmatprep.subr.mxu0 0.0
  %570 = vmatpush2.msra.mxu0 0.0
  %571 = vmatprep.subr.mxu0 0.0
  %572 = vmatpush2.msra.mxu0 0.0
  %573 = vmatprep.subr.mxu0 0.0
  %574 = vmatpush2.msra.mxu0 0.0
  %575 = vmatprep.subr.mxu0 0.0
  %576 = vmatpush2.msra.mxu0 0.0
  %577 = vmatprep.subr.mxu0 0.0
  %578 = vmatpush2.msra.mxu0 0.0
  %579 = vmatprep.mubr.f32.mxu0 0.0
  %580 = vmatmul.mubr.f32.gmra.mxu0 %v492
  %v581 = vpop.f32.mrf.mxu0
  %v582 = vadd.f32 0.0, %v581
  %v583 = vpop.f32.mrf.mxu0
  %584 = vmatprep.mubr.f32.mxu0 0.0
  %585 = vmatmul.mubr.f32.gmra.mxu0 %v495
  %v586 = vpop.f32.mrf.mxu0
  %v587 = vadd.f32 0.0, %v586
  %v588 = vpop.f32.mrf.mxu0
  %589 = vmatprep.mubr.f32.mxu0 0.0
  %590 = vmatmul.mubr.f32.gmra.mxu0 %v498
  %v591 = vpop.f32.mrf.mxu0
  %v592 = vadd.f32 0.0, %v591
  %v593 = vpop.f32.mrf.mxu0
  %594 = vmatprep.mubr.f32.mxu0 0.0
  %595 = vmatmul.mubr.f32.gmra.mxu0 %v501
  %v596 = vpop.f32.mrf.mxu0
  %v597 = vadd.f32 0.0, %v596
  %v598 = vpop.f32.mrf.mxu0
  %599 = vmatprep.mubr.f32.mxu0 0.0
  %600 = vmatmul.mubr.f32.gmra.mxu0 %v504
  %v601 = vpop.f32.mrf.mxu0
  %v602 = vadd.f32 0.0, %v601
  %v603 = vpop.f32.mrf.mxu0
  %604 = vmatprep.mubr.f32.mxu0 0.0
  %605 = vmatmul.mubr.f32.gmra.mxu0 %v507
  %v606 = vpop.f32.mrf.mxu0
  %v607 = vadd.f32 0.0, %v606
  %v608 = vpop.f32.mrf.mxu0
  %609 = vmatprep.mubr.f32.mxu0 0.0
  %610 = vmatmul.mubr.f32.gmra.mxu0 %v510
  %v611 = vpop.f32.mrf.mxu0
  %v612 = vadd.f32 0.0, %v611
  %v613 = vpop.f32.mrf.mxu0
  %614 = vmatprep.mubr.f32.mxu0 0.0
  %615 = vmatmul.mubr.f32.gmra.mxu0 %v513
  %v616 = vpop.f32.mrf.mxu0
  %v617 = vadd.f32 0.0, %v616
  %v618 = vpop.f32.mrf.mxu0
  %619 = vdwg.mxu0
  %v620 = vadd.f32 %v360, %v582
  %v621 = vadd.f32 %v361, %v587
  %v622 = vadd.f32 %v362, %v592
  %v623 = vadd.f32 %v363, %v597
  %v624 = vadd.f32 %v364, %v602
  %v625 = vadd.f32 %v365, %v607
  %v626 = vadd.f32 %v366, %v612
  %v627 = vadd.f32 %v367, %v617
  %s628 = scalar_lea.vmem %s1, 128
  %v629 = vld [vmem:[%s628] sm:$0xff]
  %v630 = vld [vmem:[%s628 + $0x8] sm:$0xff]
  %v631 = vld [vmem:[%s628 + $0x10] sm:$0xff]
  %v632 = vld [vmem:[%s628 + $0x18] sm:$0xff]
  %v633 = vld [vmem:[%s628 + $0x20] sm:$0xff]
  %v634 = vld [vmem:[%s628 + $0x28] sm:$0xff]
  %v635 = vld [vmem:[%s628 + $0x30] sm:$0xff]
  %v636 = vld [vmem:[%s628 + $0x38] sm:$0xff]
  %637 = vmatprep.subr.mxu0 0.0
  %638 = vmatpush1.msra.mxu0 %v101
  %639 = vmatprep.subr.mxu0 0.0
  %640 = vmatpush1.msra.mxu0 %v100
  %641 = vmatprep.subr.mxu0 0.0
  %642 = vmatpush1.msra.mxu0 %v99
  %643 = vmatprep.subr.mxu0 0.0
  %644 = vmatpush1.msra.mxu0 %v98
  %645 = vmatprep.subr.mxu0 0.0
  %646 = vmatpush1.msra.mxu0 %v97
  %647 = vmatprep.subr.mxu0 0.0
  %648 = vmatpush1.msra.mxu0 %v96
  %649 = vmatprep.subr.mxu0 0.0
  %650 = vmatpush1.msra.mxu0 %v95
  %651 = vmatprep.subr.mxu0 0.0
  %652 = vmatpush1.msra.mxu0 %v94
  %653 = vmatprep.subr.mxu0 0.0
  %654 = vmatpush1.msra.mxu0 %v93
  %655 = vmatprep.subr.mxu0 0.0
  %656 = vmatpush1.msra.mxu0 %v92
  %657 = vmatprep.subr.mxu0 0.0
  %658 = vmatpush1.msra.mxu0 %v91
  %659 = vmatprep.subr.mxu0 0.0
  %660 = vmatpush1.msra.mxu0 %v90
  %661 = vmatprep.subr.mxu0 0.0
  %662 = vmatpush1.msra.mxu0 %v89
  %663 = vmatprep.subr.mxu0 0.0
  %664 = vmatpush1.msra.mxu0 %v88
  %665 = vmatprep.subr.mxu0 0.0
  %666 = vmatpush1.msra.mxu0 %v87
  %667 = vmatprep.subr.mxu0 0.0
  %668 = vmatpush1.msra.mxu0 %v86
  %669 = vmatprep.subr.mxu0 0.0
  %670 = vmatpush2.msra.mxu0 0.0
  %671 = vmatprep.subr.mxu0 0.0
  %672 = vmatpush2.msra.mxu0 0.0
  %673 = vmatprep.subr.mxu0 0.0
  %674 = vmatpush2.msra.mxu0 0.0
  %675 = vmatprep.subr.mxu0 0.0
  %676 = vmatpush2.msra.mxu0 0.0
  %677 = vmatprep.subr.mxu0 0.0
  %678 = vmatpush2.msra.mxu0 0.0
  %679 = vmatprep.subr.mxu0 0.0
  %680 = vmatpush2.msra.mxu0 0.0
  %681 = vmatprep.subr.mxu0 0.0
  %682 = vmatpush2.msra.mxu0 0.0
  %683 = vmatprep.subr.mxu0 0.0
  %684 = vmatpush2.msra.mxu0 0.0
  %685 = vmatprep.subr.mxu0 0.0
  %686 = vmatpush2.msra.mxu0 0.0
  %687 = vmatprep.subr.mxu0 0.0
  %688 = vmatpush2.msra.mxu0 0.0
  %689 = vmatprep.subr.mxu0 0.0
  %690 = vmatpush2.msra.mxu0 0.0
  %691 = vmatprep.subr.mxu0 0.0
  %692 = vmatpush2.msra.mxu0 0.0
  %693 = vmatprep.subr.mxu0 0.0
  %694 = vmatpush2.msra.mxu0 0.0
  %695 = vmatprep.subr.mxu0 0.0
  %696 = vmatpush2.msra.mxu0 0.0
  %697 = vmatprep.subr.mxu0 0.0
  %698 = vmatpush2.msra.mxu0 0.0
  %699 = vmatprep.subr.mxu0 0.0
  %700 = vmatpush2.msra.mxu0 0.0
  %701 = vmatprep.mubr.f32.mxu0 0.0
  %702 = vmatmul.mubr.f32.gmra.mxu0 %v629
  %v703 = vpop.f32.mrf.mxu0
  %v704 = vadd.f32 0.0, %v703
  %v705 = vpop.f32.mrf.mxu0
  %706 = vmatprep.mubr.f32.mxu0 0.0
  %707 = vmatmul.mubr.f32.gmra.mxu0 %v630
  %v708 = vpop.f32.mrf.mxu0
  %v709 = vadd.f32 0.0, %v708
  %v710 = vpop.f32.mrf.mxu0
  %711 = vmatprep.mubr.f32.mxu0 0.0
  %712 = vmatmul.mubr.f32.gmra.mxu0 %v631
  %v713 = vpop.f32.mrf.mxu0
  %v714 = vadd.f32 0.0, %v713
  %v715 = vpop.f32.mrf.mxu0
  %716 = vmatprep.mubr.f32.mxu0 0.0
  %717 = vmatmul.mubr.f32.gmra.mxu0 %v632
  %v718 = vpop.f32.mrf.mxu0
  %v719 = vadd.f32 0.0, %v718
  %v720 = vpop.f32.mrf.mxu0
  %721 = vmatprep.mubr.f32.mxu0 0.0
  %722 = vmatmul.mubr.f32.gmra.mxu0 %v633
  %v723 = vpop.f32.mrf.mxu0
  %v724 = vadd.f32 0.0, %v723
  %v725 = vpop.f32.mrf.mxu0
  %726 = vmatprep.mubr.f32.mxu0 0.0
  %727 = vmatmul.mubr.f32.gmra.mxu0 %v634
  %v728 = vpop.f32.mrf.mxu0
  %v729 = vadd.f32 0.0, %v728
  %v730 = vpop.f32.mrf.mxu0
  %731 = vmatprep.mubr.f32.mxu0 0.0
  %732 = vmatmul.mubr.f32.gmra.mxu0 %v635
  %v733 = vpop.f32.mrf.mxu0
  %v734 = vadd.f32 0.0, %v733
  %v735 = vpop.f32.mrf.mxu0
  %736 = vmatprep.mubr.f32.mxu0 0.0
  %737 = vmatmul.mubr.f32.gmra.mxu0 %v636
  %v738 = vpop.f32.mrf.mxu0
  %v739 = vadd.f32 0.0, %v738
  %v740 = vpop.f32.mrf.mxu0
  %741 = vdwg.mxu0
  %s742 = scalar_lea.vmem %s7, 128
  %v743 = vld [vmem:[%s742] sm:$0xff]
  %v744 = vld [vmem:[%s742 + $0x8] sm:$0xff]
  %v745 = vld [vmem:[%s742 + $0x10] sm:$0xff]
  %v746 = vld [vmem:[%s742 + $0x18] sm:$0xff]
  %v747 = vld [vmem:[%s742 + $0x20] sm:$0xff]
  %v748 = vld [vmem:[%s742 + $0x28] sm:$0xff]
  %v749 = vld [vmem:[%s742 + $0x30] sm:$0xff]
  %v750 = vld [vmem:[%s742 + $0x38] sm:$0xff]
  %v752 = vsel %vm224, %v704, 0
  %v755 = vsel %vm224, %v709, 0
  %v758 = vsel %vm224, %v714, 0
  %v761 = vsel %vm224, %v719, 0
  %v764 = vsel %vm224, %v724, 0
  %v767 = vsel %vm224, %v729, 0
  %v770 = vsel %vm224, %v734, 0
  %v773 = vsel %vm224, %v739, 0
  %775 = vmatprep.subr.mxu0 0.0
  %776 = vmatpush1.msra.mxu0 0.0
  %777 = vmatprep.subr.mxu0 0.0
  %778 = vmatpush1.msra.mxu0 0.0
  %779 = vmatprep.subr.mxu0 0.0
  %780 = vmatpush1.msra.mxu0 0.0
  %781 = vmatprep.subr.mxu0 0.0
  %782 = vmatpush1.msra.mxu0 0.0
  %783 = vmatprep.subr.mxu0 0.0
  %784 = vmatpush1.msra.mxu0 0.0
  %785 = vmatprep.subr.mxu0 0.0
  %786 = vmatpush1.msra.mxu0 0.0
  %787 = vmatprep.subr.mxu0 0.0
  %788 = vmatpush1.msra.mxu0 0.0
  %789 = vmatprep.subr.mxu0 0.0
  %790 = vmatpush1.msra.mxu0 0.0
  %791 = vmatprep.subr.mxu0 0.0
  %792 = vmatpush1.msra.mxu0 %v750
  %793 = vmatprep.subr.mxu0 0.0
  %794 = vmatpush1.msra.mxu0 %v749
  %795 = vmatprep.subr.mxu0 0.0
  %796 = vmatpush1.msra.mxu0 %v748
  %797 = vmatprep.subr.mxu0 0.0
  %798 = vmatpush1.msra.mxu0 %v747
  %799 = vmatprep.subr.mxu0 0.0
  %800 = vmatpush1.msra.mxu0 %v746
  %801 = vmatprep.subr.mxu0 0.0
  %802 = vmatpush1.msra.mxu0 %v745
  %803 = vmatprep.subr.mxu0 0.0
  %804 = vmatpush1.msra.mxu0 %v744
  %805 = vmatprep.subr.mxu0 0.0
  %806 = vmatpush1.msra.mxu0 %v743
  %807 = vmatprep.subr.mxu0 0.0
  %808 = vmatpush2.msra.mxu0 0.0
  %809 = vmatprep.subr.mxu0 0.0
  %810 = vmatpush2.msra.mxu0 0.0
  %811 = vmatprep.subr.mxu0 0.0
  %812 = vmatpush2.msra.mxu0 0.0
  %813 = vmatprep.subr.mxu0 0.0
  %814 = vmatpush2.msra.mxu0 0.0
  %815 = vmatprep.subr.mxu0 0.0
  %816 = vmatpush2.msra.mxu0 0.0
  %817 = vmatprep.subr.mxu0 0.0
  %818 = vmatpush2.msra.mxu0 0.0
  %819 = vmatprep.subr.mxu0 0.0
  %820 = vmatpush2.msra.mxu0 0.0
  %821 = vmatprep.subr.mxu0 0.0
  %822 = vmatpush2.msra.mxu0 0.0
  %823 = vmatprep.subr.mxu0 0.0
  %824 = vmatpush2.msra.mxu0 0.0
  %825 = vmatprep.subr.mxu0 0.0
  %826 = vmatpush2.msra.mxu0 0.0
  %827 = vmatprep.subr.mxu0 0.0
  %828 = vmatpush2.msra.mxu0 0.0
  %829 = vmatprep.subr.mxu0 0.0
  %830 = vmatpush2.msra.mxu0 0.0
  %831 = vmatprep.subr.mxu0 0.0
  %832 = vmatpush2.msra.mxu0 0.0
  %833 = vmatprep.subr.mxu0 0.0
  %834 = vmatpush2.msra.mxu0 0.0
  %835 = vmatprep.subr.mxu0 0.0
  %836 = vmatpush2.msra.mxu0 0.0
  %837 = vmatprep.subr.mxu0 0.0
  %838 = vmatpush2.msra.mxu0 0.0
  %839 = vmatprep.mubr.f32.mxu0 0.0
  %840 = vmatmul.mubr.f32.gmra.mxu0 %v752
  %v841 = vpop.f32.mrf.mxu0
  %v842 = vadd.f32 0.0, %v841
  %v843 = vpop.f32.mrf.mxu0
  %844 = vmatprep.mubr.f32.mxu0 0.0
  %845 = vmatmul.mubr.f32.gmra.mxu0 %v755
  %v846 = vpop.f32.mrf.mxu0
  %v847 = vadd.f32 0.0, %v846
  %v848 = vpop.f32.mrf.mxu0
  %849 = vmatprep.mubr.f32.mxu0 0.0
  %850 = vmatmul.mubr.f32.gmra.mxu0 %v758
  %v851 = vpop.f32.mrf.mxu0
  %v852 = vadd.f32 0.0, %v851
  %v853 = vpop.f32.mrf.mxu0
  %854 = vmatprep.mubr.f32.mxu0 0.0
  %855 = vmatmul.mubr.f32.gmra.mxu0 %v761
  %v856 = vpop.f32.mrf.mxu0
  %v857 = vadd.f32 0.0, %v856
  %v858 = vpop.f32.mrf.mxu0
  %859 = vmatprep.mubr.f32.mxu0 0.0
  %860 = vmatmul.mubr.f32.gmra.mxu0 %v764
  %v861 = vpop.f32.mrf.mxu0
  %v862 = vadd.f32 0.0, %v861
  %v863 = vpop.f32.mrf.mxu0
  %864 = vmatprep.mubr.f32.mxu0 0.0
  %865 = vmatmul.mubr.f32.gmra.mxu0 %v767
  %v866 = vpop.f32.mrf.mxu0
  %v867 = vadd.f32 0.0, %v866
  %v868 = vpop.f32.mrf.mxu0
  %869 = vmatprep.mubr.f32.mxu0 0.0
  %870 = vmatmul.mubr.f32.gmra.mxu0 %v770
  %v871 = vpop.f32.mrf.mxu0
  %v872 = vadd.f32 0.0, %v871
  %v873 = vpop.f32.mrf.mxu0
  %874 = vmatprep.mubr.f32.mxu0 0.0
  %875 = vmatmul.mubr.f32.gmra.mxu0 %v773
  %v876 = vpop.f32.mrf.mxu0
  %v877 = vadd.f32 0.0, %v876
  %v878 = vpop.f32.mrf.mxu0
  %879 = vdwg.mxu0
  %v880 = vadd.f32 %v620, %v842
  %v881 = vadd.f32 %v621, %v847
  %v882 = vadd.f32 %v622, %v852
  %v883 = vadd.f32 %v623, %v857
  %v884 = vadd.f32 %v624, %v862
  %v885 = vadd.f32 %v625, %v867
  %v886 = vadd.f32 %v626, %v872
  %v887 = vadd.f32 %v627, %v877
  %s888 = scalar_lea.vmem %s1, 192
  %v889 = vld [vmem:[%s888] sm:$0xff]
  %v890 = vld [vmem:[%s888 + $0x8] sm:$0xff]
  %v891 = vld [vmem:[%s888 + $0x10] sm:$0xff]
  %v892 = vld [vmem:[%s888 + $0x18] sm:$0xff]
  %v893 = vld [vmem:[%s888 + $0x20] sm:$0xff]
  %v894 = vld [vmem:[%s888 + $0x28] sm:$0xff]
  %v895 = vld [vmem:[%s888 + $0x30] sm:$0xff]
  %v896 = vld [vmem:[%s888 + $0x38] sm:$0xff]
  %897 = vmatprep.subr.mxu0 0.0
  %898 = vmatpush1.msra.mxu0 %v101
  %899 = vmatprep.subr.mxu0 0.0
  %900 = vmatpush1.msra.mxu0 %v100
  %901 = vmatprep.subr.mxu0 0.0
  %902 = vmatpush1.msra.mxu0 %v99
  %903 = vmatprep.subr.mxu0 0.0
  %904 = vmatpush1.msra.mxu0 %v98
  %905 = vmatprep.subr.mxu0 0.0
  %906 = vmatpush1.msra.mxu0 %v97
  %907 = vmatprep.subr.mxu0 0.0
  %908 = vmatpush1.msra.mxu0 %v96
  %909 = vmatprep.subr.mxu0 0.0
  %910 = vmatpush1.msra.mxu0 %v95
  %911 = vmatprep.subr.mxu0 0.0
  %912 = vmatpush1.msra.mxu0 %v94
  %913 = vmatprep.subr.mxu0 0.0
  %914 = vmatpush1.msra.mxu0 %v93
  %915 = vmatprep.subr.mxu0 0.0
  %916 = vmatpush1.msra.mxu0 %v92
  %917 = vmatprep.subr.mxu0 0.0
  %918 = vmatpush1.msra.mxu0 %v91
  %919 = vmatprep.subr.mxu0 0.0
  %920 = vmatpush1.msra.mxu0 %v90
  %921 = vmatprep.subr.mxu0 0.0
  %922 = vmatpush1.msra.mxu0 %v89
  %923 = vmatprep.subr.mxu0 0.0
  %924 = vmatpush1.msra.mxu0 %v88
  %925 = vmatprep.subr.mxu0 0.0
  %926 = vmatpush1.msra.mxu0 %v87
  %927 = vmatprep.subr.mxu0 0.0
  %928 = vmatpush1.msra.mxu0 %v86
  %929 = vmatprep.subr.mxu0 0.0
  %930 = vmatpush2.msra.mxu0 0.0
  %931 = vmatprep.subr.mxu0 0.0
  %932 = vmatpush2.msra.mxu0 0.0
  %933 = vmatprep.subr.mxu0 0.0
  %934 = vmatpush2.msra.mxu0 0.0
  %935 = vmatprep.subr.mxu0 0.0
  %936 = vmatpush2.msra.mxu0 0.0
  %937 = vmatprep.subr.mxu0 0.0
  %938 = vmatpush2.msra.mxu0 0.0
  %939 = vmatprep.subr.mxu0 0.0
  %940 = vmatpush2.msra.mxu0 0.0
  %941 = vmatprep.subr.mxu0 0.0
  %942 = vmatpush2.msra.mxu0 0.0
  %943 = vmatprep.subr.mxu0 0.0
  %944 = vmatpush2.msra.mxu0 0.0
  %945 = vmatprep.subr.mxu0 0.0
  %946 = vmatpush2.msra.mxu0 0.0
  %947 = vmatprep.subr.mxu0 0.0
  %948 = vmatpush2.msra.mxu0 0.0
  %949 = vmatprep.subr.mxu0 0.0
  %950 = vmatpush2.msra.mxu0 0.0
  %951 = vmatprep.subr.mxu0 0.0
  %952 = vmatpush2.msra.mxu0 0.0
  %953 = vmatprep.subr.mxu0 0.0
  %954 = vmatpush2.msra.mxu0 0.0
  %955 = vmatprep.subr.mxu0 0.0
  %956 = vmatpush2.msra.mxu0 0.0
  %957 = vmatprep.subr.mxu0 0.0
  %958 = vmatpush2.msra.mxu0 0.0
  %959 = vmatprep.subr.mxu0 0.0
  %960 = vmatpush2.msra.mxu0 0.0
  %961 = vmatprep.mubr.f32.mxu0 0.0
  %962 = vmatmul.mubr.f32.gmra.mxu0 %v889
  %v963 = vpop.f32.mrf.mxu0
  %v964 = vadd.f32 0.0, %v963
  %v965 = vpop.f32.mrf.mxu0
  %966 = vmatprep.mubr.f32.mxu0 0.0
  %967 = vmatmul.mubr.f32.gmra.mxu0 %v890
  %v968 = vpop.f32.mrf.mxu0
  %v969 = vadd.f32 0.0, %v968
  %v970 = vpop.f32.mrf.mxu0
  %971 = vmatprep.mubr.f32.mxu0 0.0
  %972 = vmatmul.mubr.f32.gmra.mxu0 %v891
  %v973 = vpop.f32.mrf.mxu0
  %v974 = vadd.f32 0.0, %v973
  %v975 = vpop.f32.mrf.mxu0
  %976 = vmatprep.mubr.f32.mxu0 0.0
  %977 = vmatmul.mubr.f32.gmra.mxu0 %v892
  %v978 = vpop.f32.mrf.mxu0
  %v979 = vadd.f32 0.0, %v978
  %v980 = vpop.f32.mrf.mxu0
  %981 = vmatprep.mubr.f32.mxu0 0.0
  %982 = vmatmul.mubr.f32.gmra.mxu0 %v893
  %v983 = vpop.f32.mrf.mxu0
  %v984 = vadd.f32 0.0, %v983
  %v985 = vpop.f32.mrf.mxu0
  %986 = vmatprep.mubr.f32.mxu0 0.0
  %987 = vmatmul.mubr.f32.gmra.mxu0 %v894
  %v988 = vpop.f32.mrf.mxu0
  %v989 = vadd.f32 0.0, %v988
  %v990 = vpop.f32.mrf.mxu0
  %991 = vmatprep.mubr.f32.mxu0 0.0
  %992 = vmatmul.mubr.f32.gmra.mxu0 %v895
  %v993 = vpop.f32.mrf.mxu0
  %v994 = vadd.f32 0.0, %v993
  %v995 = vpop.f32.mrf.mxu0
  %996 = vmatprep.mubr.f32.mxu0 0.0
  %997 = vmatmul.mubr.f32.gmra.mxu0 %v896
  %v998 = vpop.f32.mrf.mxu0
  %v999 = vadd.f32 0.0, %v998
  %v1000 = vpop.f32.mrf.mxu0
  %1001 = vdwg.mxu0
  %s1002 = scalar_lea.vmem %s7, 192
  %v1003 = vld [vmem:[%s1002] sm:$0xff]
  %v1004 = vld [vmem:[%s1002 + $0x8] sm:$0xff]
  %v1005 = vld [vmem:[%s1002 + $0x10] sm:$0xff]
  %v1006 = vld [vmem:[%s1002 + $0x18] sm:$0xff]
  %v1007 = vld [vmem:[%s1002 + $0x20] sm:$0xff]
  %v1008 = vld [vmem:[%s1002 + $0x28] sm:$0xff]
  %v1009 = vld [vmem:[%s1002 + $0x30] sm:$0xff]
  %v1010 = vld [vmem:[%s1002 + $0x38] sm:$0xff]
  %v1012 = vsel %vm224, %v964, 0
  %v1015 = vsel %vm224, %v969, 0
  %v1018 = vsel %vm224, %v974, 0
  %v1021 = vsel %vm224, %v979, 0
  %v1024 = vsel %vm224, %v984, 0
  %v1027 = vsel %vm224, %v989, 0
  %v1030 = vsel %vm224, %v994, 0
  %v1033 = vsel %vm224, %v999, 0
  %1035 = vmatprep.subr.mxu0 0.0
  %1036 = vmatpush1.msra.mxu0 0.0
  %1037 = vmatprep.subr.mxu0 0.0
  %1038 = vmatpush1.msra.mxu0 0.0
  %1039 = vmatprep.subr.mxu0 0.0
  %1040 = vmatpush1.msra.mxu0 0.0
  %1041 = vmatprep.subr.mxu0 0.0
  %1042 = vmatpush1.msra.mxu0 0.0
  %1043 = vmatprep.subr.mxu0 0.0
  %1044 = vmatpush1.msra.mxu0 0.0
  %1045 = vmatprep.subr.mxu0 0.0
  %1046 = vmatpush1.msra.mxu0 0.0
  %1047 = vmatprep.subr.mxu0 0.0
  %1048 = vmatpush1.msra.mxu0 0.0
  %1049 = vmatprep.subr.mxu0 0.0
  %1050 = vmatpush1.msra.mxu0 0.0
  %1051 = vmatprep.subr.mxu0 0.0
  %1052 = vmatpush1.msra.mxu0 %v1010
  %1053 = vmatprep.subr.mxu0 0.0
  %1054 = vmatpush1.msra.mxu0 %v1009
  %1055 = vmatprep.subr.mxu0 0.0
  %1056 = vmatpush1.msra.mxu0 %v1008
  %1057 = vmatprep.subr.mxu0 0.0
  %1058 = vmatpush1.msra.mxu0 %v1007
  %1059 = vmatprep.subr.mxu0 0.0
  %1060 = vmatpush1.msra.mxu0 %v1006
  %1061 = vmatprep.subr.mxu0 0.0
  %1062 = vmatpush1.msra.mxu0 %v1005
  %1063 = vmatprep.subr.mxu0 0.0
  %1064 = vmatpush1.msra.mxu0 %v1004
  %1065 = vmatprep.subr.mxu0 0.0
  %1066 = vmatpush1.msra.mxu0 %v1003
  %1067 = vmatprep.subr.mxu0 0.0
  %1068 = vmatpush2.msra.mxu0 0.0
  %1069 = vmatprep.subr.mxu0 0.0
  %1070 = vmatpush2.msra.mxu0 0.0
  %1071 = vmatprep.subr.mxu0 0.0
  %1072 = vmatpush2.msra.mxu0 0.0
  %1073 = vmatprep.subr.mxu0 0.0
  %1074 = vmatpush2.msra.mxu0 0.0
  %1075 = vmatprep.subr.mxu0 0.0
  %1076 = vmatpush2.msra.mxu0 0.0
  %1077 = vmatprep.subr.mxu0 0.0
  %1078 = vmatpush2.msra.mxu0 0.0
  %1079 = vmatprep.subr.mxu0 0.0
  %1080 = vmatpush2.msra.mxu0 0.0
  %1081 = vmatprep.subr.mxu0 0.0
  %1082 = vmatpush2.msra.mxu0 0.0
  %1083 = vmatprep.subr.mxu0 0.0
  %1084 = vmatpush2.msra.mxu0 0.0
  %1085 = vmatprep.subr.mxu0 0.0
  %1086 = vmatpush2.msra.mxu0 0.0
  %1087 = vmatprep.subr.mxu0 0.0
  %1088 = vmatpush2.msra.mxu0 0.0
  %1089 = vmatprep.subr.mxu0 0.0
  %1090 = vmatpush2.msra.mxu0 0.0
  %1091 = vmatprep.subr.mxu0 0.0
  %1092 = vmatpush2.msra.mxu0 0.0
  %1093 = vmatprep.subr.mxu0 0.0
  %1094 = vmatpush2.msra.mxu0 0.0
  %1095 = vmatprep.subr.mxu0 0.0
  %1096 = vmatpush2.msra.mxu0 0.0
  %1097 = vmatprep.subr.mxu0 0.0
  %1098 = vmatpush2.msra.mxu0 0.0
  %1099 = vmatprep.mubr.f32.mxu0 0.0
  %1100 = vmatmul.mubr.f32.gmra.mxu0 %v1012
  %v1101 = vpop.f32.mrf.mxu0
  %v1102 = vadd.f32 0.0, %v1101
  %v1103 = vpop.f32.mrf.mxu0
  %1104 = vmatprep.mubr.f32.mxu0 0.0
  %1105 = vmatmul.mubr.f32.gmra.mxu0 %v1015
  %v1106 = vpop.f32.mrf.mxu0
  %v1107 = vadd.f32 0.0, %v1106
  %v1108 = vpop.f32.mrf.mxu0
  %1109 = vmatprep.mubr.f32.mxu0 0.0
  %1110 = vmatmul.mubr.f32.gmra.mxu0 %v1018
  %v1111 = vpop.f32.mrf.mxu0
  %v1112 = vadd.f32 0.0, %v1111
  %v1113 = vpop.f32.mrf.mxu0
  %1114 = vmatprep.mubr.f32.mxu0 0.0
  %1115 = vmatmul.mubr.f32.gmra.mxu0 %v1021
  %v1116 = vpop.f32.mrf.mxu0
  %v1117 = vadd.f32 0.0, %v1116
  %v1118 = vpop.f32.mrf.mxu0
  %1119 = vmatprep.mubr.f32.mxu0 0.0
  %1120 = vmatmul.mubr.f32.gmra.mxu0 %v1024
  %v1121 = vpop.f32.mrf.mxu0
  %v1122 = vadd.f32 0.0, %v1121
  %v1123 = vpop.f32.mrf.mxu0
  %1124 = vmatprep.mubr.f32.mxu0 0.0
  %1125 = vmatmul.mubr.f32.gmra.mxu0 %v1027
  %v1126 = vpop.f32.mrf.mxu0
  %v1127 = vadd.f32 0.0, %v1126
  %v1128 = vpop.f32.mrf.mxu0
  %1129 = vmatprep.mubr.f32.mxu0 0.0
  %1130 = vmatmul.mubr.f32.gmra.mxu0 %v1030
  %v1131 = vpop.f32.mrf.mxu0
  %v1132 = vadd.f32 0.0, %v1131
  %v1133 = vpop.f32.mrf.mxu0
  %1134 = vmatprep.mubr.f32.mxu0 0.0
  %1135 = vmatmul.mubr.f32.gmra.mxu0 %v1033
  %v1136 = vpop.f32.mrf.mxu0
  %v1137 = vadd.f32 0.0, %v1136
  %v1138 = vpop.f32.mrf.mxu0
  %1139 = vdwg.mxu0
  %v1140 = vadd.f32 %v880, %v1102
  %v1141 = vadd.f32 %v881, %v1107
  %v1142 = vadd.f32 %v882, %v1112
  %v1143 = vadd.f32 %v883, %v1117
  %v1144 = vadd.f32 %v884, %v1122
  %v1145 = vadd.f32 %v885, %v1127
  %v1146 = vadd.f32 %v886, %v1132
  %v1147 = vadd.f32 %v887, %v1137
  %vm1148 = vcmp.gt.f32.partialorder %v1140, 0.0
  %vm1149 = vcmp.gt.f32.partialorder %v1141, 0.0
  %vm1150 = vcmp.gt.f32.partialorder %v1142, 0.0
  %vm1151 = vcmp.gt.f32.partialorder %v1143, 0.0
  %vm1152 = vcmp.gt.f32.partialorder %v1144, 0.0
  %vm1153 = vcmp.gt.f32.partialorder %v1145, 0.0
  %vm1154 = vcmp.gt.f32.partialorder %v1146, 0.0
  %vm1155 = vcmp.gt.f32.partialorder %v1147, 0.0
  %v1156 = vmul.f32 %v1140, 0.01
  %v1157 = vmul.f32 %v1141, 0.01
  %v1158 = vmul.f32 %v1142, 0.01
  %v1159 = vmul.f32 %v1143, 0.01
  %v1160 = vmul.f32 %v1144, 0.01
  %v1161 = vmul.f32 %v1145, 0.01
  %v1162 = vmul.f32 %v1146, 0.01
  %v1163 = vmul.f32 %v1147, 0.01
  %v1164 = vsel %vm1148, %v1140, %v1156
  %v1165 = vsel %vm1149, %v1141, %v1157
  %v1166 = vsel %vm1150, %v1142, %v1158
  %v1167 = vsel %vm1151, %v1143, %v1159
  %v1168 = vsel %vm1152, %v1144, %v1160
  %v1169 = vsel %vm1153, %v1145, %v1161
  %v1170 = vsel %vm1154, %v1146, %v1162
  %v1171 = vsel %vm1155, %v1147, %v1163
  %v1172 = vld [vmem:[%s14] sm:$0x1]
  %v1173 = vld [vmem:[%s2] sm:$0xff]
  %v1174 = vld [vmem:[%s2 + $0x8] sm:$0xff]
  %v1175 = vld [vmem:[%s2 + $0x10] sm:$0xff]
  %v1176 = vld [vmem:[%s2 + $0x18] sm:$0xff]
  %v1178 = vsel %vm224, %v1173, 0
  %v1181 = vsel %vm224, %v1174, 0
  %v1184 = vsel %vm224, %v1175, 0
  %v1187 = vsel %vm224, %v1176, 0
  %1189 = vmatprep.subr.mxu0 0.0
  %1190 = vmatpush1.msra.mxu0 0.0
  %1191 = vmatprep.subr.mxu0 0.0
  %1192 = vmatpush1.msra.mxu0 0.0
  %1193 = vmatprep.subr.mxu0 0.0
  %1194 = vmatpush1.msra.mxu0 0.0
  %1195 = vmatprep.subr.mxu0 0.0
  %1196 = vmatpush1.msra.mxu0 0.0
  %1197 = vmatprep.subr.mxu0 0.0
  %1198 = vmatpush1.msra.mxu0 0.0
  %1199 = vmatprep.subr.mxu0 0.0
  %1200 = vmatpush1.msra.mxu0 0.0
  %1201 = vmatprep.subr.mxu0 0.0
  %1202 = vmatpush1.msra.mxu0 0.0
  %1203 = vmatprep.subr.mxu0 0.0
  %1204 = vmatpush1.msra.mxu0 0.0
  %1205 = vmatprep.subr.mxu0 0.0
  %1206 = vmatpush1.msra.mxu0 %v1171
  %1207 = vmatprep.subr.mxu0 0.0
  %1208 = vmatpush1.msra.mxu0 %v1170
  %1209 = vmatprep.subr.mxu0 0.0
  %1210 = vmatpush1.msra.mxu0 %v1169
  %1211 = vmatprep.subr.mxu0 0.0
  %1212 = vmatpush1.msra.mxu0 %v1168
  %1213 = vmatprep.subr.mxu0 0.0
  %1214 = vmatpush1.msra.mxu0 %v1167
  %1215 = vmatprep.subr.mxu0 0.0
  %1216 = vmatpush1.msra.mxu0 %v1166
  %1217 = vmatprep.subr.mxu0 0.0
  %1218 = vmatpush1.msra.mxu0 %v1165
  %1219 = vmatprep.subr.mxu0 0.0
  %1220 = vmatpush1.msra.mxu0 %v1164
  %1221 = vmatprep.subr.mxu0 0.0
  %1222 = vmatpush2.msra.mxu0 0.0
  %1223 = vmatprep.subr.mxu0 0.0
  %1224 = vmatpush2.msra.mxu0 0.0
  %1225 = vmatprep.subr.mxu0 0.0
  %1226 = vmatpush2.msra.mxu0 0.0
  %1227 = vmatprep.subr.mxu0 0.0
  %1228 = vmatpush2.msra.mxu0 0.0
  %1229 = vmatprep.subr.mxu0 0.0
  %1230 = vmatpush2.msra.mxu0 0.0
  %1231 = vmatprep.subr.mxu0 0.0
  %1232 = vmatpush2.msra.mxu0 0.0
  %1233 = vmatprep.subr.mxu0 0.0
  %1234 = vmatpush2.msra.mxu0 0.0
  %1235 = vmatprep.subr.mxu0 0.0
  %1236 = vmatpush2.msra.mxu0 0.0
  %1237 = vmatprep.subr.mxu0 0.0
  %1238 = vmatpush2.msra.mxu0 0.0
  %1239 = vmatprep.subr.mxu0 0.0
  %1240 = vmatpush2.msra.mxu0 0.0
  %1241 = vmatprep.subr.mxu0 0.0
  %1242 = vmatpush2.msra.mxu0 0.0
  %1243 = vmatprep.subr.mxu0 0.0
  %1244 = vmatpush2.msra.mxu0 0.0
  %1245 = vmatprep.subr.mxu0 0.0
  %1246 = vmatpush2.msra.mxu0 0.0
  %1247 = vmatprep.subr.mxu0 0.0
  %1248 = vmatpush2.msra.mxu0 0.0
  %1249 = vmatprep.subr.mxu0 0.0
  %1250 = vmatpush2.msra.mxu0 0.0
  %1251 = vmatprep.subr.mxu0 0.0
  %1252 = vmatpush2.msra.mxu0 0.0
  %1253 = vmatprep.mubr.f32.mxu0 0.0
  %1254 = vmatmul.mubr.f32.gmra.mxu0 %v1178
  %v1255 = vpop.f32.mrf.mxu0
  %v1256 = vadd.f32 0.0, %v1255
  %v1257 = vpop.f32.mrf.mxu0
  %1258 = vmatprep.mubr.f32.mxu0 0.0
  %1259 = vmatmul.mubr.f32.gmra.mxu0 %v1181
  %v1260 = vpop.f32.mrf.mxu0
  %v1261 = vadd.f32 0.0, %v1260
  %v1262 = vpop.f32.mrf.mxu0
  %1263 = vmatprep.mubr.f32.mxu0 0.0
  %1264 = vmatmul.mubr.f32.gmra.mxu0 %v1184
  %v1265 = vpop.f32.mrf.mxu0
  %v1266 = vadd.f32 0.0, %v1265
  %v1267 = vpop.f32.mrf.mxu0
  %1268 = vmatprep.mubr.f32.mxu0 0.0
  %1269 = vmatmul.mubr.f32.gmra.mxu0 %v1187
  %v1270 = vpop.f32.mrf.mxu0
  %v1271 = vadd.f32 0.0, %v1270
  %v1272 = vpop.f32.mrf.mxu0
  %1273 = vdwg.mxu0
  %v1274 = vld [vmem:[%s8] sm:$0xff]
  %v1275 = vld [vmem:[%s8 + $0x8] sm:$0xff]
  %v1276 = vld [vmem:[%s8 + $0x10] sm:$0xff]
  %v1277 = vld [vmem:[%s8 + $0x18] sm:$0xff]
  %v1278 = vld [vmem:[%s8 + $0x20] sm:$0xff]
  %v1279 = vld [vmem:[%s8 + $0x28] sm:$0xff]
  %v1280 = vld [vmem:[%s8 + $0x30] sm:$0xff]
  %v1281 = vld [vmem:[%s8 + $0x38] sm:$0xff]
  %v1282 = vld [vmem:[%s8 + $0x40] sm:$0xff]
  %v1283 = vld [vmem:[%s8 + $0x48] sm:$0xff]
  %v1284 = vld [vmem:[%s8 + $0x50] sm:$0xff]
  %v1285 = vld [vmem:[%s8 + $0x58] sm:$0xff]
  %v1286 = vld [vmem:[%s8 + $0x60] sm:$0xff]
  %v1287 = vld [vmem:[%s8 + $0x68] sm:$0xff]
  %v1288 = vld [vmem:[%s8 + $0x70] sm:$0xff]
  %v1289 = vld [vmem:[%s8 + $0x78] sm:$0xff]
  %1290 = vmatprep.subr.mxu0 0.0
  %1291 = vmatpush1.msra.mxu0 %v1289
  %1292 = vmatprep.subr.mxu0 0.0
  %1293 = vmatpush1.msra.mxu0 %v1288
  %1294 = vmatprep.subr.mxu0 0.0
  %1295 = vmatpush1.msra.mxu0 %v1287
  %1296 = vmatprep.subr.mxu0 0.0
  %1297 = vmatpush1.msra.mxu0 %v1286
  %1298 = vmatprep.subr.mxu0 0.0
  %1299 = vmatpush1.msra.mxu0 %v1285
  %1300 = vmatprep.subr.mxu0 0.0
  %1301 = vmatpush1.msra.mxu0 %v1284
  %1302 = vmatprep.subr.mxu0 0.0
  %1303 = vmatpush1.msra.mxu0 %v1283
  %1304 = vmatprep.subr.mxu0 0.0
  %1305 = vmatpush1.msra.mxu0 %v1282
  %1306 = vmatprep.subr.mxu0 0.0
  %1307 = vmatpush1.msra.mxu0 %v1281
  %1308 = vmatprep.subr.mxu0 0.0
  %1309 = vmatpush1.msra.mxu0 %v1280
  %1310 = vmatprep.subr.mxu0 0.0
  %1311 = vmatpush1.msra.mxu0 %v1279
  %1312 = vmatprep.subr.mxu0 0.0
  %1313 = vmatpush1.msra.mxu0 %v1278
  %1314 = vmatprep.subr.mxu0 0.0
  %1315 = vmatpush1.msra.mxu0 %v1277
  %1316 = vmatprep.subr.mxu0 0.0
  %1317 = vmatpush1.msra.mxu0 %v1276
  %1318 = vmatprep.subr.mxu0 0.0
  %1319 = vmatpush1.msra.mxu0 %v1275
  %1320 = vmatprep.subr.mxu0 0.0
  %1321 = vmatpush1.msra.mxu0 %v1274
  %1322 = vmatprep.subr.mxu0 0.0
  %1323 = vmatpush2.msra.mxu0 0.0
  %1324 = vmatprep.subr.mxu0 0.0
  %1325 = vmatpush2.msra.mxu0 0.0
  %1326 = vmatprep.subr.mxu0 0.0
  %1327 = vmatpush2.msra.mxu0 0.0
  %1328 = vmatprep.subr.mxu0 0.0
  %1329 = vmatpush2.msra.mxu0 0.0
  %1330 = vmatprep.subr.mxu0 0.0
  %1331 = vmatpush2.msra.mxu0 0.0
  %1332 = vmatprep.subr.mxu0 0.0
  %1333 = vmatpush2.msra.mxu0 0.0
  %1334 = vmatprep.subr.mxu0 0.0
  %1335 = vmatpush2.msra.mxu0 0.0
  %1336 = vmatprep.subr.mxu0 0.0
  %1337 = vmatpush2.msra.mxu0 0.0
  %1338 = vmatprep.subr.mxu0 0.0
  %1339 = vmatpush2.msra.mxu0 0.0
  %1340 = vmatprep.subr.mxu0 0.0
  %1341 = vmatpush2.msra.mxu0 0.0
  %1342 = vmatprep.subr.mxu0 0.0
  %1343 = vmatpush2.msra.mxu0 0.0
  %1344 = vmatprep.subr.mxu0 0.0
  %1345 = vmatpush2.msra.mxu0 0.0
  %1346 = vmatprep.subr.mxu0 0.0
  %1347 = vmatpush2.msra.mxu0 0.0
  %1348 = vmatprep.subr.mxu0 0.0
  %1349 = vmatpush2.msra.mxu0 0.0
  %1350 = vmatprep.subr.mxu0 0.0
  %1351 = vmatpush2.msra.mxu0 0.0
  %1352 = vmatprep.subr.mxu0 0.0
  %1353 = vmatpush2.msra.mxu0 0.0
  %1354 = vmatprep.mubr.f32.mxu0 0.0
  %1355 = vmatmul.mubr.f32.gmra.mxu0 %v1256
  %v1356 = vpop.f32.mrf.mxu0
  %v1357 = vadd.f32 0.0, %v1356
  %v1358 = vpop.f32.mrf.mxu0
  %1359 = vmatprep.mubr.f32.mxu0 0.0
  %1360 = vmatmul.mubr.f32.gmra.mxu0 %v1261
  %v1361 = vpop.f32.mrf.mxu0
  %v1362 = vadd.f32 0.0, %v1361
  %v1363 = vpop.f32.mrf.mxu0
  %1364 = vmatprep.mubr.f32.mxu0 0.0
  %1365 = vmatmul.mubr.f32.gmra.mxu0 %v1266
  %v1366 = vpop.f32.mrf.mxu0
  %v1367 = vadd.f32 0.0, %v1366
  %v1368 = vpop.f32.mrf.mxu0
  %1369 = vmatprep.mubr.f32.mxu0 0.0
  %1370 = vmatmul.mubr.f32.gmra.mxu0 %v1271
  %v1371 = vpop.f32.mrf.mxu0
  %v1372 = vadd.f32 0.0, %v1371
  %v1373 = vpop.f32.mrf.mxu0
  %1374 = vdwg.mxu0
  %v1376 = vlaneseq
  %v1377 = vshrl.u32 %v1376, 7
  %v1378 = vsub.s32 0, %v1377
  %v1379 = vrot.slane %v1172, %v1378
  %v1381 = vadd.f32 %v1379, %v1357
  %v1382 = vadd.f32 %v1379, %v1362
  %v1383 = vadd.f32 %v1379, %v1367
  %v1384 = vadd.f32 %v1379, %v1372
  %s1385 = scalar_lea.vmem %s2, 32
  %v1386 = vld [vmem:[%s1385] sm:$0xff]
  %v1387 = vld [vmem:[%s1385 + $0x8] sm:$0xff]
  %v1388 = vld [vmem:[%s1385 + $0x10] sm:$0xff]
  %v1389 = vld [vmem:[%s1385 + $0x18] sm:$0xff]
  %v1391 = vsel %vm224, %v1386, 0
  %v1394 = vsel %vm224, %v1387, 0
  %v1397 = vsel %vm224, %v1388, 0
  %v1400 = vsel %vm224, %v1389, 0
  %1402 = vmatprep.subr.mxu0 0.0
  %1403 = vmatpush1.msra.mxu0 0.0
  %1404 = vmatprep.subr.mxu0 0.0
  %1405 = vmatpush1.msra.mxu0 0.0
  %1406 = vmatprep.subr.mxu0 0.0
  %1407 = vmatpush1.msra.mxu0 0.0
  %1408 = vmatprep.subr.mxu0 0.0
  %1409 = vmatpush1.msra.mxu0 0.0
  %1410 = vmatprep.subr.mxu0 0.0
  %1411 = vmatpush1.msra.mxu0 0.0
  %1412 = vmatprep.subr.mxu0 0.0
  %1413 = vmatpush1.msra.mxu0 0.0
  %1414 = vmatprep.subr.mxu0 0.0
  %1415 = vmatpush1.msra.mxu0 0.0
  %1416 = vmatprep.subr.mxu0 0.0
  %1417 = vmatpush1.msra.mxu0 0.0
  %1418 = vmatprep.subr.mxu0 0.0
  %1419 = vmatpush1.msra.mxu0 %v1171
  %1420 = vmatprep.subr.mxu0 0.0
  %1421 = vmatpush1.msra.mxu0 %v1170
  %1422 = vmatprep.subr.mxu0 0.0
  %1423 = vmatpush1.msra.mxu0 %v1169
  %1424 = vmatprep.subr.mxu0 0.0
  %1425 = vmatpush1.msra.mxu0 %v1168
  %1426 = vmatprep.subr.mxu0 0.0
  %1427 = vmatpush1.msra.mxu0 %v1167
  %1428 = vmatprep.subr.mxu0 0.0
  %1429 = vmatpush1.msra.mxu0 %v1166
  %1430 = vmatprep.subr.mxu0 0.0
  %1431 = vmatpush1.msra.mxu0 %v1165
  %1432 = vmatprep.subr.mxu0 0.0
  %1433 = vmatpush1.msra.mxu0 %v1164
  %1434 = vmatprep.subr.mxu0 0.0
  %1435 = vmatpush2.msra.mxu0 0.0
  %1436 = vmatprep.subr.mxu0 0.0
  %1437 = vmatpush2.msra.mxu0 0.0
  %1438 = vmatprep.subr.mxu0 0.0
  %1439 = vmatpush2.msra.mxu0 0.0
  %1440 = vmatprep.subr.mxu0 0.0
  %1441 = vmatpush2.msra.mxu0 0.0
  %1442 = vmatprep.subr.mxu0 0.0
  %1443 = vmatpush2.msra.mxu0 0.0
  %1444 = vmatprep.subr.mxu0 0.0
  %1445 = vmatpush2.msra.mxu0 0.0
  %1446 = vmatprep.subr.mxu0 0.0
  %1447 = vmatpush2.msra.mxu0 0.0
  %1448 = vmatprep.subr.mxu0 0.0
  %1449 = vmatpush2.msra.mxu0 0.0
  %1450 = vmatprep.subr.mxu0 0.0
  %1451 = vmatpush2.msra.mxu0 0.0
  %1452 = vmatprep.subr.mxu0 0.0
  %1453 = vmatpush2.msra.mxu0 0.0
  %1454 = vmatprep.subr.mxu0 0.0
  %1455 = vmatpush2.msra.mxu0 0.0
  %1456 = vmatprep.subr.mxu0 0.0
  %1457 = vmatpush2.msra.mxu0 0.0
  %1458 = vmatprep.subr.mxu0 0.0
  %1459 = vmatpush2.msra.mxu0 0.0
  %1460 = vmatprep.subr.mxu0 0.0
  %1461 = vmatpush2.msra.mxu0 0.0
  %1462 = vmatprep.subr.mxu0 0.0
  %1463 = vmatpush2.msra.mxu0 0.0
  %1464 = vmatprep.subr.mxu0 0.0
  %1465 = vmatpush2.msra.mxu0 0.0
  %1466 = vmatprep.mubr.f32.mxu0 0.0
  %1467 = vmatmul.mubr.f32.gmra.mxu0 %v1391
  %v1468 = vpop.f32.mrf.mxu0
  %v1469 = vadd.f32 0.0, %v1468
  %v1470 = vpop.f32.mrf.mxu0
  %1471 = vmatprep.mubr.f32.mxu0 0.0
  %1472 = vmatmul.mubr.f32.gmra.mxu0 %v1394
  %v1473 = vpop.f32.mrf.mxu0
  %v1474 = vadd.f32 0.0, %v1473
  %v1475 = vpop.f32.mrf.mxu0
  %1476 = vmatprep.mubr.f32.mxu0 0.0
  %1477 = vmatmul.mubr.f32.gmra.mxu0 %v1397
  %v1478 = vpop.f32.mrf.mxu0
  %v1479 = vadd.f32 0.0, %v1478
  %v1480 = vpop.f32.mrf.mxu0
  %1481 = vmatprep.mubr.f32.mxu0 0.0
  %1482 = vmatmul.mubr.f32.gmra.mxu0 %v1400
  %v1483 = vpop.f32.mrf.mxu0
  %v1484 = vadd.f32 0.0, %v1483
  %v1485 = vpop.f32.mrf.mxu0
  %1486 = vdwg.mxu0
  %s1487 = scalar_lea.vmem %s8, 128
  %v1488 = vld [vmem:[%s1487] sm:$0xff]
  %v1489 = vld [vmem:[%s1487 + $0x8] sm:$0xff]
  %v1490 = vld [vmem:[%s1487 + $0x10] sm:$0xff]
  %v1491 = vld [vmem:[%s1487 + $0x18] sm:$0xff]
  %v1492 = vld [vmem:[%s1487 + $0x20] sm:$0xff]
  %v1493 = vld [vmem:[%s1487 + $0x28] sm:$0xff]
  %v1494 = vld [vmem:[%s1487 + $0x30] sm:$0xff]
  %v1495 = vld [vmem:[%s1487 + $0x38] sm:$0xff]
  %v1496 = vld [vmem:[%s1487 + $0x40] sm:$0xff]
  %v1497 = vld [vmem:[%s1487 + $0x48] sm:$0xff]
  %v1498 = vld [vmem:[%s1487 + $0x50] sm:$0xff]
  %v1499 = vld [vmem:[%s1487 + $0x58] sm:$0xff]
  %v1500 = vld [vmem:[%s1487 + $0x60] sm:$0xff]
  %v1501 = vld [vmem:[%s1487 + $0x68] sm:$0xff]
  %v1502 = vld [vmem:[%s1487 + $0x70] sm:$0xff]
  %v1503 = vld [vmem:[%s1487 + $0x78] sm:$0xff]
  %1504 = vmatprep.subr.mxu0 0.0
  %1505 = vmatpush1.msra.mxu0 %v1503
  %1506 = vmatprep.subr.mxu0 0.0
  %1507 = vmatpush1.msra.mxu0 %v1502
  %1508 = vmatprep.subr.mxu0 0.0
  %1509 = vmatpush1.msra.mxu0 %v1501
  %1510 = vmatprep.subr.mxu0 0.0
  %1511 = vmatpush1.msra.mxu0 %v1500
  %1512 = vmatprep.subr.mxu0 0.0
  %1513 = vmatpush1.msra.mxu0 %v1499
  %1514 = vmatprep.subr.mxu0 0.0
  %1515 = vmatpush1.msra.mxu0 %v1498
  %1516 = vmatprep.subr.mxu0 0.0
  %1517 = vmatpush1.msra.mxu0 %v1497
  %1518 = vmatprep.subr.mxu0 0.0
  %1519 = vmatpush1.msra.mxu0 %v1496
  %1520 = vmatprep.subr.mxu0 0.0
  %1521 = vmatpush1.msra.mxu0 %v1495
  %1522 = vmatprep.subr.mxu0 0.0
  %1523 = vmatpush1.msra.mxu0 %v1494
  %1524 = vmatprep.subr.mxu0 0.0
  %1525 = vmatpush1.msra.mxu0 %v1493
  %1526 = vmatprep.subr.mxu0 0.0
  %1527 = vmatpush1.msra.mxu0 %v1492
  %1528 = vmatprep.subr.mxu0 0.0
  %1529 = vmatpush1.msra.mxu0 %v1491
  %1530 = vmatprep.subr.mxu0 0.0
  %1531 = vmatpush1.msra.mxu0 %v1490
  %1532 = vmatprep.subr.mxu0 0.0
  %1533 = vmatpush1.msra.mxu0 %v1489
  %1534 = vmatprep.subr.mxu0 0.0
  %1535 = vmatpush1.msra.mxu0 %v1488
  %1536 = vmatprep.subr.mxu0 0.0
  %1537 = vmatpush2.msra.mxu0 0.0
  %1538 = vmatprep.subr.mxu0 0.0
  %1539 = vmatpush2.msra.mxu0 0.0
  %1540 = vmatprep.subr.mxu0 0.0
  %1541 = vmatpush2.msra.mxu0 0.0
  %1542 = vmatprep.subr.mxu0 0.0
  %1543 = vmatpush2.msra.mxu0 0.0
  %1544 = vmatprep.subr.mxu0 0.0
  %1545 = vmatpush2.msra.mxu0 0.0
  %1546 = vmatprep.subr.mxu0 0.0
  %1547 = vmatpush2.msra.mxu0 0.0
  %1548 = vmatprep.subr.mxu0 0.0
  %1549 = vmatpush2.msra.mxu0 0.0
  %1550 = vmatprep.subr.mxu0 0.0
  %1551 = vmatpush2.msra.mxu0 0.0
  %1552 = vmatprep.subr.mxu0 0.0
  %1553 = vmatpush2.msra.mxu0 0.0
  %1554 = vmatprep.subr.mxu0 0.0
  %1555 = vmatpush2.msra.mxu0 0.0
  %1556 = vmatprep.subr.mxu0 0.0
  %1557 = vmatpush2.msra.mxu0 0.0
  %1558 = vmatprep.subr.mxu0 0.0
  %1559 = vmatpush2.msra.mxu0 0.0
  %1560 = vmatprep.subr.mxu0 0.0
  %1561 = vmatpush2.msra.mxu0 0.0
  %1562 = vmatprep.subr.mxu0 0.0
  %1563 = vmatpush2.msra.mxu0 0.0
  %1564 = vmatprep.subr.mxu0 0.0
  %1565 = vmatpush2.msra.mxu0 0.0
  %1566 = vmatprep.subr.mxu0 0.0
  %1567 = vmatpush2.msra.mxu0 0.0
  %1568 = vmatprep.mubr.f32.mxu0 0.0
  %1569 = vmatmul.mubr.f32.gmra.mxu0 %v1469
  %v1570 = vpop.f32.mrf.mxu0
  %v1571 = vadd.f32 0.0, %v1570
  %v1572 = vpop.f32.mrf.mxu0
  %1573 = vmatprep.mubr.f32.mxu0 0.0
  %1574 = vmatmul.mubr.f32.gmra.mxu0 %v1474
  %v1575 = vpop.f32.mrf.mxu0
  %v1576 = vadd.f32 0.0, %v1575
  %v1577 = vpop.f32.mrf.mxu0
  %1578 = vmatprep.mubr.f32.mxu0 0.0
  %1579 = vmatmul.mubr.f32.gmra.mxu0 %v1479
  %v1580 = vpop.f32.mrf.mxu0
  %v1581 = vadd.f32 0.0, %v1580
  %v1582 = vpop.f32.mrf.mxu0
  %1583 = vmatprep.mubr.f32.mxu0 0.0
  %1584 = vmatmul.mubr.f32.gmra.mxu0 %v1484
  %v1585 = vpop.f32.mrf.mxu0
  %v1586 = vadd.f32 0.0, %v1585
  %v1587 = vpop.f32.mrf.mxu0
  %1588 = vdwg.mxu0
  %v1589 = vadd.f32 %v1381, %v1571
  %v1590 = vadd.f32 %v1382, %v1576
  %v1591 = vadd.f32 %v1383, %v1581
  %v1592 = vadd.f32 %v1384, %v1586
  %s1593 = scalar_lea.vmem %s2, 64
  %v1594 = vld [vmem:[%s1593] sm:$0xff]
  %v1595 = vld [vmem:[%s1593 + $0x8] sm:$0xff]
  %v1596 = vld [vmem:[%s1593 + $0x10] sm:$0xff]
  %v1597 = vld [vmem:[%s1593 + $0x18] sm:$0xff]
  %v1599 = vsel %vm224, %v1594, 0
  %v1602 = vsel %vm224, %v1595, 0
  %v1605 = vsel %vm224, %v1596, 0
  %v1608 = vsel %vm224, %v1597, 0
  %1610 = vmatprep.subr.mxu0 0.0
  %1611 = vmatpush1.msra.mxu0 0.0
  %1612 = vmatprep.subr.mxu0 0.0
  %1613 = vmatpush1.msra.mxu0 0.0
  %1614 = vmatprep.subr.mxu0 0.0
  %1615 = vmatpush1.msra.mxu0 0.0
  %1616 = vmatprep.subr.mxu0 0.0
  %1617 = vmatpush1.msra.mxu0 0.0
  %1618 = vmatprep.subr.mxu0 0.0
  %1619 = vmatpush1.msra.mxu0 0.0
  %1620 = vmatprep.subr.mxu0 0.0
  %1621 = vmatpush1.msra.mxu0 0.0
  %1622 = vmatprep.subr.mxu0 0.0
  %1623 = vmatpush1.msra.mxu0 0.0
  %1624 = vmatprep.subr.mxu0 0.0
  %1625 = vmatpush1.msra.mxu0 0.0
  %1626 = vmatprep.subr.mxu0 0.0
  %1627 = vmatpush1.msra.mxu0 %v1171
  %1628 = vmatprep.subr.mxu0 0.0
  %1629 = vmatpush1.msra.mxu0 %v1170
  %1630 = vmatprep.subr.mxu0 0.0
  %1631 = vmatpush1.msra.mxu0 %v1169
  %1632 = vmatprep.subr.mxu0 0.0
  %1633 = vmatpush1.msra.mxu0 %v1168
  %1634 = vmatprep.subr.mxu0 0.0
  %1635 = vmatpush1.msra.mxu0 %v1167
  %1636 = vmatprep.subr.mxu0 0.0
  %1637 = vmatpush1.msra.mxu0 %v1166
  %1638 = vmatprep.subr.mxu0 0.0
  %1639 = vmatpush1.msra.mxu0 %v1165
  %1640 = vmatprep.subr.mxu0 0.0
  %1641 = vmatpush1.msra.mxu0 %v1164
  %1642 = vmatprep.subr.mxu0 0.0
  %1643 = vmatpush2.msra.mxu0 0.0
  %1644 = vmatprep.subr.mxu0 0.0
  %1645 = vmatpush2.msra.mxu0 0.0
  %1646 = vmatprep.subr.mxu0 0.0
  %1647 = vmatpush2.msra.mxu0 0.0
  %1648 = vmatprep.subr.mxu0 0.0
  %1649 = vmatpush2.msra.mxu0 0.0
  %1650 = vmatprep.subr.mxu0 0.0
  %1651 = vmatpush2.msra.mxu0 0.0
  %1652 = vmatprep.subr.mxu0 0.0
  %1653 = vmatpush2.msra.mxu0 0.0
  %1654 = vmatprep.subr.mxu0 0.0
  %1655 = vmatpush2.msra.mxu0 0.0
  %1656 = vmatprep.subr.mxu0 0.0
  %1657 = vmatpush2.msra.mxu0 0.0
  %1658 = vmatprep.subr.mxu0 0.0
  %1659 = vmatpush2.msra.mxu0 0.0
  %1660 = vmatprep.subr.mxu0 0.0
  %1661 = vmatpush2.msra.mxu0 0.0
  %1662 = vmatprep.subr.mxu0 0.0
  %1663 = vmatpush2.msra.mxu0 0.0
  %1664 = vmatprep.subr.mxu0 0.0
  %1665 = vmatpush2.msra.mxu0 0.0
  %1666 = vmatprep.subr.mxu0 0.0
  %1667 = vmatpush2.msra.mxu0 0.0
  %1668 = vmatprep.subr.mxu0 0.0
  %1669 = vmatpush2.msra.mxu0 0.0
  %1670 = vmatprep.subr.mxu0 0.0
  %1671 = vmatpush2.msra.mxu0 0.0
  %1672 = vmatprep.subr.mxu0 0.0
  %1673 = vmatpush2.msra.mxu0 0.0
  %1674 = vmatprep.mubr.f32.mxu0 0.0
  %1675 = vmatmul.mubr.f32.gmra.mxu0 %v1599
  %v1676 = vpop.f32.mrf.mxu0
  %v1677 = vadd.f32 0.0, %v1676
  %v1678 = vpop.f32.mrf.mxu0
  %1679 = vmatprep.mubr.f32.mxu0 0.0
  %1680 = vmatmul.mubr.f32.gmra.mxu0 %v1602
  %v1681 = vpop.f32.mrf.mxu0
  %v1682 = vadd.f32 0.0, %v1681
  %v1683 = vpop.f32.mrf.mxu0
  %1684 = vmatprep.mubr.f32.mxu0 0.0
  %1685 = vmatmul.mubr.f32.gmra.mxu0 %v1605
  %v1686 = vpop.f32.mrf.mxu0
  %v1687 = vadd.f32 0.0, %v1686
  %v1688 = vpop.f32.mrf.mxu0
  %1689 = vmatprep.mubr.f32.mxu0 0.0
  %1690 = vmatmul.mubr.f32.gmra.mxu0 %v1608
  %v1691 = vpop.f32.mrf.mxu0
  %v1692 = vadd.f32 0.0, %v1691
  %v1693 = vpop.f32.mrf.mxu0
  %1694 = vdwg.mxu0
  %s1695 = scalar_lea.vmem %s8, 256
  %v1696 = vld [vmem:[%s1695] sm:$0xff]
  %v1697 = vld [vmem:[%s1695 + $0x8] sm:$0xff]
  %v1698 = vld [vmem:[%s1695 + $0x10] sm:$0xff]
  %v1699 = vld [vmem:[%s1695 + $0x18] sm:$0xff]
  %v1700 = vld [vmem:[%s1695 + $0x20] sm:$0xff]
  %v1701 = vld [vmem:[%s1695 + $0x28] sm:$0xff]
  %v1702 = vld [vmem:[%s1695 + $0x30] sm:$0xff]
  %v1703 = vld [vmem:[%s1695 + $0x38] sm:$0xff]
  %v1704 = vld [vmem:[%s1695 + $0x40] sm:$0xff]
  %v1705 = vld [vmem:[%s1695 + $0x48] sm:$0xff]
  %v1706 = vld [vmem:[%s1695 + $0x50] sm:$0xff]
  %v1707 = vld [vmem:[%s1695 + $0x58] sm:$0xff]
  %v1708 = vld [vmem:[%s1695 + $0x60] sm:$0xff]
  %v1709 = vld [vmem:[%s1695 + $0x68] sm:$0xff]
  %v1710 = vld [vmem:[%s1695 + $0x70] sm:$0xff]
  %v1711 = vld [vmem:[%s1695 + $0x78] sm:$0xff]
  %1712 = vmatprep.subr.mxu0 0.0
  %1713 = vmatpush1.msra.mxu0 %v1711
  %1714 = vmatprep.subr.mxu0 0.0
  %1715 = vmatpush1.msra.mxu0 %v1710
  %1716 = vmatprep.subr.mxu0 0.0
  %1717 = vmatpush1.msra.mxu0 %v1709
  %1718 = vmatprep.subr.mxu0 0.0
  %1719 = vmatpush1.msra.mxu0 %v1708
  %1720 = vmatprep.subr.mxu0 0.0
  %1721 = vmatpush1.msra.mxu0 %v1707
  %1722 = vmatprep.subr.mxu0 0.0
  %1723 = vmatpush1.msra.mxu0 %v1706
  %1724 = vmatprep.subr.mxu0 0.0
  %1725 = vmatpush1.msra.mxu0 %v1705
  %1726 = vmatprep.subr.mxu0 0.0
  %1727 = vmatpush1.msra.mxu0 %v1704
  %1728 = vmatprep.subr.mxu0 0.0
  %1729 = vmatpush1.msra.mxu0 %v1703
  %1730 = vmatprep.subr.mxu0 0.0
  %1731 = vmatpush1.msra.mxu0 %v1702
  %1732 = vmatprep.subr.mxu0 0.0
  %1733 = vmatpush1.msra.mxu0 %v1701
  %1734 = vmatprep.subr.mxu0 0.0
  %1735 = vmatpush1.msra.mxu0 %v1700
  %1736 = vmatprep.subr.mxu0 0.0
  %1737 = vmatpush1.msra.mxu0 %v1699
  %1738 = vmatprep.subr.mxu0 0.0
  %1739 = vmatpush1.msra.mxu0 %v1698
  %1740 = vmatprep.subr.mxu0 0.0
  %1741 = vmatpush1.msra.mxu0 %v1697
  %1742 = vmatprep.subr.mxu0 0.0
  %1743 = vmatpush1.msra.mxu0 %v1696
  %1744 = vmatprep.subr.mxu0 0.0
  %1745 = vmatpush2.msra.mxu0 0.0
  %1746 = vmatprep.subr.mxu0 0.0
  %1747 = vmatpush2.msra.mxu0 0.0
  %1748 = vmatprep.subr.mxu0 0.0
  %1749 = vmatpush2.msra.mxu0 0.0
  %1750 = vmatprep.subr.mxu0 0.0
  %1751 = vmatpush2.msra.mxu0 0.0
  %1752 = vmatprep.subr.mxu0 0.0
  %1753 = vmatpush2.msra.mxu0 0.0
  %1754 = vmatprep.subr.mxu0 0.0
  %1755 = vmatpush2.msra.mxu0 0.0
  %1756 = vmatprep.subr.mxu0 0.0
  %1757 = vmatpush2.msra.mxu0 0.0
  %1758 = vmatprep.subr.mxu0 0.0
  %1759 = vmatpush2.msra.mxu0 0.0
  %1760 = vmatprep.subr.mxu0 0.0
  %1761 = vmatpush2.msra.mxu0 0.0
  %1762 = vmatprep.subr.mxu0 0.0
  %1763 = vmatpush2.msra.mxu0 0.0
  %1764 = vmatprep.subr.mxu0 0.0
  %1765 = vmatpush2.msra.mxu0 0.0
  %1766 = vmatprep.subr.mxu0 0.0
  %1767 = vmatpush2.msra.mxu0 0.0
  %1768 = vmatprep.subr.mxu0 0.0
  %1769 = vmatpush2.msra.mxu0 0.0
  %1770 = vmatprep.subr.mxu0 0.0
  %1771 = vmatpush2.msra.mxu0 0.0
  %1772 = vmatprep.subr.mxu0 0.0
  %1773 = vmatpush2.msra.mxu0 0.0
  %1774 = vmatprep.subr.mxu0 0.0
  %1775 = vmatpush2.msra.mxu0 0.0
  %1776 = vmatprep.mubr.f32.mxu0 0.0
  %1777 = vmatmul.mubr.f32.gmra.mxu0 %v1677
  %v1778 = vpop.f32.mrf.mxu0
  %v1779 = vadd.f32 0.0, %v1778
  %v1780 = vpop.f32.mrf.mxu0
  %1781 = vmatprep.mubr.f32.mxu0 0.0
  %1782 = vmatmul.mubr.f32.gmra.mxu0 %v1682
  %v1783 = vpop.f32.mrf.mxu0
  %v1784 = vadd.f32 0.0, %v1783
  %v1785 = vpop.f32.mrf.mxu0
  %1786 = vmatprep.mubr.f32.mxu0 0.0
  %1787 = vmatmul.mubr.f32.gmra.mxu0 %v1687
  %v1788 = vpop.f32.mrf.mxu0
  %v1789 = vadd.f32 0.0, %v1788
  %v1790 = vpop.f32.mrf.mxu0
  %1791 = vmatprep.mubr.f32.mxu0 0.0
  %1792 = vmatmul.mubr.f32.gmra.mxu0 %v1692
  %v1793 = vpop.f32.mrf.mxu0
  %v1794 = vadd.f32 0.0, %v1793
  %v1795 = vpop.f32.mrf.mxu0
  %1796 = vdwg.mxu0
  %v1797 = vadd.f32 %v1589, %v1779
  %v1798 = vadd.f32 %v1590, %v1784
  %v1799 = vadd.f32 %v1591, %v1789
  %v1800 = vadd.f32 %v1592, %v1794
  %s1801 = scalar_lea.vmem %s2, 96
  %v1802 = vld [vmem:[%s1801] sm:$0xff]
  %v1803 = vld [vmem:[%s1801 + $0x8] sm:$0xff]
  %v1804 = vld [vmem:[%s1801 + $0x10] sm:$0xff]
  %v1805 = vld [vmem:[%s1801 + $0x18] sm:$0xff]
  %v1807 = vsel %vm224, %v1802, 0
  %v1810 = vsel %vm224, %v1803, 0
  %v1813 = vsel %vm224, %v1804, 0
  %v1816 = vsel %vm224, %v1805, 0
  %1818 = vmatprep.subr.mxu0 0.0
  %1819 = vmatpush1.msra.mxu0 0.0
  %1820 = vmatprep.subr.mxu0 0.0
  %1821 = vmatpush1.msra.mxu0 0.0
  %1822 = vmatprep.subr.mxu0 0.0
  %1823 = vmatpush1.msra.mxu0 0.0
  %1824 = vmatprep.subr.mxu0 0.0
  %1825 = vmatpush1.msra.mxu0 0.0
  %1826 = vmatprep.subr.mxu0 0.0
  %1827 = vmatpush1.msra.mxu0 0.0
  %1828 = vmatprep.subr.mxu0 0.0
  %1829 = vmatpush1.msra.mxu0 0.0
  %1830 = vmatprep.subr.mxu0 0.0
  %1831 = vmatpush1.msra.mxu0 0.0
  %1832 = vmatprep.subr.mxu0 0.0
  %1833 = vmatpush1.msra.mxu0 0.0
  %1834 = vmatprep.subr.mxu0 0.0
  %1835 = vmatpush1.msra.mxu0 %v1171
  %1836 = vmatprep.subr.mxu0 0.0
  %1837 = vmatpush1.msra.mxu0 %v1170
  %1838 = vmatprep.subr.mxu0 0.0
  %1839 = vmatpush1.msra.mxu0 %v1169
  %1840 = vmatprep.subr.mxu0 0.0
  %1841 = vmatpush1.msra.mxu0 %v1168
  %1842 = vmatprep.subr.mxu0 0.0
  %1843 = vmatpush1.msra.mxu0 %v1167
  %1844 = vmatprep.subr.mxu0 0.0
  %1845 = vmatpush1.msra.mxu0 %v1166
  %1846 = vmatprep.subr.mxu0 0.0
  %1847 = vmatpush1.msra.mxu0 %v1165
  %1848 = vmatprep.subr.mxu0 0.0
  %1849 = vmatpush1.msra.mxu0 %v1164
  %1850 = vmatprep.subr.mxu0 0.0
  %1851 = vmatpush2.msra.mxu0 0.0
  %1852 = vmatprep.subr.mxu0 0.0
  %1853 = vmatpush2.msra.mxu0 0.0
  %1854 = vmatprep.subr.mxu0 0.0
  %1855 = vmatpush2.msra.mxu0 0.0
  %1856 = vmatprep.subr.mxu0 0.0
  %1857 = vmatpush2.msra.mxu0 0.0
  %1858 = vmatprep.subr.mxu0 0.0
  %1859 = vmatpush2.msra.mxu0 0.0
  %1860 = vmatprep.subr.mxu0 0.0
  %1861 = vmatpush2.msra.mxu0 0.0
  %1862 = vmatprep.subr.mxu0 0.0
  %1863 = vmatpush2.msra.mxu0 0.0
  %1864 = vmatprep.subr.mxu0 0.0
  %1865 = vmatpush2.msra.mxu0 0.0
  %1866 = vmatprep.subr.mxu0 0.0
  %1867 = vmatpush2.msra.mxu0 0.0
  %1868 = vmatprep.subr.mxu0 0.0
  %1869 = vmatpush2.msra.mxu0 0.0
  %1870 = vmatprep.subr.mxu0 0.0
  %1871 = vmatpush2.msra.mxu0 0.0
  %1872 = vmatprep.subr.mxu0 0.0
  %1873 = vmatpush2.msra.mxu0 0.0
  %1874 = vmatprep.subr.mxu0 0.0
  %1875 = vmatpush2.msra.mxu0 0.0
  %1876 = vmatprep.subr.mxu0 0.0
  %1877 = vmatpush2.msra.mxu0 0.0
  %1878 = vmatprep.subr.mxu0 0.0
  %1879 = vmatpush2.msra.mxu0 0.0
  %1880 = vmatprep.subr.mxu0 0.0
  %1881 = vmatpush2.msra.mxu0 0.0
  %1882 = vmatprep.mubr.f32.mxu0 0.0
  %1883 = vmatmul.mubr.f32.gmra.mxu0 %v1807
  %v1884 = vpop.f32.mrf.mxu0
  %v1885 = vadd.f32 0.0, %v1884
  %v1886 = vpop.f32.mrf.mxu0
  %1887 = vmatprep.mubr.f32.mxu0 0.0
  %1888 = vmatmul.mubr.f32.gmra.mxu0 %v1810
  %v1889 = vpop.f32.mrf.mxu0
  %v1890 = vadd.f32 0.0, %v1889
  %v1891 = vpop.f32.mrf.mxu0
  %1892 = vmatprep.mubr.f32.mxu0 0.0
  %1893 = vmatmul.mubr.f32.gmra.mxu0 %v1813
  %v1894 = vpop.f32.mrf.mxu0
  %v1895 = vadd.f32 0.0, %v1894
  %v1896 = vpop.f32.mrf.mxu0
  %1897 = vmatprep.mubr.f32.mxu0 0.0
  %1898 = vmatmul.mubr.f32.gmra.mxu0 %v1816
  %v1899 = vpop.f32.mrf.mxu0
  %v1900 = vadd.f32 0.0, %v1899
  %v1901 = vpop.f32.mrf.mxu0
  %1902 = vdwg.mxu0
  %s1903 = scalar_lea.vmem %s8, 384
  %v1904 = vld [vmem:[%s1903] sm:$0xff]
  %v1905 = vld [vmem:[%s1903 + $0x8] sm:$0xff]
  %v1906 = vld [vmem:[%s1903 + $0x10] sm:$0xff]
  %v1907 = vld [vmem:[%s1903 + $0x18] sm:$0xff]
  %v1908 = vld [vmem:[%s1903 + $0x20] sm:$0xff]
  %v1909 = vld [vmem:[%s1903 + $0x28] sm:$0xff]
  %v1910 = vld [vmem:[%s1903 + $0x30] sm:$0xff]
  %v1911 = vld [vmem:[%s1903 + $0x38] sm:$0xff]
  %v1912 = vld [vmem:[%s1903 + $0x40] sm:$0xff]
  %v1913 = vld [vmem:[%s1903 + $0x48] sm:$0xff]
  %v1914 = vld [vmem:[%s1903 + $0x50] sm:$0xff]
  %v1915 = vld [vmem:[%s1903 + $0x58] sm:$0xff]
  %v1916 = vld [vmem:[%s1903 + $0x60] sm:$0xff]
  %v1917 = vld [vmem:[%s1903 + $0x68] sm:$0xff]
  %v1918 = vld [vmem:[%s1903 + $0x70] sm:$0xff]
  %v1919 = vld [vmem:[%s1903 + $0x78] sm:$0xff]
  %1920 = vmatprep.subr.mxu0 0.0
  %1921 = vmatpush1.msra.mxu0 %v1919
  %1922 = vmatprep.subr.mxu0 0.0
  %1923 = vmatpush1.msra.mxu0 %v1918
  %1924 = vmatprep.subr.mxu0 0.0
  %1925 = vmatpush1.msra.mxu0 %v1917
  %1926 = vmatprep.subr.mxu0 0.0
  %1927 = vmatpush1.msra.mxu0 %v1916
  %1928 = vmatprep.subr.mxu0 0.0
  %1929 = vmatpush1.msra.mxu0 %v1915
  %1930 = vmatprep.subr.mxu0 0.0
  %1931 = vmatpush1.msra.mxu0 %v1914
  %1932 = vmatprep.subr.mxu0 0.0
  %1933 = vmatpush1.msra.mxu0 %v1913
  %1934 = vmatprep.subr.mxu0 0.0
  %1935 = vmatpush1.msra.mxu0 %v1912
  %1936 = vmatprep.subr.mxu0 0.0
  %1937 = vmatpush1.msra.mxu0 %v1911
  %1938 = vmatprep.subr.mxu0 0.0
  %1939 = vmatpush1.msra.mxu0 %v1910
  %1940 = vmatprep.subr.mxu0 0.0
  %1941 = vmatpush1.msra.mxu0 %v1909
  %1942 = vmatprep.subr.mxu0 0.0
  %1943 = vmatpush1.msra.mxu0 %v1908
  %1944 = vmatprep.subr.mxu0 0.0
  %1945 = vmatpush1.msra.mxu0 %v1907
  %1946 = vmatprep.subr.mxu0 0.0
  %1947 = vmatpush1.msra.mxu0 %v1906
  %1948 = vmatprep.subr.mxu0 0.0
  %1949 = vmatpush1.msra.mxu0 %v1905
  %1950 = vmatprep.subr.mxu0 0.0
  %1951 = vmatpush1.msra.mxu0 %v1904
  %1952 = vmatprep.subr.mxu0 0.0
  %1953 = vmatpush2.msra.mxu0 0.0
  %1954 = vmatprep.subr.mxu0 0.0
  %1955 = vmatpush2.msra.mxu0 0.0
  %1956 = vmatprep.subr.mxu0 0.0
  %1957 = vmatpush2.msra.mxu0 0.0
  %1958 = vmatprep.subr.mxu0 0.0
  %1959 = vmatpush2.msra.mxu0 0.0
  %1960 = vmatprep.subr.mxu0 0.0
  %1961 = vmatpush2.msra.mxu0 0.0
  %1962 = vmatprep.subr.mxu0 0.0
  %1963 = vmatpush2.msra.mxu0 0.0
  %1964 = vmatprep.subr.mxu0 0.0
  %1965 = vmatpush2.msra.mxu0 0.0
  %1966 = vmatprep.subr.mxu0 0.0
  %1967 = vmatpush2.msra.mxu0 0.0
  %1968 = vmatprep.subr.mxu0 0.0
  %1969 = vmatpush2.msra.mxu0 0.0
  %1970 = vmatprep.subr.mxu0 0.0
  %1971 = vmatpush2.msra.mxu0 0.0
  %1972 = vmatprep.subr.mxu0 0.0
  %1973 = vmatpush2.msra.mxu0 0.0
  %1974 = vmatprep.subr.mxu0 0.0
  %1975 = vmatpush2.msra.mxu0 0.0
  %1976 = vmatprep.subr.mxu0 0.0
  %1977 = vmatpush2.msra.mxu0 0.0
  %1978 = vmatprep.subr.mxu0 0.0
  %1979 = vmatpush2.msra.mxu0 0.0
  %1980 = vmatprep.subr.mxu0 0.0
  %1981 = vmatpush2.msra.mxu0 0.0
  %1982 = vmatprep.subr.mxu0 0.0
  %1983 = vmatpush2.msra.mxu0 0.0
  %1984 = vmatprep.mubr.f32.mxu0 0.0
  %1985 = vmatmul.mubr.f32.gmra.mxu0 %v1885
  %v1986 = vpop.f32.mrf.mxu0
  %v1987 = vadd.f32 0.0, %v1986
  %v1988 = vpop.f32.mrf.mxu0
  %1989 = vmatprep.mubr.f32.mxu0 0.0
  %1990 = vmatmul.mubr.f32.gmra.mxu0 %v1890
  %v1991 = vpop.f32.mrf.mxu0
  %v1992 = vadd.f32 0.0, %v1991
  %v1993 = vpop.f32.mrf.mxu0
  %1994 = vmatprep.mubr.f32.mxu0 0.0
  %1995 = vmatmul.mubr.f32.gmra.mxu0 %v1895
  %v1996 = vpop.f32.mrf.mxu0
  %v1997 = vadd.f32 0.0, %v1996
  %v1998 = vpop.f32.mrf.mxu0
  %1999 = vmatprep.mubr.f32.mxu0 0.0
  %2000 = vmatmul.mubr.f32.gmra.mxu0 %v1900
  %v2001 = vpop.f32.mrf.mxu0
  %v2002 = vadd.f32 0.0, %v2001
  %v2003 = vpop.f32.mrf.mxu0
  %2004 = vdwg.mxu0
  %v2005 = vadd.f32 %v1797, %v1987
  %v2006 = vadd.f32 %v1798, %v1992
  %v2007 = vadd.f32 %v1799, %v1997
  %v2008 = vadd.f32 %v1800, %v2002
  %vm2009 = vcmp.gt.f32.partialorder %v2005, 0.0
  %vm2010 = vcmp.gt.f32.partialorder %v2006, 0.0
  %vm2011 = vcmp.gt.f32.partialorder %v2007, 0.0
  %vm2012 = vcmp.gt.f32.partialorder %v2008, 0.0
  %v2013 = vmul.f32 %v2005, 0.01
  %v2014 = vmul.f32 %v2006, 0.01
  %v2015 = vmul.f32 %v2007, 0.01
  %v2016 = vmul.f32 %v2008, 0.01
  %v2017 = vsel %vm2009, %v2005, %v2013
  %v2018 = vsel %vm2010, %v2006, %v2014
  %v2019 = vsel %vm2011, %v2007, %v2015
  %v2020 = vsel %vm2012, %v2008, %v2016
  %v2021 = vld [vmem:[%s15] sm:$0x1]
  %v2022 = vld [vmem:[%s3] sm:$0xff]
  %v2023 = vld [vmem:[%s3 + $0x8] sm:$0xff]
  %vm2024 = vcmask 261120
  %v2026 = vsel %vm2024, %v2022, 0
  %v2029 = vsel %vm2024, %v2023, 0
  %2031 = vmatprep.subr.mxu0 0.0
  %2032 = vmatpush1.msra.mxu0 0.0
  %2033 = vmatprep.subr.mxu0 0.0
  %2034 = vmatpush1.msra.mxu0 0.0
  %2035 = vmatprep.subr.mxu0 0.0
  %2036 = vmatpush1.msra.mxu0 0.0
  %2037 = vmatprep.subr.mxu0 0.0
  %2038 = vmatpush1.msra.mxu0 0.0
  %2039 = vmatprep.subr.mxu0 0.0
  %2040 = vmatpush1.msra.mxu0 0.0
  %2041 = vmatprep.subr.mxu0 0.0
  %2042 = vmatpush1.msra.mxu0 0.0
  %2043 = vmatprep.subr.mxu0 0.0
  %2044 = vmatpush1.msra.mxu0 0.0
  %2045 = vmatprep.subr.mxu0 0.0
  %2046 = vmatpush1.msra.mxu0 0.0
  %2047 = vmatprep.subr.mxu0 0.0
  %2048 = vmatpush1.msra.mxu0 0.0
  %2049 = vmatprep.subr.mxu0 0.0
  %2050 = vmatpush1.msra.mxu0 0.0
  %2051 = vmatprep.subr.mxu0 0.0
  %2052 = vmatpush1.msra.mxu0 0.0
  %2053 = vmatprep.subr.mxu0 0.0
  %2054 = vmatpush1.msra.mxu0 0.0
  %2055 = vmatprep.subr.mxu0 0.0
  %2056 = vmatpush1.msra.mxu0 %v2020
  %2057 = vmatprep.subr.mxu0 0.0
  %2058 = vmatpush1.msra.mxu0 %v2019
  %2059 = vmatprep.subr.mxu0 0.0
  %2060 = vmatpush1.msra.mxu0 %v2018
  %2061 = vmatprep.subr.mxu0 0.0
  %2062 = vmatpush1.msra.mxu0 %v2017
  %2063 = vmatprep.subr.mxu0 0.0
  %2064 = vmatpush2.msra.mxu0 0.0
  %2065 = vmatprep.subr.mxu0 0.0
  %2066 = vmatpush2.msra.mxu0 0.0
  %2067 = vmatprep.subr.mxu0 0.0
  %2068 = vmatpush2.msra.mxu0 0.0
  %2069 = vmatprep.subr.mxu0 0.0
  %2070 = vmatpush2.msra.mxu0 0.0
  %2071 = vmatprep.subr.mxu0 0.0
  %2072 = vmatpush2.msra.mxu0 0.0
  %2073 = vmatprep.subr.mxu0 0.0
  %2074 = vmatpush2.msra.mxu0 0.0
  %2075 = vmatprep.subr.mxu0 0.0
  %2076 = vmatpush2.msra.mxu0 0.0
  %2077 = vmatprep.subr.mxu0 0.0
  %2078 = vmatpush2.msra.mxu0 0.0
  %2079 = vmatprep.subr.mxu0 0.0
  %2080 = vmatpush2.msra.mxu0 0.0
  %2081 = vmatprep.subr.mxu0 0.0
  %2082 = vmatpush2.msra.mxu0 0.0
  %2083 = vmatprep.subr.mxu0 0.0
  %2084 = vmatpush2.msra.mxu0 0.0
  %2085 = vmatprep.subr.mxu0 0.0
  %2086 = vmatpush2.msra.mxu0 0.0
  %2087 = vmatprep.subr.mxu0 0.0
  %2088 = vmatpush2.msra.mxu0 0.0
  %2089 = vmatprep.subr.mxu0 0.0
  %2090 = vmatpush2.msra.mxu0 0.0
  %2091 = vmatprep.subr.mxu0 0.0
  %2092 = vmatpush2.msra.mxu0 0.0
  %2093 = vmatprep.subr.mxu0 0.0
  %2094 = vmatpush2.msra.mxu0 0.0
  %2095 = vmatprep.mubr.f32.mxu0 0.0
  %2096 = vmatmul.mubr.f32.gmra.mxu0 %v2026
  %v2097 = vpop.f32.mrf.mxu0
  %v2098 = vadd.f32 0.0, %v2097
  %v2099 = vpop.f32.mrf.mxu0
  %2100 = vmatprep.mubr.f32.mxu0 0.0
  %2101 = vmatmul.mubr.f32.gmra.mxu0 %v2029
  %v2102 = vpop.f32.mrf.mxu0
  %v2103 = vadd.f32 0.0, %v2102
  %v2104 = vpop.f32.mrf.mxu0
  %2105 = vdwg.mxu0
  %v2106 = vld [vmem:[%s9] sm:$0xff]
  %v2107 = vld [vmem:[%s9 + $0x8] sm:$0xff]
  %v2108 = vld [vmem:[%s9 + $0x10] sm:$0xff]
  %v2109 = vld [vmem:[%s9 + $0x18] sm:$0xff]
  %v2110 = vld [vmem:[%s9 + $0x20] sm:$0xff]
  %v2111 = vld [vmem:[%s9 + $0x28] sm:$0xff]
  %v2112 = vld [vmem:[%s9 + $0x30] sm:$0xff]
  %v2113 = vld [vmem:[%s9 + $0x38] sm:$0xff]
  %v2114 = vld [vmem:[%s9 + $0x40] sm:$0xff]
  %v2115 = vld [vmem:[%s9 + $0x48] sm:$0xff]
  %v2116 = vld [vmem:[%s9 + $0x50] sm:$0xff]
  %v2117 = vld [vmem:[%s9 + $0x58] sm:$0xff]
  %v2118 = vld [vmem:[%s9 + $0x60] sm:$0xff]
  %v2119 = vld [vmem:[%s9 + $0x68] sm:$0xff]
  %v2120 = vld [vmem:[%s9 + $0x70] sm:$0xff]
  %v2121 = vld [vmem:[%s9 + $0x78] sm:$0xff]
  %2122 = vmatprep.subr.mxu0 0.0
  %2123 = vmatpush1.msra.mxu0 %v2121
  %2124 = vmatprep.subr.mxu0 0.0
  %2125 = vmatpush1.msra.mxu0 %v2120
  %2126 = vmatprep.subr.mxu0 0.0
  %2127 = vmatpush1.msra.mxu0 %v2119
  %2128 = vmatprep.subr.mxu0 0.0
  %2129 = vmatpush1.msra.mxu0 %v2118
  %2130 = vmatprep.subr.mxu0 0.0
  %2131 = vmatpush1.msra.mxu0 %v2117
  %2132 = vmatprep.subr.mxu0 0.0
  %2133 = vmatpush1.msra.mxu0 %v2116
  %2134 = vmatprep.subr.mxu0 0.0
  %2135 = vmatpush1.msra.mxu0 %v2115
  %2136 = vmatprep.subr.mxu0 0.0
  %2137 = vmatpush1.msra.mxu0 %v2114
  %2138 = vmatprep.subr.mxu0 0.0
  %2139 = vmatpush1.msra.mxu0 %v2113
  %2140 = vmatprep.subr.mxu0 0.0
  %2141 = vmatpush1.msra.mxu0 %v2112
  %2142 = vmatprep.subr.mxu0 0.0
  %2143 = vmatpush1.msra.mxu0 %v2111
  %2144 = vmatprep.subr.mxu0 0.0
  %2145 = vmatpush1.msra.mxu0 %v2110
  %2146 = vmatprep.subr.mxu0 0.0
  %2147 = vmatpush1.msra.mxu0 %v2109
  %2148 = vmatprep.subr.mxu0 0.0
  %2149 = vmatpush1.msra.mxu0 %v2108
  %2150 = vmatprep.subr.mxu0 0.0
  %2151 = vmatpush1.msra.mxu0 %v2107
  %2152 = vmatprep.subr.mxu0 0.0
  %2153 = vmatpush1.msra.mxu0 %v2106
  %2154 = vmatprep.subr.mxu0 0.0
  %2155 = vmatpush2.msra.mxu0 0.0
  %2156 = vmatprep.subr.mxu0 0.0
  %2157 = vmatpush2.msra.mxu0 0.0
  %2158 = vmatprep.subr.mxu0 0.0
  %2159 = vmatpush2.msra.mxu0 0.0
  %2160 = vmatprep.subr.mxu0 0.0
  %2161 = vmatpush2.msra.mxu0 0.0
  %2162 = vmatprep.subr.mxu0 0.0
  %2163 = vmatpush2.msra.mxu0 0.0
  %2164 = vmatprep.subr.mxu0 0.0
  %2165 = vmatpush2.msra.mxu0 0.0
  %2166 = vmatprep.subr.mxu0 0.0
  %2167 = vmatpush2.msra.mxu0 0.0
  %2168 = vmatprep.subr.mxu0 0.0
  %2169 = vmatpush2.msra.mxu0 0.0
  %2170 = vmatprep.subr.mxu0 0.0
  %2171 = vmatpush2.msra.mxu0 0.0
  %2172 = vmatprep.subr.mxu0 0.0
  %2173 = vmatpush2.msra.mxu0 0.0
  %2174 = vmatprep.subr.mxu0 0.0
  %2175 = vmatpush2.msra.mxu0 0.0
  %2176 = vmatprep.subr.mxu0 0.0
  %2177 = vmatpush2.msra.mxu0 0.0
  %2178 = vmatprep.subr.mxu0 0.0
  %2179 = vmatpush2.msra.mxu0 0.0
  %2180 = vmatprep.subr.mxu0 0.0
  %2181 = vmatpush2.msra.mxu0 0.0
  %2182 = vmatprep.subr.mxu0 0.0
  %2183 = vmatpush2.msra.mxu0 0.0
  %2184 = vmatprep.subr.mxu0 0.0
  %2185 = vmatpush2.msra.mxu0 0.0
  %2186 = vmatprep.mubr.f32.mxu0 0.0
  %2187 = vmatmul.mubr.f32.gmra.mxu0 %v2098
  %v2188 = vpop.f32.mrf.mxu0
  %v2189 = vadd.f32 0.0, %v2188
  %v2190 = vpop.f32.mrf.mxu0
  %2191 = vmatprep.mubr.f32.mxu0 0.0
  %2192 = vmatmul.mubr.f32.gmra.mxu0 %v2103
  %v2193 = vpop.f32.mrf.mxu0
  %v2194 = vadd.f32 0.0, %v2193
  %v2195 = vpop.f32.mrf.mxu0
  %2196 = vdwg.mxu0
  %v2198 = vlaneseq
  %v2199 = vshrl.u32 %v2198, 7
  %v2200 = vsub.s32 0, %v2199
  %v2201 = vrot.slane %v2021, %v2200
  %v2203 = vadd.f32 %v2201, %v2189
  %v2204 = vadd.f32 %v2201, %v2194
  %s2205 = scalar_lea.vmem %s3, 16
  %v2206 = vld [vmem:[%s2205] sm:$0xff]
  %v2207 = vld [vmem:[%s2205 + $0x8] sm:$0xff]
  %v2209 = vsel %vm2024, %v2206, 0
  %v2212 = vsel %vm2024, %v2207, 0
  %2214 = vmatprep.subr.mxu0 0.0
  %2215 = vmatpush1.msra.mxu0 0.0
  %2216 = vmatprep.subr.mxu0 0.0
  %2217 = vmatpush1.msra.mxu0 0.0
  %2218 = vmatprep.subr.mxu0 0.0
  %2219 = vmatpush1.msra.mxu0 0.0
  %2220 = vmatprep.subr.mxu0 0.0
  %2221 = vmatpush1.msra.mxu0 0.0
  %2222 = vmatprep.subr.mxu0 0.0
  %2223 = vmatpush1.msra.mxu0 0.0
  %2224 = vmatprep.subr.mxu0 0.0
  %2225 = vmatpush1.msra.mxu0 0.0
  %2226 = vmatprep.subr.mxu0 0.0
  %2227 = vmatpush1.msra.mxu0 0.0
  %2228 = vmatprep.subr.mxu0 0.0
  %2229 = vmatpush1.msra.mxu0 0.0
  %2230 = vmatprep.subr.mxu0 0.0
  %2231 = vmatpush1.msra.mxu0 0.0
  %2232 = vmatprep.subr.mxu0 0.0
  %2233 = vmatpush1.msra.mxu0 0.0
  %2234 = vmatprep.subr.mxu0 0.0
  %2235 = vmatpush1.msra.mxu0 0.0
  %2236 = vmatprep.subr.mxu0 0.0
  %2237 = vmatpush1.msra.mxu0 0.0
  %2238 = vmatprep.subr.mxu0 0.0
  %2239 = vmatpush1.msra.mxu0 %v2020
  %2240 = vmatprep.subr.mxu0 0.0
  %2241 = vmatpush1.msra.mxu0 %v2019
  %2242 = vmatprep.subr.mxu0 0.0
  %2243 = vmatpush1.msra.mxu0 %v2018
  %2244 = vmatprep.subr.mxu0 0.0
  %2245 = vmatpush1.msra.mxu0 %v2017
  %2246 = vmatprep.subr.mxu0 0.0
  %2247 = vmatpush2.msra.mxu0 0.0
  %2248 = vmatprep.subr.mxu0 0.0
  %2249 = vmatpush2.msra.mxu0 0.0
  %2250 = vmatprep.subr.mxu0 0.0
  %2251 = vmatpush2.msra.mxu0 0.0
  %2252 = vmatprep.subr.mxu0 0.0
  %2253 = vmatpush2.msra.mxu0 0.0
  %2254 = vmatprep.subr.mxu0 0.0
  %2255 = vmatpush2.msra.mxu0 0.0
  %2256 = vmatprep.subr.mxu0 0.0
  %2257 = vmatpush2.msra.mxu0 0.0
  %2258 = vmatprep.subr.mxu0 0.0
  %2259 = vmatpush2.msra.mxu0 0.0
  %2260 = vmatprep.subr.mxu0 0.0
  %2261 = vmatpush2.msra.mxu0 0.0
  %2262 = vmatprep.subr.mxu0 0.0
  %2263 = vmatpush2.msra.mxu0 0.0
  %2264 = vmatprep.subr.mxu0 0.0
  %2265 = vmatpush2.msra.mxu0 0.0
  %2266 = vmatprep.subr.mxu0 0.0
  %2267 = vmatpush2.msra.mxu0 0.0
  %2268 = vmatprep.subr.mxu0 0.0
  %2269 = vmatpush2.msra.mxu0 0.0
  %2270 = vmatprep.subr.mxu0 0.0
  %2271 = vmatpush2.msra.mxu0 0.0
  %2272 = vmatprep.subr.mxu0 0.0
  %2273 = vmatpush2.msra.mxu0 0.0
  %2274 = vmatprep.subr.mxu0 0.0
  %2275 = vmatpush2.msra.mxu0 0.0
  %2276 = vmatprep.subr.mxu0 0.0
  %2277 = vmatpush2.msra.mxu0 0.0
  %2278 = vmatprep.mubr.f32.mxu0 0.0
  %2279 = vmatmul.mubr.f32.gmra.mxu0 %v2209
  %v2280 = vpop.f32.mrf.mxu0
  %v2281 = vadd.f32 0.0, %v2280
  %v2282 = vpop.f32.mrf.mxu0
  %2283 = vmatprep.mubr.f32.mxu0 0.0
  %2284 = vmatmul.mubr.f32.gmra.mxu0 %v2212
  %v2285 = vpop.f32.mrf.mxu0
  %v2286 = vadd.f32 0.0, %v2285
  %v2287 = vpop.f32.mrf.mxu0
  %2288 = vdwg.mxu0
  %s2289 = scalar_lea.vmem %s9, 128
  %v2290 = vld [vmem:[%s2289] sm:$0xff]
  %v2291 = vld [vmem:[%s2289 + $0x8] sm:$0xff]
  %v2292 = vld [vmem:[%s2289 + $0x10] sm:$0xff]
  %v2293 = vld [vmem:[%s2289 + $0x18] sm:$0xff]
  %v2294 = vld [vmem:[%s2289 + $0x20] sm:$0xff]
  %v2295 = vld [vmem:[%s2289 + $0x28] sm:$0xff]
  %v2296 = vld [vmem:[%s2289 + $0x30] sm:$0xff]
  %v2297 = vld [vmem:[%s2289 + $0x38] sm:$0xff]
  %v2298 = vld [vmem:[%s2289 + $0x40] sm:$0xff]
  %v2299 = vld [vmem:[%s2289 + $0x48] sm:$0xff]
  %v2300 = vld [vmem:[%s2289 + $0x50] sm:$0xff]
  %v2301 = vld [vmem:[%s2289 + $0x58] sm:$0xff]
  %v2302 = vld [vmem:[%s2289 + $0x60] sm:$0xff]
  %v2303 = vld [vmem:[%s2289 + $0x68] sm:$0xff]
  %v2304 = vld [vmem:[%s2289 + $0x70] sm:$0xff]
  %v2305 = vld [vmem:[%s2289 + $0x78] sm:$0xff]
  %2306 = vmatprep.subr.mxu0 0.0
  %2307 = vmatpush1.msra.mxu0 %v2305
  %2308 = vmatprep.subr.mxu0 0.0
  %2309 = vmatpush1.msra.mxu0 %v2304
  %2310 = vmatprep.subr.mxu0 0.0
  %2311 = vmatpush1.msra.mxu0 %v2303
  %2312 = vmatprep.subr.mxu0 0.0
  %2313 = vmatpush1.msra.mxu0 %v2302
  %2314 = vmatprep.subr.mxu0 0.0
  %2315 = vmatpush1.msra.mxu0 %v2301
  %2316 = vmatprep.subr.mxu0 0.0
  %2317 = vmatpush1.msra.mxu0 %v2300
  %2318 = vmatprep.subr.mxu0 0.0
  %2319 = vmatpush1.msra.mxu0 %v2299
  %2320 = vmatprep.subr.mxu0 0.0
  %2321 = vmatpush1.msra.mxu0 %v2298
  %2322 = vmatprep.subr.mxu0 0.0
  %2323 = vmatpush1.msra.mxu0 %v2297
  %2324 = vmatprep.subr.mxu0 0.0
  %2325 = vmatpush1.msra.mxu0 %v2296
  %2326 = vmatprep.subr.mxu0 0.0
  %2327 = vmatpush1.msra.mxu0 %v2295
  %2328 = vmatprep.subr.mxu0 0.0
  %2329 = vmatpush1.msra.mxu0 %v2294
  %2330 = vmatprep.subr.mxu0 0.0
  %2331 = vmatpush1.msra.mxu0 %v2293
  %2332 = vmatprep.subr.mxu0 0.0
  %2333 = vmatpush1.msra.mxu0 %v2292
  %2334 = vmatprep.subr.mxu0 0.0
  %2335 = vmatpush1.msra.mxu0 %v2291
  %2336 = vmatprep.subr.mxu0 0.0
  %2337 = vmatpush1.msra.mxu0 %v2290
  %2338 = vmatprep.subr.mxu0 0.0
  %2339 = vmatpush2.msra.mxu0 0.0
  %2340 = vmatprep.subr.mxu0 0.0
  %2341 = vmatpush2.msra.mxu0 0.0
  %2342 = vmatprep.subr.mxu0 0.0
  %2343 = vmatpush2.msra.mxu0 0.0
  %2344 = vmatprep.subr.mxu0 0.0
  %2345 = vmatpush2.msra.mxu0 0.0
  %2346 = vmatprep.subr.mxu0 0.0
  %2347 = vmatpush2.msra.mxu0 0.0
  %2348 = vmatprep.subr.mxu0 0.0
  %2349 = vmatpush2.msra.mxu0 0.0
  %2350 = vmatprep.subr.mxu0 0.0
  %2351 = vmatpush2.msra.mxu0 0.0
  %2352 = vmatprep.subr.mxu0 0.0
  %2353 = vmatpush2.msra.mxu0 0.0
  %2354 = vmatprep.subr.mxu0 0.0
  %2355 = vmatpush2.msra.mxu0 0.0
  %2356 = vmatprep.subr.mxu0 0.0
  %2357 = vmatpush2.msra.mxu0 0.0
  %2358 = vmatprep.subr.mxu0 0.0
  %2359 = vmatpush2.msra.mxu0 0.0
  %2360 = vmatprep.subr.mxu0 0.0
  %2361 = vmatpush2.msra.mxu0 0.0
  %2362 = vmatprep.subr.mxu0 0.0
  %2363 = vmatpush2.msra.mxu0 0.0
  %2364 = vmatprep.subr.mxu0 0.0
  %2365 = vmatpush2.msra.mxu0 0.0
  %2366 = vmatprep.subr.mxu0 0.0
  %2367 = vmatpush2.msra.mxu0 0.0
  %2368 = vmatprep.subr.mxu0 0.0
  %2369 = vmatpush2.msra.mxu0 0.0
  %2370 = vmatprep.mubr.f32.mxu0 0.0
  %2371 = vmatmul.mubr.f32.gmra.mxu0 %v2281
  %v2372 = vpop.f32.mrf.mxu0
  %v2373 = vadd.f32 0.0, %v2372
  %v2374 = vpop.f32.mrf.mxu0
  %2375 = vmatprep.mubr.f32.mxu0 0.0
  %2376 = vmatmul.mubr.f32.gmra.mxu0 %v2286
  %v2377 = vpop.f32.mrf.mxu0
  %v2378 = vadd.f32 0.0, %v2377
  %v2379 = vpop.f32.mrf.mxu0
  %2380 = vdwg.mxu0
  %v2381 = vadd.f32 %v2203, %v2373
  %v2382 = vadd.f32 %v2204, %v2378
  %s2383 = scalar_lea.vmem %s3, 32
  %v2384 = vld [vmem:[%s2383] sm:$0xff]
  %v2385 = vld [vmem:[%s2383 + $0x8] sm:$0xff]
  %v2387 = vsel %vm2024, %v2384, 0
  %v2390 = vsel %vm2024, %v2385, 0
  %2392 = vmatprep.subr.mxu0 0.0
  %2393 = vmatpush1.msra.mxu0 0.0
  %2394 = vmatprep.subr.mxu0 0.0
  %2395 = vmatpush1.msra.mxu0 0.0
  %2396 = vmatprep.subr.mxu0 0.0
  %2397 = vmatpush1.msra.mxu0 0.0
  %2398 = vmatprep.subr.mxu0 0.0
  %2399 = vmatpush1.msra.mxu0 0.0
  %2400 = vmatprep.subr.mxu0 0.0
  %2401 = vmatpush1.msra.mxu0 0.0
  %2402 = vmatprep.subr.mxu0 0.0
  %2403 = vmatpush1.msra.mxu0 0.0
  %2404 = vmatprep.subr.mxu0 0.0
  %2405 = vmatpush1.msra.mxu0 0.0
  %2406 = vmatprep.subr.mxu0 0.0
  %2407 = vmatpush1.msra.mxu0 0.0
  %2408 = vmatprep.subr.mxu0 0.0
  %2409 = vmatpush1.msra.mxu0 0.0
  %2410 = vmatprep.subr.mxu0 0.0
  %2411 = vmatpush1.msra.mxu0 0.0
  %2412 = vmatprep.subr.mxu0 0.0
  %2413 = vmatpush1.msra.mxu0 0.0
  %2414 = vmatprep.subr.mxu0 0.0
  %2415 = vmatpush1.msra.mxu0 0.0
  %2416 = vmatprep.subr.mxu0 0.0
  %2417 = vmatpush1.msra.mxu0 %v2020
  %2418 = vmatprep.subr.mxu0 0.0
  %2419 = vmatpush1.msra.mxu0 %v2019
  %2420 = vmatprep.subr.mxu0 0.0
  %2421 = vmatpush1.msra.mxu0 %v2018
  %2422 = vmatprep.subr.mxu0 0.0
  %2423 = vmatpush1.msra.mxu0 %v2017
  %2424 = vmatprep.subr.mxu0 0.0
  %2425 = vmatpush2.msra.mxu0 0.0
  %2426 = vmatprep.subr.mxu0 0.0
  %2427 = vmatpush2.msra.mxu0 0.0
  %2428 = vmatprep.subr.mxu0 0.0
  %2429 = vmatpush2.msra.mxu0 0.0
  %2430 = vmatprep.subr.mxu0 0.0
  %2431 = vmatpush2.msra.mxu0 0.0
  %2432 = vmatprep.subr.mxu0 0.0
  %2433 = vmatpush2.msra.mxu0 0.0
  %2434 = vmatprep.subr.mxu0 0.0
  %2435 = vmatpush2.msra.mxu0 0.0
  %2436 = vmatprep.subr.mxu0 0.0
  %2437 = vmatpush2.msra.mxu0 0.0
  %2438 = vmatprep.subr.mxu0 0.0
  %2439 = vmatpush2.msra.mxu0 0.0
  %2440 = vmatprep.subr.mxu0 0.0
  %2441 = vmatpush2.msra.mxu0 0.0
  %2442 = vmatprep.subr.mxu0 0.0
  %2443 = vmatpush2.msra.mxu0 0.0
  %2444 = vmatprep.subr.mxu0 0.0
  %2445 = vmatpush2.msra.mxu0 0.0
  %2446 = vmatprep.subr.mxu0 0.0
  %2447 = vmatpush2.msra.mxu0 0.0
  %2448 = vmatprep.subr.mxu0 0.0
  %2449 = vmatpush2.msra.mxu0 0.0
  %2450 = vmatprep.subr.mxu0 0.0
  %2451 = vmatpush2.msra.mxu0 0.0
  %2452 = vmatprep.subr.mxu0 0.0
  %2453 = vmatpush2.msra.mxu0 0.0
  %2454 = vmatprep.subr.mxu0 0.0
  %2455 = vmatpush2.msra.mxu0 0.0
  %2456 = vmatprep.mubr.f32.mxu0 0.0
  %2457 = vmatmul.mubr.f32.gmra.mxu0 %v2387
  %v2458 = vpop.f32.mrf.mxu0
  %v2459 = vadd.f32 0.0, %v2458
  %v2460 = vpop.f32.mrf.mxu0
  %2461 = vmatprep.mubr.f32.mxu0 0.0
  %2462 = vmatmul.mubr.f32.gmra.mxu0 %v2390
  %v2463 = vpop.f32.mrf.mxu0
  %v2464 = vadd.f32 0.0, %v2463
  %v2465 = vpop.f32.mrf.mxu0
  %2466 = vdwg.mxu0
  %s2467 = scalar_lea.vmem %s9, 256
  %v2468 = vld [vmem:[%s2467] sm:$0xff]
  %v2469 = vld [vmem:[%s2467 + $0x8] sm:$0xff]
  %v2470 = vld [vmem:[%s2467 + $0x10] sm:$0xff]
  %v2471 = vld [vmem:[%s2467 + $0x18] sm:$0xff]
  %v2472 = vld [vmem:[%s2467 + $0x20] sm:$0xff]
  %v2473 = vld [vmem:[%s2467 + $0x28] sm:$0xff]
  %v2474 = vld [vmem:[%s2467 + $0x30] sm:$0xff]
  %v2475 = vld [vmem:[%s2467 + $0x38] sm:$0xff]
  %v2476 = vld [vmem:[%s2467 + $0x40] sm:$0xff]
  %v2477 = vld [vmem:[%s2467 + $0x48] sm:$0xff]
  %v2478 = vld [vmem:[%s2467 + $0x50] sm:$0xff]
  %v2479 = vld [vmem:[%s2467 + $0x58] sm:$0xff]
  %v2480 = vld [vmem:[%s2467 + $0x60] sm:$0xff]
  %v2481 = vld [vmem:[%s2467 + $0x68] sm:$0xff]
  %v2482 = vld [vmem:[%s2467 + $0x70] sm:$0xff]
  %v2483 = vld [vmem:[%s2467 + $0x78] sm:$0xff]
  %2484 = vmatprep.subr.mxu0 0.0
  %2485 = vmatpush1.msra.mxu0 %v2483
  %2486 = vmatprep.subr.mxu0 0.0
  %2487 = vmatpush1.msra.mxu0 %v2482
  %2488 = vmatprep.subr.mxu0 0.0
  %2489 = vmatpush1.msra.mxu0 %v2481
  %2490 = vmatprep.subr.mxu0 0.0
  %2491 = vmatpush1.msra.mxu0 %v2480
  %2492 = vmatprep.subr.mxu0 0.0
  %2493 = vmatpush1.msra.mxu0 %v2479
  %2494 = vmatprep.subr.mxu0 0.0
  %2495 = vmatpush1.msra.mxu0 %v2478
  %2496 = vmatprep.subr.mxu0 0.0
  %2497 = vmatpush1.msra.mxu0 %v2477
  %2498 = vmatprep.subr.mxu0 0.0
  %2499 = vmatpush1.msra.mxu0 %v2476
  %2500 = vmatprep.subr.mxu0 0.0
  %2501 = vmatpush1.msra.mxu0 %v2475
  %2502 = vmatprep.subr.mxu0 0.0
  %2503 = vmatpush1.msra.mxu0 %v2474
  %2504 = vmatprep.subr.mxu0 0.0
  %2505 = vmatpush1.msra.mxu0 %v2473
  %2506 = vmatprep.subr.mxu0 0.0
  %2507 = vmatpush1.msra.mxu0 %v2472
  %2508 = vmatprep.subr.mxu0 0.0
  %2509 = vmatpush1.msra.mxu0 %v2471
  %2510 = vmatprep.subr.mxu0 0.0
  %2511 = vmatpush1.msra.mxu0 %v2470
  %2512 = vmatprep.subr.mxu0 0.0
  %2513 = vmatpush1.msra.mxu0 %v2469
  %2514 = vmatprep.subr.mxu0 0.0
  %2515 = vmatpush1.msra.mxu0 %v2468
  %2516 = vmatprep.subr.mxu0 0.0
  %2517 = vmatpush2.msra.mxu0 0.0
  %2518 = vmatprep.subr.mxu0 0.0
  %2519 = vmatpush2.msra.mxu0 0.0
  %2520 = vmatprep.subr.mxu0 0.0
  %2521 = vmatpush2.msra.mxu0 0.0
  %2522 = vmatprep.subr.mxu0 0.0
  %2523 = vmatpush2.msra.mxu0 0.0
  %2524 = vmatprep.subr.mxu0 0.0
  %2525 = vmatpush2.msra.mxu0 0.0
  %2526 = vmatprep.subr.mxu0 0.0
  %2527 = vmatpush2.msra.mxu0 0.0
  %2528 = vmatprep.subr.mxu0 0.0
  %2529 = vmatpush2.msra.mxu0 0.0
  %2530 = vmatprep.subr.mxu0 0.0
  %2531 = vmatpush2.msra.mxu0 0.0
  %2532 = vmatprep.subr.mxu0 0.0
  %2533 = vmatpush2.msra.mxu0 0.0
  %2534 = vmatprep.subr.mxu0 0.0
  %2535 = vmatpush2.msra.mxu0 0.0
  %2536 = vmatprep.subr.mxu0 0.0
  %2537 = vmatpush2.msra.mxu0 0.0
  %2538 = vmatprep.subr.mxu0 0.0
  %2539 = vmatpush2.msra.mxu0 0.0
  %2540 = vmatprep.subr.mxu0 0.0
  %2541 = vmatpush2.msra.mxu0 0.0
  %2542 = vmatprep.subr.mxu0 0.0
  %2543 = vmatpush2.msra.mxu0 0.0
  %2544 = vmatprep.subr.mxu0 0.0
  %2545 = vmatpush2.msra.mxu0 0.0
  %2546 = vmatprep.subr.mxu0 0.0
  %2547 = vmatpush2.msra.mxu0 0.0
  %2548 = vmatprep.mubr.f32.mxu0 0.0
  %2549 = vmatmul.mubr.f32.gmra.mxu0 %v2459
  %v2550 = vpop.f32.mrf.mxu0
  %v2551 = vadd.f32 0.0, %v2550
  %v2552 = vpop.f32.mrf.mxu0
  %2553 = vmatprep.mubr.f32.mxu0 0.0
  %2554 = vmatmul.mubr.f32.gmra.mxu0 %v2464
  %v2555 = vpop.f32.mrf.mxu0
  %v2556 = vadd.f32 0.0, %v2555
  %v2557 = vpop.f32.mrf.mxu0
  %2558 = vdwg.mxu0
  %v2559 = vadd.f32 %v2381, %v2551
  %v2560 = vadd.f32 %v2382, %v2556
  %s2561 = scalar_lea.vmem %s3, 48
  %v2562 = vld [vmem:[%s2561] sm:$0xff]
  %v2563 = vld [vmem:[%s2561 + $0x8] sm:$0xff]
  %v2565 = vsel %vm2024, %v2562, 0
  %v2568 = vsel %vm2024, %v2563, 0
  %2570 = vmatprep.subr.mxu0 0.0
  %2571 = vmatpush1.msra.mxu0 0.0
  %2572 = vmatprep.subr.mxu0 0.0
  %2573 = vmatpush1.msra.mxu0 0.0
  %2574 = vmatprep.subr.mxu0 0.0
  %2575 = vmatpush1.msra.mxu0 0.0
  %2576 = vmatprep.subr.mxu0 0.0
  %2577 = vmatpush1.msra.mxu0 0.0
  %2578 = vmatprep.subr.mxu0 0.0
  %2579 = vmatpush1.msra.mxu0 0.0
  %2580 = vmatprep.subr.mxu0 0.0
  %2581 = vmatpush1.msra.mxu0 0.0
  %2582 = vmatprep.subr.mxu0 0.0
  %2583 = vmatpush1.msra.mxu0 0.0
  %2584 = vmatprep.subr.mxu0 0.0
  %2585 = vmatpush1.msra.mxu0 0.0
  %2586 = vmatprep.subr.mxu0 0.0
  %2587 = vmatpush1.msra.mxu0 0.0
  %2588 = vmatprep.subr.mxu0 0.0
  %2589 = vmatpush1.msra.mxu0 0.0
  %2590 = vmatprep.subr.mxu0 0.0
  %2591 = vmatpush1.msra.mxu0 0.0
  %2592 = vmatprep.subr.mxu0 0.0
  %2593 = vmatpush1.msra.mxu0 0.0
  %2594 = vmatprep.subr.mxu0 0.0
  %2595 = vmatpush1.msra.mxu0 %v2020
  %2596 = vmatprep.subr.mxu0 0.0
  %2597 = vmatpush1.msra.mxu0 %v2019
  %2598 = vmatprep.subr.mxu0 0.0
  %2599 = vmatpush1.msra.mxu0 %v2018
  %2600 = vmatprep.subr.mxu0 0.0
  %2601 = vmatpush1.msra.mxu0 %v2017
  %2602 = vmatprep.subr.mxu0 0.0
  %2603 = vmatpush2.msra.mxu0 0.0
  %2604 = vmatprep.subr.mxu0 0.0
  %2605 = vmatpush2.msra.mxu0 0.0
  %2606 = vmatprep.subr.mxu0 0.0
  %2607 = vmatpush2.msra.mxu0 0.0
  %2608 = vmatprep.subr.mxu0 0.0
  %2609 = vmatpush2.msra.mxu0 0.0
  %2610 = vmatprep.subr.mxu0 0.0
  %2611 = vmatpush2.msra.mxu0 0.0
  %2612 = vmatprep.subr.mxu0 0.0
  %2613 = vmatpush2.msra.mxu0 0.0
  %2614 = vmatprep.subr.mxu0 0.0
  %2615 = vmatpush2.msra.mxu0 0.0
  %2616 = vmatprep.subr.mxu0 0.0
  %2617 = vmatpush2.msra.mxu0 0.0
  %2618 = vmatprep.subr.mxu0 0.0
  %2619 = vmatpush2.msra.mxu0 0.0
  %2620 = vmatprep.subr.mxu0 0.0
  %2621 = vmatpush2.msra.mxu0 0.0
  %2622 = vmatprep.subr.mxu0 0.0
  %2623 = vmatpush2.msra.mxu0 0.0
  %2624 = vmatprep.subr.mxu0 0.0
  %2625 = vmatpush2.msra.mxu0 0.0
  %2626 = vmatprep.subr.mxu0 0.0
  %2627 = vmatpush2.msra.mxu0 0.0
  %2628 = vmatprep.subr.mxu0 0.0
  %2629 = vmatpush2.msra.mxu0 0.0
  %2630 = vmatprep.subr.mxu0 0.0
  %2631 = vmatpush2.msra.mxu0 0.0
  %2632 = vmatprep.subr.mxu0 0.0
  %2633 = vmatpush2.msra.mxu0 0.0
  %2634 = vmatprep.mubr.f32.mxu0 0.0
  %2635 = vmatmul.mubr.f32.gmra.mxu0 %v2565
  %v2636 = vpop.f32.mrf.mxu0
  %v2637 = vadd.f32 0.0, %v2636
  %v2638 = vpop.f32.mrf.mxu0
  %2639 = vmatprep.mubr.f32.mxu0 0.0
  %2640 = vmatmul.mubr.f32.gmra.mxu0 %v2568
  %v2641 = vpop.f32.mrf.mxu0
  %v2642 = vadd.f32 0.0, %v2641
  %v2643 = vpop.f32.mrf.mxu0
  %2644 = vdwg.mxu0
  %s2645 = scalar_lea.vmem %s9, 384
  %v2646 = vld [vmem:[%s2645] sm:$0xff]
  %v2647 = vld [vmem:[%s2645 + $0x8] sm:$0xff]
  %v2648 = vld [vmem:[%s2645 + $0x10] sm:$0xff]
  %v2649 = vld [vmem:[%s2645 + $0x18] sm:$0xff]
  %v2650 = vld [vmem:[%s2645 + $0x20] sm:$0xff]
  %v2651 = vld [vmem:[%s2645 + $0x28] sm:$0xff]
  %v2652 = vld [vmem:[%s2645 + $0x30] sm:$0xff]
  %v2653 = vld [vmem:[%s2645 + $0x38] sm:$0xff]
  %v2654 = vld [vmem:[%s2645 + $0x40] sm:$0xff]
  %v2655 = vld [vmem:[%s2645 + $0x48] sm:$0xff]
  %v2656 = vld [vmem:[%s2645 + $0x50] sm:$0xff]
  %v2657 = vld [vmem:[%s2645 + $0x58] sm:$0xff]
  %v2658 = vld [vmem:[%s2645 + $0x60] sm:$0xff]
  %v2659 = vld [vmem:[%s2645 + $0x68] sm:$0xff]
  %v2660 = vld [vmem:[%s2645 + $0x70] sm:$0xff]
  %v2661 = vld [vmem:[%s2645 + $0x78] sm:$0xff]
  %2662 = vmatprep.subr.mxu0 0.0
  %2663 = vmatpush1.msra.mxu0 %v2661
  %2664 = vmatprep.subr.mxu0 0.0
  %2665 = vmatpush1.msra.mxu0 %v2660
  %2666 = vmatprep.subr.mxu0 0.0
  %2667 = vmatpush1.msra.mxu0 %v2659
  %2668 = vmatprep.subr.mxu0 0.0
  %2669 = vmatpush1.msra.mxu0 %v2658
  %2670 = vmatprep.subr.mxu0 0.0
  %2671 = vmatpush1.msra.mxu0 %v2657
  %2672 = vmatprep.subr.mxu0 0.0
  %2673 = vmatpush1.msra.mxu0 %v2656
  %2674 = vmatprep.subr.mxu0 0.0
  %2675 = vmatpush1.msra.mxu0 %v2655
  %2676 = vmatprep.subr.mxu0 0.0
  %2677 = vmatpush1.msra.mxu0 %v2654
  %2678 = vmatprep.subr.mxu0 0.0
  %2679 = vmatpush1.msra.mxu0 %v2653
  %2680 = vmatprep.subr.mxu0 0.0
  %2681 = vmatpush1.msra.mxu0 %v2652
  %2682 = vmatprep.subr.mxu0 0.0
  %2683 = vmatpush1.msra.mxu0 %v2651
  %2684 = vmatprep.subr.mxu0 0.0
  %2685 = vmatpush1.msra.mxu0 %v2650
  %2686 = vmatprep.subr.mxu0 0.0
  %2687 = vmatpush1.msra.mxu0 %v2649
  %2688 = vmatprep.subr.mxu0 0.0
  %2689 = vmatpush1.msra.mxu0 %v2648
  %2690 = vmatprep.subr.mxu0 0.0
  %2691 = vmatpush1.msra.mxu0 %v2647
  %2692 = vmatprep.subr.mxu0 0.0
  %2693 = vmatpush1.msra.mxu0 %v2646
  %2694 = vmatprep.subr.mxu0 0.0
  %2695 = vmatpush2.msra.mxu0 0.0
  %2696 = vmatprep.subr.mxu0 0.0
  %2697 = vmatpush2.msra.mxu0 0.0
  %2698 = vmatprep.subr.mxu0 0.0
  %2699 = vmatpush2.msra.mxu0 0.0
  %2700 = vmatprep.subr.mxu0 0.0
  %2701 = vmatpush2.msra.mxu0 0.0
  %2702 = vmatprep.subr.mxu0 0.0
  %2703 = vmatpush2.msra.mxu0 0.0
  %2704 = vmatprep.subr.mxu0 0.0
  %2705 = vmatpush2.msra.mxu0 0.0
  %2706 = vmatprep.subr.mxu0 0.0
  %2707 = vmatpush2.msra.mxu0 0.0
  %2708 = vmatprep.subr.mxu0 0.0
  %2709 = vmatpush2.msra.mxu0 0.0
  %2710 = vmatprep.subr.mxu0 0.0
  %2711 = vmatpush2.msra.mxu0 0.0
  %2712 = vmatprep.subr.mxu0 0.0
  %2713 = vmatpush2.msra.mxu0 0.0
  %2714 = vmatprep.subr.mxu0 0.0
  %2715 = vmatpush2.msra.mxu0 0.0
  %2716 = vmatprep.subr.mxu0 0.0
  %2717 = vmatpush2.msra.mxu0 0.0
  %2718 = vmatprep.subr.mxu0 0.0
  %2719 = vmatpush2.msra.mxu0 0.0
  %2720 = vmatprep.subr.mxu0 0.0
  %2721 = vmatpush2.msra.mxu0 0.0
  %2722 = vmatprep.subr.mxu0 0.0
  %2723 = vmatpush2.msra.mxu0 0.0
  %2724 = vmatprep.subr.mxu0 0.0
  %2725 = vmatpush2.msra.mxu0 0.0
  %2726 = vmatprep.mubr.f32.mxu0 0.0
  %2727 = vmatmul.mubr.f32.gmra.mxu0 %v2637
  %v2728 = vpop.f32.mrf.mxu0
  %v2729 = vadd.f32 0.0, %v2728
  %v2730 = vpop.f32.mrf.mxu0
  %2731 = vmatprep.mubr.f32.mxu0 0.0
  %2732 = vmatmul.mubr.f32.gmra.mxu0 %v2642
  %v2733 = vpop.f32.mrf.mxu0
  %v2734 = vadd.f32 0.0, %v2733
  %v2735 = vpop.f32.mrf.mxu0
  %2736 = vdwg.mxu0
  %v2737 = vadd.f32 %v2559, %v2729
  %v2738 = vadd.f32 %v2560, %v2734
  %vm2739 = vcmp.gt.f32.partialorder %v2737, 0.0
  %vm2740 = vcmp.gt.f32.partialorder %v2738, 0.0
  %v2741 = vmul.f32 %v2737, 0.01
  %v2742 = vmul.f32 %v2738, 0.01
  %v2743 = vsel %vm2739, %v2737, %v2741
  %v2744 = vsel %vm2740, %v2738, %v2742
  %v2745 = vld [vmem:[%s16] sm:$0x1]
  %v2746 = vld [vmem:[%s4] sm:$0xff]
  %vm2747 = vcmask 130048
  %v2749 = vsel %vm2747, %v2746, 0
  %2751 = vmatprep.subr.mxu0 0.0
  %2752 = vmatpush1.msra.mxu0 0.0
  %2753 = vmatprep.subr.mxu0 0.0
  %2754 = vmatpush1.msra.mxu0 0.0
  %2755 = vmatprep.subr.mxu0 0.0
  %2756 = vmatpush1.msra.mxu0 0.0
  %2757 = vmatprep.subr.mxu0 0.0
  %2758 = vmatpush1.msra.mxu0 0.0
  %2759 = vmatprep.subr.mxu0 0.0
  %2760 = vmatpush1.msra.mxu0 0.0
  %2761 = vmatprep.subr.mxu0 0.0
  %2762 = vmatpush1.msra.mxu0 0.0
  %2763 = vmatprep.subr.mxu0 0.0
  %2764 = vmatpush1.msra.mxu0 0.0
  %2765 = vmatprep.subr.mxu0 0.0
  %2766 = vmatpush1.msra.mxu0 0.0
  %2767 = vmatprep.subr.mxu0 0.0
  %2768 = vmatpush1.msra.mxu0 0.0
  %2769 = vmatprep.subr.mxu0 0.0
  %2770 = vmatpush1.msra.mxu0 0.0
  %2771 = vmatprep.subr.mxu0 0.0
  %2772 = vmatpush1.msra.mxu0 0.0
  %2773 = vmatprep.subr.mxu0 0.0
  %2774 = vmatpush1.msra.mxu0 0.0
  %2775 = vmatprep.subr.mxu0 0.0
  %2776 = vmatpush1.msra.mxu0 0.0
  %2777 = vmatprep.subr.mxu0 0.0
  %2778 = vmatpush1.msra.mxu0 0.0
  %2779 = vmatprep.subr.mxu0 0.0
  %2780 = vmatpush1.msra.mxu0 %v2744
  %2781 = vmatprep.subr.mxu0 0.0
  %2782 = vmatpush1.msra.mxu0 %v2743
  %2783 = vmatprep.subr.mxu0 0.0
  %2784 = vmatpush2.msra.mxu0 0.0
  %2785 = vmatprep.subr.mxu0 0.0
  %2786 = vmatpush2.msra.mxu0 0.0
  %2787 = vmatprep.subr.mxu0 0.0
  %2788 = vmatpush2.msra.mxu0 0.0
  %2789 = vmatprep.subr.mxu0 0.0
  %2790 = vmatpush2.msra.mxu0 0.0
  %2791 = vmatprep.subr.mxu0 0.0
  %2792 = vmatpush2.msra.mxu0 0.0
  %2793 = vmatprep.subr.mxu0 0.0
  %2794 = vmatpush2.msra.mxu0 0.0
  %2795 = vmatprep.subr.mxu0 0.0
  %2796 = vmatpush2.msra.mxu0 0.0
  %2797 = vmatprep.subr.mxu0 0.0
  %2798 = vmatpush2.msra.mxu0 0.0
  %2799 = vmatprep.subr.mxu0 0.0
  %2800 = vmatpush2.msra.mxu0 0.0
  %2801 = vmatprep.subr.mxu0 0.0
  %2802 = vmatpush2.msra.mxu0 0.0
  %2803 = vmatprep.subr.mxu0 0.0
  %2804 = vmatpush2.msra.mxu0 0.0
  %2805 = vmatprep.subr.mxu0 0.0
  %2806 = vmatpush2.msra.mxu0 0.0
  %2807 = vmatprep.subr.mxu0 0.0
  %2808 = vmatpush2.msra.mxu0 0.0
  %2809 = vmatprep.subr.mxu0 0.0
  %2810 = vmatpush2.msra.mxu0 0.0
  %2811 = vmatprep.subr.mxu0 0.0
  %2812 = vmatpush2.msra.mxu0 0.0
  %2813 = vmatprep.subr.mxu0 0.0
  %2814 = vmatpush2.msra.mxu0 0.0
  %2815 = vmatprep.mubr.f32.mxu0 0.0
  %2816 = vmatmul.mubr.f32.gmra.mxu0 %v2749
  %v2817 = vpop.f32.mrf.mxu0
  %v2818 = vadd.f32 0.0, %v2817
  %v2819 = vpop.f32.mrf.mxu0
  %2820 = vdwg.mxu0
  %v2821 = vld [vmem:[%s10] sm:$0xff]
  %v2822 = vld [vmem:[%s10 + $0x8] sm:$0xff]
  %v2823 = vld [vmem:[%s10 + $0x10] sm:$0xff]
  %v2824 = vld [vmem:[%s10 + $0x18] sm:$0xff]
  %v2825 = vld [vmem:[%s10 + $0x20] sm:$0xff]
  %v2826 = vld [vmem:[%s10 + $0x28] sm:$0xff]
  %v2827 = vld [vmem:[%s10 + $0x30] sm:$0xff]
  %v2828 = vld [vmem:[%s10 + $0x38] sm:$0xff]
  %v2829 = vld [vmem:[%s10 + $0x40] sm:$0xff]
  %v2830 = vld [vmem:[%s10 + $0x48] sm:$0xff]
  %v2831 = vld [vmem:[%s10 + $0x50] sm:$0xff]
  %v2832 = vld [vmem:[%s10 + $0x58] sm:$0xff]
  %v2833 = vld [vmem:[%s10 + $0x60] sm:$0xff]
  %v2834 = vld [vmem:[%s10 + $0x68] sm:$0xff]
  %v2835 = vld [vmem:[%s10 + $0x70] sm:$0xff]
  %v2836 = vld [vmem:[%s10 + $0x78] sm:$0xff]
  %2837 = vmatprep.subr.mxu0 0.0
  %2838 = vmatpush1.msra.mxu0 %v2836
  %2839 = vmatprep.subr.mxu0 0.0
  %2840 = vmatpush1.msra.mxu0 %v2835
  %2841 = vmatprep.subr.mxu0 0.0
  %2842 = vmatpush1.msra.mxu0 %v2834
  %2843 = vmatprep.subr.mxu0 0.0
  %2844 = vmatpush1.msra.mxu0 %v2833
  %2845 = vmatprep.subr.mxu0 0.0
  %2846 = vmatpush1.msra.mxu0 %v2832
  %2847 = vmatprep.subr.mxu0 0.0
  %2848 = vmatpush1.msra.mxu0 %v2831
  %2849 = vmatprep.subr.mxu0 0.0
  %2850 = vmatpush1.msra.mxu0 %v2830
  %2851 = vmatprep.subr.mxu0 0.0
  %2852 = vmatpush1.msra.mxu0 %v2829
  %2853 = vmatprep.subr.mxu0 0.0
  %2854 = vmatpush1.msra.mxu0 %v2828
  %2855 = vmatprep.subr.mxu0 0.0
  %2856 = vmatpush1.msra.mxu0 %v2827
  %2857 = vmatprep.subr.mxu0 0.0
  %2858 = vmatpush1.msra.mxu0 %v2826
  %2859 = vmatprep.subr.mxu0 0.0
  %2860 = vmatpush1.msra.mxu0 %v2825
  %2861 = vmatprep.subr.mxu0 0.0
  %2862 = vmatpush1.msra.mxu0 %v2824
  %2863 = vmatprep.subr.mxu0 0.0
  %2864 = vmatpush1.msra.mxu0 %v2823
  %2865 = vmatprep.subr.mxu0 0.0
  %2866 = vmatpush1.msra.mxu0 %v2822
  %2867 = vmatprep.subr.mxu0 0.0
  %2868 = vmatpush1.msra.mxu0 %v2821
  %2869 = vmatprep.subr.mxu0 0.0
  %2870 = vmatpush2.msra.mxu0 0.0
  %2871 = vmatprep.subr.mxu0 0.0
  %2872 = vmatpush2.msra.mxu0 0.0
  %2873 = vmatprep.subr.mxu0 0.0
  %2874 = vmatpush2.msra.mxu0 0.0
  %2875 = vmatprep.subr.mxu0 0.0
  %2876 = vmatpush2.msra.mxu0 0.0
  %2877 = vmatprep.subr.mxu0 0.0
  %2878 = vmatpush2.msra.mxu0 0.0
  %2879 = vmatprep.subr.mxu0 0.0
  %2880 = vmatpush2.msra.mxu0 0.0
  %2881 = vmatprep.subr.mxu0 0.0
  %2882 = vmatpush2.msra.mxu0 0.0
  %2883 = vmatprep.subr.mxu0 0.0
  %2884 = vmatpush2.msra.mxu0 0.0
  %2885 = vmatprep.subr.mxu0 0.0
  %2886 = vmatpush2.msra.mxu0 0.0
  %2887 = vmatprep.subr.mxu0 0.0
  %2888 = vmatpush2.msra.mxu0 0.0
  %2889 = vmatprep.subr.mxu0 0.0
  %2890 = vmatpush2.msra.mxu0 0.0
  %2891 = vmatprep.subr.mxu0 0.0
  %2892 = vmatpush2.msra.mxu0 0.0
  %2893 = vmatprep.subr.mxu0 0.0
  %2894 = vmatpush2.msra.mxu0 0.0
  %2895 = vmatprep.subr.mxu0 0.0
  %2896 = vmatpush2.msra.mxu0 0.0
  %2897 = vmatprep.subr.mxu0 0.0
  %2898 = vmatpush2.msra.mxu0 0.0
  %2899 = vmatprep.subr.mxu0 0.0
  %2900 = vmatpush2.msra.mxu0 0.0
  %2901 = vmatprep.mubr.f32.mxu0 0.0
  %2902 = vmatmul.mubr.f32.gmra.mxu0 %v2818
  %v2903 = vpop.f32.mrf.mxu0
  %v2904 = vadd.f32 0.0, %v2903
  %v2905 = vpop.f32.mrf.mxu0
  %2906 = vdwg.mxu0
  %v2908 = vlaneseq
  %v2909 = vshrl.u32 %v2908, 7
  %v2910 = vsub.s32 0, %v2909
  %v2911 = vrot.slane %v2745, %v2910
  %v2913 = vadd.f32 %v2911, %v2904
  %s2914 = scalar_lea.vmem %s4, 8
  %v2915 = vld [vmem:[%s2914] sm:$0xff]
  %v2917 = vsel %vm2747, %v2915, 0
  %2919 = vmatprep.subr.mxu0 0.0
  %2920 = vmatpush1.msra.mxu0 0.0
  %2921 = vmatprep.subr.mxu0 0.0
  %2922 = vmatpush1.msra.mxu0 0.0
  %2923 = vmatprep.subr.mxu0 0.0
  %2924 = vmatpush1.msra.mxu0 0.0
  %2925 = vmatprep.subr.mxu0 0.0
  %2926 = vmatpush1.msra.mxu0 0.0
  %2927 = vmatprep.subr.mxu0 0.0
  %2928 = vmatpush1.msra.mxu0 0.0
  %2929 = vmatprep.subr.mxu0 0.0
  %2930 = vmatpush1.msra.mxu0 0.0
  %2931 = vmatprep.subr.mxu0 0.0
  %2932 = vmatpush1.msra.mxu0 0.0
  %2933 = vmatprep.subr.mxu0 0.0
  %2934 = vmatpush1.msra.mxu0 0.0
  %2935 = vmatprep.subr.mxu0 0.0
  %2936 = vmatpush1.msra.mxu0 0.0
  %2937 = vmatprep.subr.mxu0 0.0
  %2938 = vmatpush1.msra.mxu0 0.0
  %2939 = vmatprep.subr.mxu0 0.0
  %2940 = vmatpush1.msra.mxu0 0.0
  %2941 = vmatprep.subr.mxu0 0.0
  %2942 = vmatpush1.msra.mxu0 0.0
  %2943 = vmatprep.subr.mxu0 0.0
  %2944 = vmatpush1.msra.mxu0 0.0
  %2945 = vmatprep.subr.mxu0 0.0
  %2946 = vmatpush1.msra.mxu0 0.0
  %2947 = vmatprep.subr.mxu0 0.0
  %2948 = vmatpush1.msra.mxu0 %v2744
  %2949 = vmatprep.subr.mxu0 0.0
  %2950 = vmatpush1.msra.mxu0 %v2743
  %2951 = vmatprep.subr.mxu0 0.0
  %2952 = vmatpush2.msra.mxu0 0.0
  %2953 = vmatprep.subr.mxu0 0.0
  %2954 = vmatpush2.msra.mxu0 0.0
  %2955 = vmatprep.subr.mxu0 0.0
  %2956 = vmatpush2.msra.mxu0 0.0
  %2957 = vmatprep.subr.mxu0 0.0
  %2958 = vmatpush2.msra.mxu0 0.0
  %2959 = vmatprep.subr.mxu0 0.0
  %2960 = vmatpush2.msra.mxu0 0.0
  %2961 = vmatprep.subr.mxu0 0.0
  %2962 = vmatpush2.msra.mxu0 0.0
  %2963 = vmatprep.subr.mxu0 0.0
  %2964 = vmatpush2.msra.mxu0 0.0
  %2965 = vmatprep.subr.mxu0 0.0
  %2966 = vmatpush2.msra.mxu0 0.0
  %2967 = vmatprep.subr.mxu0 0.0
  %2968 = vmatpush2.msra.mxu0 0.0
  %2969 = vmatprep.subr.mxu0 0.0
  %2970 = vmatpush2.msra.mxu0 0.0
  %2971 = vmatprep.subr.mxu0 0.0
  %2972 = vmatpush2.msra.mxu0 0.0
  %2973 = vmatprep.subr.mxu0 0.0
  %2974 = vmatpush2.msra.mxu0 0.0
  %2975 = vmatprep.subr.mxu0 0.0
  %2976 = vmatpush2.msra.mxu0 0.0
  %2977 = vmatprep.subr.mxu0 0.0
  %2978 = vmatpush2.msra.mxu0 0.0
  %2979 = vmatprep.subr.mxu0 0.0
  %2980 = vmatpush2.msra.mxu0 0.0
  %2981 = vmatprep.subr.mxu0 0.0
  %2982 = vmatpush2.msra.mxu0 0.0
  %2983 = vmatprep.mubr.f32.mxu0 0.0
  %2984 = vmatmul.mubr.f32.gmra.mxu0 %v2917
  %v2985 = vpop.f32.mrf.mxu0
  %v2986 = vadd.f32 0.0, %v2985
  %v2987 = vpop.f32.mrf.mxu0
  %2988 = vdwg.mxu0
  %s2989 = scalar_lea.vmem %s10, 128
  %v2990 = vld [vmem:[%s2989] sm:$0xff]
  %v2991 = vld [vmem:[%s2989 + $0x8] sm:$0xff]
  %v2992 = vld [vmem:[%s2989 + $0x10] sm:$0xff]
  %v2993 = vld [vmem:[%s2989 + $0x18] sm:$0xff]
  %v2994 = vld [vmem:[%s2989 + $0x20] sm:$0xff]
  %v2995 = vld [vmem:[%s2989 + $0x28] sm:$0xff]
  %v2996 = vld [vmem:[%s2989 + $0x30] sm:$0xff]
  %v2997 = vld [vmem:[%s2989 + $0x38] sm:$0xff]
  %v2998 = vld [vmem:[%s2989 + $0x40] sm:$0xff]
  %v2999 = vld [vmem:[%s2989 + $0x48] sm:$0xff]
  %v3000 = vld [vmem:[%s2989 + $0x50] sm:$0xff]
  %v3001 = vld [vmem:[%s2989 + $0x58] sm:$0xff]
  %v3002 = vld [vmem:[%s2989 + $0x60] sm:$0xff]
  %v3003 = vld [vmem:[%s2989 + $0x68] sm:$0xff]
  %v3004 = vld [vmem:[%s2989 + $0x70] sm:$0xff]
  %v3005 = vld [vmem:[%s2989 + $0x78] sm:$0xff]
  %3006 = vmatprep.subr.mxu0 0.0
  %3007 = vmatpush1.msra.mxu0 %v3005
  %3008 = vmatprep.subr.mxu0 0.0
  %3009 = vmatpush1.msra.mxu0 %v3004
  %3010 = vmatprep.subr.mxu0 0.0
  %3011 = vmatpush1.msra.mxu0 %v3003
  %3012 = vmatprep.subr.mxu0 0.0
  %3013 = vmatpush1.msra.mxu0 %v3002
  %3014 = vmatprep.subr.mxu0 0.0
  %3015 = vmatpush1.msra.mxu0 %v3001
  %3016 = vmatprep.subr.mxu0 0.0
  %3017 = vmatpush1.msra.mxu0 %v3000
  %3018 = vmatprep.subr.mxu0 0.0
  %3019 = vmatpush1.msra.mxu0 %v2999
  %3020 = vmatprep.subr.mxu0 0.0
  %3021 = vmatpush1.msra.mxu0 %v2998
  %3022 = vmatprep.subr.mxu0 0.0
  %3023 = vmatpush1.msra.mxu0 %v2997
  %3024 = vmatprep.subr.mxu0 0.0
  %3025 = vmatpush1.msra.mxu0 %v2996
  %3026 = vmatprep.subr.mxu0 0.0
  %3027 = vmatpush1.msra.mxu0 %v2995
  %3028 = vmatprep.subr.mxu0 0.0
  %3029 = vmatpush1.msra.mxu0 %v2994
  %3030 = vmatprep.subr.mxu0 0.0
  %3031 = vmatpush1.msra.mxu0 %v2993
  %3032 = vmatprep.subr.mxu0 0.0
  %3033 = vmatpush1.msra.mxu0 %v2992
  %3034 = vmatprep.subr.mxu0 0.0
  %3035 = vmatpush1.msra.mxu0 %v2991
  %3036 = vmatprep.subr.mxu0 0.0
  %3037 = vmatpush1.msra.mxu0 %v2990
  %3038 = vmatprep.subr.mxu0 0.0
  %3039 = vmatpush2.msra.mxu0 0.0
  %3040 = vmatprep.subr.mxu0 0.0
  %3041 = vmatpush2.msra.mxu0 0.0
  %3042 = vmatprep.subr.mxu0 0.0
  %3043 = vmatpush2.msra.mxu0 0.0
  %3044 = vmatprep.subr.mxu0 0.0
  %3045 = vmatpush2.msra.mxu0 0.0
  %3046 = vmatprep.subr.mxu0 0.0
  %3047 = vmatpush2.msra.mxu0 0.0
  %3048 = vmatprep.subr.mxu0 0.0
  %3049 = vmatpush2.msra.mxu0 0.0
  %3050 = vmatprep.subr.mxu0 0.0
  %3051 = vmatpush2.msra.mxu0 0.0
  %3052 = vmatprep.subr.mxu0 0.0
  %3053 = vmatpush2.msra.mxu0 0.0
  %3054 = vmatprep.subr.mxu0 0.0
  %3055 = vmatpush2.msra.mxu0 0.0
  %3056 = vmatprep.subr.mxu0 0.0
  %3057 = vmatpush2.msra.mxu0 0.0
  %3058 = vmatprep.subr.mxu0 0.0
  %3059 = vmatpush2.msra.mxu0 0.0
  %3060 = vmatprep.subr.mxu0 0.0
  %3061 = vmatpush2.msra.mxu0 0.0
  %3062 = vmatprep.subr.mxu0 0.0
  %3063 = vmatpush2.msra.mxu0 0.0
  %3064 = vmatprep.subr.mxu0 0.0
  %3065 = vmatpush2.msra.mxu0 0.0
  %3066 = vmatprep.subr.mxu0 0.0
  %3067 = vmatpush2.msra.mxu0 0.0
  %3068 = vmatprep.subr.mxu0 0.0
  %3069 = vmatpush2.msra.mxu0 0.0
  %3070 = vmatprep.mubr.f32.mxu0 0.0
  %3071 = vmatmul.mubr.f32.gmra.mxu0 %v2986
  %v3072 = vpop.f32.mrf.mxu0
  %v3073 = vadd.f32 0.0, %v3072
  %v3074 = vpop.f32.mrf.mxu0
  %3075 = vdwg.mxu0
  %v3076 = vadd.f32 %v2913, %v3073
  %s3077 = scalar_lea.vmem %s4, 16
  %v3078 = vld [vmem:[%s3077] sm:$0xff]
  %v3080 = vsel %vm2747, %v3078, 0
  %3082 = vmatprep.subr.mxu0 0.0
  %3083 = vmatpush1.msra.mxu0 0.0
  %3084 = vmatprep.subr.mxu0 0.0
  %3085 = vmatpush1.msra.mxu0 0.0
  %3086 = vmatprep.subr.mxu0 0.0
  %3087 = vmatpush1.msra.mxu0 0.0
  %3088 = vmatprep.subr.mxu0 0.0
  %3089 = vmatpush1.msra.mxu0 0.0
  %3090 = vmatprep.subr.mxu0 0.0
  %3091 = vmatpush1.msra.mxu0 0.0
  %3092 = vmatprep.subr.mxu0 0.0
  %3093 = vmatpush1.msra.mxu0 0.0
  %3094 = vmatprep.subr.mxu0 0.0
  %3095 = vmatpush1.msra.mxu0 0.0
  %3096 = vmatprep.subr.mxu0 0.0
  %3097 = vmatpush1.msra.mxu0 0.0
  %3098 = vmatprep.subr.mxu0 0.0
  %3099 = vmatpush1.msra.mxu0 0.0
  %3100 = vmatprep.subr.mxu0 0.0
  %3101 = vmatpush1.msra.mxu0 0.0
  %3102 = vmatprep.subr.mxu0 0.0
  %3103 = vmatpush1.msra.mxu0 0.0
  %3104 = vmatprep.subr.mxu0 0.0
  %3105 = vmatpush1.msra.mxu0 0.0
  %3106 = vmatprep.subr.mxu0 0.0
  %3107 = vmatpush1.msra.mxu0 0.0
  %3108 = vmatprep.subr.mxu0 0.0
  %3109 = vmatpush1.msra.mxu0 0.0
  %3110 = vmatprep.subr.mxu0 0.0
  %3111 = vmatpush1.msra.mxu0 %v2744
  %3112 = vmatprep.subr.mxu0 0.0
  %3113 = vmatpush1.msra.mxu0 %v2743
  %3114 = vmatprep.subr.mxu0 0.0
  %3115 = vmatpush2.msra.mxu0 0.0
  %3116 = vmatprep.subr.mxu0 0.0
  %3117 = vmatpush2.msra.mxu0 0.0
  %3118 = vmatprep.subr.mxu0 0.0
  %3119 = vmatpush2.msra.mxu0 0.0
  %3120 = vmatprep.subr.mxu0 0.0
  %3121 = vmatpush2.msra.mxu0 0.0
  %3122 = vmatprep.subr.mxu0 0.0
  %3123 = vmatpush2.msra.mxu0 0.0
  %3124 = vmatprep.subr.mxu0 0.0
  %3125 = vmatpush2.msra.mxu0 0.0
  %3126 = vmatprep.subr.mxu0 0.0
  %3127 = vmatpush2.msra.mxu0 0.0
  %3128 = vmatprep.subr.mxu0 0.0
  %3129 = vmatpush2.msra.mxu0 0.0
  %3130 = vmatprep.subr.mxu0 0.0
  %3131 = vmatpush2.msra.mxu0 0.0
  %3132 = vmatprep.subr.mxu0 0.0
  %3133 = vmatpush2.msra.mxu0 0.0
  %3134 = vmatprep.subr.mxu0 0.0
  %3135 = vmatpush2.msra.mxu0 0.0
  %3136 = vmatprep.subr.mxu0 0.0
  %3137 = vmatpush2.msra.mxu0 0.0
  %3138 = vmatprep.subr.mxu0 0.0
  %3139 = vmatpush2.msra.mxu0 0.0
  %3140 = vmatprep.subr.mxu0 0.0
  %3141 = vmatpush2.msra.mxu0 0.0
  %3142 = vmatprep.subr.mxu0 0.0
  %3143 = vmatpush2.msra.mxu0 0.0
  %3144 = vmatprep.subr.mxu0 0.0
  %3145 = vmatpush2.msra.mxu0 0.0
  %3146 = vmatprep.mubr.f32.mxu0 0.0
  %3147 = vmatmul.mubr.f32.gmra.mxu0 %v3080
  %v3148 = vpop.f32.mrf.mxu0
  %v3149 = vadd.f32 0.0, %v3148
  %v3150 = vpop.f32.mrf.mxu0
  %3151 = vdwg.mxu0
  %s3152 = scalar_lea.vmem %s10, 256
  %v3153 = vld [vmem:[%s3152] sm:$0xff]
  %v3154 = vld [vmem:[%s3152 + $0x8] sm:$0xff]
  %v3155 = vld [vmem:[%s3152 + $0x10] sm:$0xff]
  %v3156 = vld [vmem:[%s3152 + $0x18] sm:$0xff]
  %v3157 = vld [vmem:[%s3152 + $0x20] sm:$0xff]
  %v3158 = vld [vmem:[%s3152 + $0x28] sm:$0xff]
  %v3159 = vld [vmem:[%s3152 + $0x30] sm:$0xff]
  %v3160 = vld [vmem:[%s3152 + $0x38] sm:$0xff]
  %v3161 = vld [vmem:[%s3152 + $0x40] sm:$0xff]
  %v3162 = vld [vmem:[%s3152 + $0x48] sm:$0xff]
  %v3163 = vld [vmem:[%s3152 + $0x50] sm:$0xff]
  %v3164 = vld [vmem:[%s3152 + $0x58] sm:$0xff]
  %v3165 = vld [vmem:[%s3152 + $0x60] sm:$0xff]
  %v3166 = vld [vmem:[%s3152 + $0x68] sm:$0xff]
  %v3167 = vld [vmem:[%s3152 + $0x70] sm:$0xff]
  %v3168 = vld [vmem:[%s3152 + $0x78] sm:$0xff]
  %3169 = vmatprep.subr.mxu0 0.0
  %3170 = vmatpush1.msra.mxu0 %v3168
  %3171 = vmatprep.subr.mxu0 0.0
  %3172 = vmatpush1.msra.mxu0 %v3167
  %3173 = vmatprep.subr.mxu0 0.0
  %3174 = vmatpush1.msra.mxu0 %v3166
  %3175 = vmatprep.subr.mxu0 0.0
  %3176 = vmatpush1.msra.mxu0 %v3165
  %3177 = vmatprep.subr.mxu0 0.0
  %3178 = vmatpush1.msra.mxu0 %v3164
  %3179 = vmatprep.subr.mxu0 0.0
  %3180 = vmatpush1.msra.mxu0 %v3163
  %3181 = vmatprep.subr.mxu0 0.0
  %3182 = vmatpush1.msra.mxu0 %v3162
  %3183 = vmatprep.subr.mxu0 0.0
  %3184 = vmatpush1.msra.mxu0 %v3161
  %3185 = vmatprep.subr.mxu0 0.0
  %3186 = vmatpush1.msra.mxu0 %v3160
  %3187 = vmatprep.subr.mxu0 0.0
  %3188 = vmatpush1.msra.mxu0 %v3159
  %3189 = vmatprep.subr.mxu0 0.0
  %3190 = vmatpush1.msra.mxu0 %v3158
  %3191 = vmatprep.subr.mxu0 0.0
  %3192 = vmatpush1.msra.mxu0 %v3157
  %3193 = vmatprep.subr.mxu0 0.0
  %3194 = vmatpush1.msra.mxu0 %v3156
  %3195 = vmatprep.subr.mxu0 0.0
  %3196 = vmatpush1.msra.mxu0 %v3155
  %3197 = vmatprep.subr.mxu0 0.0
  %3198 = vmatpush1.msra.mxu0 %v3154
  %3199 = vmatprep.subr.mxu0 0.0
  %3200 = vmatpush1.msra.mxu0 %v3153
  %3201 = vmatprep.subr.mxu0 0.0
  %3202 = vmatpush2.msra.mxu0 0.0
  %3203 = vmatprep.subr.mxu0 0.0
  %3204 = vmatpush2.msra.mxu0 0.0
  %3205 = vmatprep.subr.mxu0 0.0
  %3206 = vmatpush2.msra.mxu0 0.0
  %3207 = vmatprep.subr.mxu0 0.0
  %3208 = vmatpush2.msra.mxu0 0.0
  %3209 = vmatprep.subr.mxu0 0.0
  %3210 = vmatpush2.msra.mxu0 0.0
  %3211 = vmatprep.subr.mxu0 0.0
  %3212 = vmatpush2.msra.mxu0 0.0
  %3213 = vmatprep.subr.mxu0 0.0
  %3214 = vmatpush2.msra.mxu0 0.0
  %3215 = vmatprep.subr.mxu0 0.0
  %3216 = vmatpush2.msra.mxu0 0.0
  %3217 = vmatprep.subr.mxu0 0.0
  %3218 = vmatpush2.msra.mxu0 0.0
  %3219 = vmatprep.subr.mxu0 0.0
  %3220 = vmatpush2.msra.mxu0 0.0
  %3221 = vmatprep.subr.mxu0 0.0
  %3222 = vmatpush2.msra.mxu0 0.0
  %3223 = vmatprep.subr.mxu0 0.0
  %3224 = vmatpush2.msra.mxu0 0.0
  %3225 = vmatprep.subr.mxu0 0.0
  %3226 = vmatpush2.msra.mxu0 0.0
  %3227 = vmatprep.subr.mxu0 0.0
  %3228 = vmatpush2.msra.mxu0 0.0
  %3229 = vmatprep.subr.mxu0 0.0
  %3230 = vmatpush2.msra.mxu0 0.0
  %3231 = vmatprep.subr.mxu0 0.0
  %3232 = vmatpush2.msra.mxu0 0.0
  %3233 = vmatprep.mubr.f32.mxu0 0.0
  %3234 = vmatmul.mubr.f32.gmra.mxu0 %v3149
  %v3235 = vpop.f32.mrf.mxu0
  %v3236 = vadd.f32 0.0, %v3235
  %v3237 = vpop.f32.mrf.mxu0
  %3238 = vdwg.mxu0
  %v3239 = vadd.f32 %v3076, %v3236
  %s3240 = scalar_lea.vmem %s4, 24
  %v3241 = vld [vmem:[%s3240] sm:$0xff]
  %v3243 = vsel %vm2747, %v3241, 0
  %3245 = vmatprep.subr.mxu0 0.0
  %3246 = vmatpush1.msra.mxu0 0.0
  %3247 = vmatprep.subr.mxu0 0.0
  %3248 = vmatpush1.msra.mxu0 0.0
  %3249 = vmatprep.subr.mxu0 0.0
  %3250 = vmatpush1.msra.mxu0 0.0
  %3251 = vmatprep.subr.mxu0 0.0
  %3252 = vmatpush1.msra.mxu0 0.0
  %3253 = vmatprep.subr.mxu0 0.0
  %3254 = vmatpush1.msra.mxu0 0.0
  %3255 = vmatprep.subr.mxu0 0.0
  %3256 = vmatpush1.msra.mxu0 0.0
  %3257 = vmatprep.subr.mxu0 0.0
  %3258 = vmatpush1.msra.mxu0 0.0
  %3259 = vmatprep.subr.mxu0 0.0
  %3260 = vmatpush1.msra.mxu0 0.0
  %3261 = vmatprep.subr.mxu0 0.0
  %3262 = vmatpush1.msra.mxu0 0.0
  %3263 = vmatprep.subr.mxu0 0.0
  %3264 = vmatpush1.msra.mxu0 0.0
  %3265 = vmatprep.subr.mxu0 0.0
  %3266 = vmatpush1.msra.mxu0 0.0
  %3267 = vmatprep.subr.mxu0 0.0
  %3268 = vmatpush1.msra.mxu0 0.0
  %3269 = vmatprep.subr.mxu0 0.0
  %3270 = vmatpush1.msra.mxu0 0.0
  %3271 = vmatprep.subr.mxu0 0.0
  %3272 = vmatpush1.msra.mxu0 0.0
  %3273 = vmatprep.subr.mxu0 0.0
  %3274 = vmatpush1.msra.mxu0 %v2744
  %3275 = vmatprep.subr.mxu0 0.0
  %3276 = vmatpush1.msra.mxu0 %v2743
  %3277 = vmatprep.subr.mxu0 0.0
  %3278 = vmatpush2.msra.mxu0 0.0
  %3279 = vmatprep.subr.mxu0 0.0
  %3280 = vmatpush2.msra.mxu0 0.0
  %3281 = vmatprep.subr.mxu0 0.0
  %3282 = vmatpush2.msra.mxu0 0.0
  %3283 = vmatprep.subr.mxu0 0.0
  %3284 = vmatpush2.msra.mxu0 0.0
  %3285 = vmatprep.subr.mxu0 0.0
  %3286 = vmatpush2.msra.mxu0 0.0
  %3287 = vmatprep.subr.mxu0 0.0
  %3288 = vmatpush2.msra.mxu0 0.0
  %3289 = vmatprep.subr.mxu0 0.0
  %3290 = vmatpush2.msra.mxu0 0.0
  %3291 = vmatprep.subr.mxu0 0.0
  %3292 = vmatpush2.msra.mxu0 0.0
  %3293 = vmatprep.subr.mxu0 0.0
  %3294 = vmatpush2.msra.mxu0 0.0
  %3295 = vmatprep.subr.mxu0 0.0
  %3296 = vmatpush2.msra.mxu0 0.0
  %3297 = vmatprep.subr.mxu0 0.0
  %3298 = vmatpush2.msra.mxu0 0.0
  %3299 = vmatprep.subr.mxu0 0.0
  %3300 = vmatpush2.msra.mxu0 0.0
  %3301 = vmatprep.subr.mxu0 0.0
  %3302 = vmatpush2.msra.mxu0 0.0
  %3303 = vmatprep.subr.mxu0 0.0
  %3304 = vmatpush2.msra.mxu0 0.0
  %3305 = vmatprep.subr.mxu0 0.0
  %3306 = vmatpush2.msra.mxu0 0.0
  %3307 = vmatprep.subr.mxu0 0.0
  %3308 = vmatpush2.msra.mxu0 0.0
  %3309 = vmatprep.mubr.f32.mxu0 0.0
  %3310 = vmatmul.mubr.f32.gmra.mxu0 %v3243
  %v3311 = vpop.f32.mrf.mxu0
  %v3312 = vadd.f32 0.0, %v3311
  %v3313 = vpop.f32.mrf.mxu0
  %3314 = vdwg.mxu0
  %s3315 = scalar_lea.vmem %s10, 384
  %v3316 = vld [vmem:[%s3315] sm:$0xff]
  %v3317 = vld [vmem:[%s3315 + $0x8] sm:$0xff]
  %v3318 = vld [vmem:[%s3315 + $0x10] sm:$0xff]
  %v3319 = vld [vmem:[%s3315 + $0x18] sm:$0xff]
  %v3320 = vld [vmem:[%s3315 + $0x20] sm:$0xff]
  %v3321 = vld [vmem:[%s3315 + $0x28] sm:$0xff]
  %v3322 = vld [vmem:[%s3315 + $0x30] sm:$0xff]
  %v3323 = vld [vmem:[%s3315 + $0x38] sm:$0xff]
  %v3324 = vld [vmem:[%s3315 + $0x40] sm:$0xff]
  %v3325 = vld [vmem:[%s3315 + $0x48] sm:$0xff]
  %v3326 = vld [vmem:[%s3315 + $0x50] sm:$0xff]
  %v3327 = vld [vmem:[%s3315 + $0x58] sm:$0xff]
  %v3328 = vld [vmem:[%s3315 + $0x60] sm:$0xff]
  %v3329 = vld [vmem:[%s3315 + $0x68] sm:$0xff]
  %v3330 = vld [vmem:[%s3315 + $0x70] sm:$0xff]
  %v3331 = vld [vmem:[%s3315 + $0x78] sm:$0xff]
  %3332 = vmatprep.subr.mxu0 0.0
  %3333 = vmatpush1.msra.mxu0 %v3331
  %3334 = vmatprep.subr.mxu0 0.0
  %3335 = vmatpush1.msra.mxu0 %v3330
  %3336 = vmatprep.subr.mxu0 0.0
  %3337 = vmatpush1.msra.mxu0 %v3329
  %3338 = vmatprep.subr.mxu0 0.0
  %3339 = vmatpush1.msra.mxu0 %v3328
  %3340 = vmatprep.subr.mxu0 0.0
  %3341 = vmatpush1.msra.mxu0 %v3327
  %3342 = vmatprep.subr.mxu0 0.0
  %3343 = vmatpush1.msra.mxu0 %v3326
  %3344 = vmatprep.subr.mxu0 0.0
  %3345 = vmatpush1.msra.mxu0 %v3325
  %3346 = vmatprep.subr.mxu0 0.0
  %3347 = vmatpush1.msra.mxu0 %v3324
  %3348 = vmatprep.subr.mxu0 0.0
  %3349 = vmatpush1.msra.mxu0 %v3323
  %3350 = vmatprep.subr.mxu0 0.0
  %3351 = vmatpush1.msra.mxu0 %v3322
  %3352 = vmatprep.subr.mxu0 0.0
  %3353 = vmatpush1.msra.mxu0 %v3321
  %3354 = vmatprep.subr.mxu0 0.0
  %3355 = vmatpush1.msra.mxu0 %v3320
  %3356 = vmatprep.subr.mxu0 0.0
  %3357 = vmatpush1.msra.mxu0 %v3319
  %3358 = vmatprep.subr.mxu0 0.0
  %3359 = vmatpush1.msra.mxu0 %v3318
  %3360 = vmatprep.subr.mxu0 0.0
  %3361 = vmatpush1.msra.mxu0 %v3317
  %3362 = vmatprep.subr.mxu0 0.0
  %3363 = vmatpush1.msra.mxu0 %v3316
  %3364 = vmatprep.subr.mxu0 0.0
  %3365 = vmatpush2.msra.mxu0 0.0
  %3366 = vmatprep.subr.mxu0 0.0
  %3367 = vmatpush2.msra.mxu0 0.0
  %3368 = vmatprep.subr.mxu0 0.0
  %3369 = vmatpush2.msra.mxu0 0.0
  %3370 = vmatprep.subr.mxu0 0.0
  %3371 = vmatpush2.msra.mxu0 0.0
  %3372 = vmatprep.subr.mxu0 0.0
  %3373 = vmatpush2.msra.mxu0 0.0
  %3374 = vmatprep.subr.mxu0 0.0
  %3375 = vmatpush2.msra.mxu0 0.0
  %3376 = vmatprep.subr.mxu0 0.0
  %3377 = vmatpush2.msra.mxu0 0.0
  %3378 = vmatprep.subr.mxu0 0.0
  %3379 = vmatpush2.msra.mxu0 0.0
  %3380 = vmatprep.subr.mxu0 0.0
  %3381 = vmatpush2.msra.mxu0 0.0
  %3382 = vmatprep.subr.mxu0 0.0
  %3383 = vmatpush2.msra.mxu0 0.0
  %3384 = vmatprep.subr.mxu0 0.0
  %3385 = vmatpush2.msra.mxu0 0.0
  %3386 = vmatprep.subr.mxu0 0.0
  %3387 = vmatpush2.msra.mxu0 0.0
  %3388 = vmatprep.subr.mxu0 0.0
  %3389 = vmatpush2.msra.mxu0 0.0
  %3390 = vmatprep.subr.mxu0 0.0
  %3391 = vmatpush2.msra.mxu0 0.0
  %3392 = vmatprep.subr.mxu0 0.0
  %3393 = vmatpush2.msra.mxu0 0.0
  %3394 = vmatprep.subr.mxu0 0.0
  %3395 = vmatpush2.msra.mxu0 0.0
  %3396 = vmatprep.mubr.f32.mxu0 0.0
  %3397 = vmatmul.mubr.f32.gmra.mxu0 %v3312
  %v3398 = vpop.f32.mrf.mxu0
  %v3399 = vadd.f32 0.0, %v3398
  %v3400 = vpop.f32.mrf.mxu0
  %3401 = vdwg.mxu0
  %v3402 = vadd.f32 %v3239, %v3399
  %vm3403 = vcmp.gt.f32.partialorder %v3402, 0.0
  %v3404 = vmul.f32 %v3402, 0.01
  %v3405 = vsel %vm3403, %v3402, %v3404
  %v3406 = vld [vmem:[%s17] sm:$0x1]
  %v3407 = vld [vmem:[%s5] sm:$0xf]
  %vm3408 = vcmask 64512
  %v3410 = vsel %vm3408, %v3407, 0
  %3412 = vmatprep.subr.mxu0 0.0
  %3413 = vmatpush1.msra.mxu0 0.0
  %3414 = vmatprep.subr.mxu0 0.0
  %3415 = vmatpush1.msra.mxu0 0.0
  %3416 = vmatprep.subr.mxu0 0.0
  %3417 = vmatpush1.msra.mxu0 0.0
  %3418 = vmatprep.subr.mxu0 0.0
  %3419 = vmatpush1.msra.mxu0 0.0
  %3420 = vmatprep.subr.mxu0 0.0
  %3421 = vmatpush1.msra.mxu0 0.0
  %3422 = vmatprep.subr.mxu0 0.0
  %3423 = vmatpush1.msra.mxu0 0.0
  %3424 = vmatprep.subr.mxu0 0.0
  %3425 = vmatpush1.msra.mxu0 0.0
  %3426 = vmatprep.subr.mxu0 0.0
  %3427 = vmatpush1.msra.mxu0 0.0
  %3428 = vmatprep.subr.mxu0 0.0
  %3429 = vmatpush1.msra.mxu0 0.0
  %3430 = vmatprep.subr.mxu0 0.0
  %3431 = vmatpush1.msra.mxu0 0.0
  %3432 = vmatprep.subr.mxu0 0.0
  %3433 = vmatpush1.msra.mxu0 0.0
  %3434 = vmatprep.subr.mxu0 0.0
  %3435 = vmatpush1.msra.mxu0 0.0
  %3436 = vmatprep.subr.mxu0 0.0
  %3437 = vmatpush1.msra.mxu0 0.0
  %3438 = vmatprep.subr.mxu0 0.0
  %3439 = vmatpush1.msra.mxu0 0.0
  %3440 = vmatprep.subr.mxu0 0.0
  %3441 = vmatpush1.msra.mxu0 0.0
  %3442 = vmatprep.subr.mxu0 0.0
  %3443 = vmatpush1.msra.mxu0 %v3405
  %3444 = vmatprep.subr.mxu0 0.0
  %3445 = vmatpush2.msra.mxu0 0.0
  %3446 = vmatprep.subr.mxu0 0.0
  %3447 = vmatpush2.msra.mxu0 0.0
  %3448 = vmatprep.subr.mxu0 0.0
  %3449 = vmatpush2.msra.mxu0 0.0
  %3450 = vmatprep.subr.mxu0 0.0
  %3451 = vmatpush2.msra.mxu0 0.0
  %3452 = vmatprep.subr.mxu0 0.0
  %3453 = vmatpush2.msra.mxu0 0.0
  %3454 = vmatprep.subr.mxu0 0.0
  %3455 = vmatpush2.msra.mxu0 0.0
  %3456 = vmatprep.subr.mxu0 0.0
  %3457 = vmatpush2.msra.mxu0 0.0
  %3458 = vmatprep.subr.mxu0 0.0
  %3459 = vmatpush2.msra.mxu0 0.0
  %3460 = vmatprep.subr.mxu0 0.0
  %3461 = vmatpush2.msra.mxu0 0.0
  %3462 = vmatprep.subr.mxu0 0.0
  %3463 = vmatpush2.msra.mxu0 0.0
  %3464 = vmatprep.subr.mxu0 0.0
  %3465 = vmatpush2.msra.mxu0 0.0
  %3466 = vmatprep.subr.mxu0 0.0
  %3467 = vmatpush2.msra.mxu0 0.0
  %3468 = vmatprep.subr.mxu0 0.0
  %3469 = vmatpush2.msra.mxu0 0.0
  %3470 = vmatprep.subr.mxu0 0.0
  %3471 = vmatpush2.msra.mxu0 0.0
  %3472 = vmatprep.subr.mxu0 0.0
  %3473 = vmatpush2.msra.mxu0 0.0
  %3474 = vmatprep.subr.mxu0 0.0
  %3475 = vmatpush2.msra.mxu0 0.0
  %3476 = vmatprep.mubr.f32.mxu0 0.0
  %3477 = vmatmul.mubr.f32.gmra.mxu0 %v3410
  %v3478 = vpop.f32.mrf.mxu0
  %v3479 = vadd.f32 0.0, %v3478
  %v3480 = vpop.f32.mrf.mxu0
  %3481 = vdwg.mxu0
  %v3482 = vld [vmem:[%s11] sm:$0xff]
  %v3483 = vld [vmem:[%s11 + $0x8] sm:$0xff]
  %v3484 = vld [vmem:[%s11 + $0x10] sm:$0xff]
  %v3485 = vld [vmem:[%s11 + $0x18] sm:$0xff]
  %v3486 = vld [vmem:[%s11 + $0x20] sm:$0xff]
  %v3487 = vld [vmem:[%s11 + $0x28] sm:$0xff]
  %v3488 = vld [vmem:[%s11 + $0x30] sm:$0xff]
  %v3489 = vld [vmem:[%s11 + $0x38] sm:$0xff]
  %v3490 = vld [vmem:[%s11 + $0x40] sm:$0xff]
  %v3491 = vld [vmem:[%s11 + $0x48] sm:$0xff]
  %v3492 = vld [vmem:[%s11 + $0x50] sm:$0xff]
  %v3493 = vld [vmem:[%s11 + $0x58] sm:$0xff]
  %v3494 = vld [vmem:[%s11 + $0x60] sm:$0xff]
  %v3495 = vld [vmem:[%s11 + $0x68] sm:$0xff]
  %v3496 = vld [vmem:[%s11 + $0x70] sm:$0xff]
  %v3497 = vld [vmem:[%s11 + $0x78] sm:$0xff]
  %3498 = vmatprep.subr.mxu0 0.0
  %3499 = vmatpush1.msra.mxu0 %v3497
  %3500 = vmatprep.subr.mxu0 0.0
  %3501 = vmatpush1.msra.mxu0 %v3496
  %3502 = vmatprep.subr.mxu0 0.0
  %3503 = vmatpush1.msra.mxu0 %v3495
  %3504 = vmatprep.subr.mxu0 0.0
  %3505 = vmatpush1.msra.mxu0 %v3494
  %3506 = vmatprep.subr.mxu0 0.0
  %3507 = vmatpush1.msra.mxu0 %v3493
  %3508 = vmatprep.subr.mxu0 0.0
  %3509 = vmatpush1.msra.mxu0 %v3492
  %3510 = vmatprep.subr.mxu0 0.0
  %3511 = vmatpush1.msra.mxu0 %v3491
  %3512 = vmatprep.subr.mxu0 0.0
  %3513 = vmatpush1.msra.mxu0 %v3490
  %3514 = vmatprep.subr.mxu0 0.0
  %3515 = vmatpush1.msra.mxu0 %v3489
  %3516 = vmatprep.subr.mxu0 0.0
  %3517 = vmatpush1.msra.mxu0 %v3488
  %3518 = vmatprep.subr.mxu0 0.0
  %3519 = vmatpush1.msra.mxu0 %v3487
  %3520 = vmatprep.subr.mxu0 0.0
  %3521 = vmatpush1.msra.mxu0 %v3486
  %3522 = vmatprep.subr.mxu0 0.0
  %3523 = vmatpush1.msra.mxu0 %v3485
  %3524 = vmatprep.subr.mxu0 0.0
  %3525 = vmatpush1.msra.mxu0 %v3484
  %3526 = vmatprep.subr.mxu0 0.0
  %3527 = vmatpush1.msra.mxu0 %v3483
  %3528 = vmatprep.subr.mxu0 0.0
  %3529 = vmatpush1.msra.mxu0 %v3482
  %3530 = vmatprep.subr.mxu0 0.0
  %3531 = vmatpush2.msra.mxu0 0.0
  %3532 = vmatprep.subr.mxu0 0.0
  %3533 = vmatpush2.msra.mxu0 0.0
  %3534 = vmatprep.subr.mxu0 0.0
  %3535 = vmatpush2.msra.mxu0 0.0
  %3536 = vmatprep.subr.mxu0 0.0
  %3537 = vmatpush2.msra.mxu0 0.0
  %3538 = vmatprep.subr.mxu0 0.0
  %3539 = vmatpush2.msra.mxu0 0.0
  %3540 = vmatprep.subr.mxu0 0.0
  %3541 = vmatpush2.msra.mxu0 0.0
  %3542 = vmatprep.subr.mxu0 0.0
  %3543 = vmatpush2.msra.mxu0 0.0
  %3544 = vmatprep.subr.mxu0 0.0
  %3545 = vmatpush2.msra.mxu0 0.0
  %3546 = vmatprep.subr.mxu0 0.0
  %3547 = vmatpush2.msra.mxu0 0.0
  %3548 = vmatprep.subr.mxu0 0.0
  %3549 = vmatpush2.msra.mxu0 0.0
  %3550 = vmatprep.subr.mxu0 0.0
  %3551 = vmatpush2.msra.mxu0 0.0
  %3552 = vmatprep.subr.mxu0 0.0
  %3553 = vmatpush2.msra.mxu0 0.0
  %3554 = vmatprep.subr.mxu0 0.0
  %3555 = vmatpush2.msra.mxu0 0.0
  %3556 = vmatprep.subr.mxu0 0.0
  %3557 = vmatpush2.msra.mxu0 0.0
  %3558 = vmatprep.subr.mxu0 0.0
  %3559 = vmatpush2.msra.mxu0 0.0
  %3560 = vmatprep.subr.mxu0 0.0
  %3561 = vmatpush2.msra.mxu0 0.0
  %3562 = vmatprep.mubr.f32.mxu0 0.0
  %3563 = vmatmul.mubr.f32.gmra.mxu0 %v3479
  %v3564 = vpop.f32.mrf.mxu0
  %v3565 = vadd.f32 0.0, %v3564
  %v3566 = vpop.f32.mrf.mxu0
  %3567 = vdwg.mxu0
  %v3569 = vlaneseq
  %v3570 = vshrl.u32 %v3569, 7
  %v3571 = vsub.s32 0, %v3570
  %v3572 = vrot.slane %v3406, %v3571
  %v3574 = vadd.f32 %v3572, %v3565
  %s3575 = scalar_lea.vmem %s5, 4
  %v3576 = vld [vmem:[%s3575] sm:$0xf]
  %v3578 = vsel %vm3408, %v3576, 0
  %3580 = vmatprep.subr.mxu0 0.0
  %3581 = vmatpush1.msra.mxu0 0.0
  %3582 = vmatprep.subr.mxu0 0.0
  %3583 = vmatpush1.msra.mxu0 0.0
  %3584 = vmatprep.subr.mxu0 0.0
  %3585 = vmatpush1.msra.mxu0 0.0
  %3586 = vmatprep.subr.mxu0 0.0
  %3587 = vmatpush1.msra.mxu0 0.0
  %3588 = vmatprep.subr.mxu0 0.0
  %3589 = vmatpush1.msra.mxu0 0.0
  %3590 = vmatprep.subr.mxu0 0.0
  %3591 = vmatpush1.msra.mxu0 0.0
  %3592 = vmatprep.subr.mxu0 0.0
  %3593 = vmatpush1.msra.mxu0 0.0
  %3594 = vmatprep.subr.mxu0 0.0
  %3595 = vmatpush1.msra.mxu0 0.0
  %3596 = vmatprep.subr.mxu0 0.0
  %3597 = vmatpush1.msra.mxu0 0.0
  %3598 = vmatprep.subr.mxu0 0.0
  %3599 = vmatpush1.msra.mxu0 0.0
  %3600 = vmatprep.subr.mxu0 0.0
  %3601 = vmatpush1.msra.mxu0 0.0
  %3602 = vmatprep.subr.mxu0 0.0
  %3603 = vmatpush1.msra.mxu0 0.0
  %3604 = vmatprep.subr.mxu0 0.0
  %3605 = vmatpush1.msra.mxu0 0.0
  %3606 = vmatprep.subr.mxu0 0.0
  %3607 = vmatpush1.msra.mxu0 0.0
  %3608 = vmatprep.subr.mxu0 0.0
  %3609 = vmatpush1.msra.mxu0 0.0
  %3610 = vmatprep.subr.mxu0 0.0
  %3611 = vmatpush1.msra.mxu0 %v3405
  %3612 = vmatprep.subr.mxu0 0.0
  %3613 = vmatpush2.msra.mxu0 0.0
  %3614 = vmatprep.subr.mxu0 0.0
  %3615 = vmatpush2.msra.mxu0 0.0
  %3616 = vmatprep.subr.mxu0 0.0
  %3617 = vmatpush2.msra.mxu0 0.0
  %3618 = vmatprep.subr.mxu0 0.0
  %3619 = vmatpush2.msra.mxu0 0.0
  %3620 = vmatprep.subr.mxu0 0.0
  %3621 = vmatpush2.msra.mxu0 0.0
  %3622 = vmatprep.subr.mxu0 0.0
  %3623 = vmatpush2.msra.mxu0 0.0
  %3624 = vmatprep.subr.mxu0 0.0
  %3625 = vmatpush2.msra.mxu0 0.0
  %3626 = vmatprep.subr.mxu0 0.0
  %3627 = vmatpush2.msra.mxu0 0.0
  %3628 = vmatprep.subr.mxu0 0.0
  %3629 = vmatpush2.msra.mxu0 0.0
  %3630 = vmatprep.subr.mxu0 0.0
  %3631 = vmatpush2.msra.mxu0 0.0
  %3632 = vmatprep.subr.mxu0 0.0
  %3633 = vmatpush2.msra.mxu0 0.0
  %3634 = vmatprep.subr.mxu0 0.0
  %3635 = vmatpush2.msra.mxu0 0.0
  %3636 = vmatprep.subr.mxu0 0.0
  %3637 = vmatpush2.msra.mxu0 0.0
  %3638 = vmatprep.subr.mxu0 0.0
  %3639 = vmatpush2.msra.mxu0 0.0
  %3640 = vmatprep.subr.mxu0 0.0
  %3641 = vmatpush2.msra.mxu0 0.0
  %3642 = vmatprep.subr.mxu0 0.0
  %3643 = vmatpush2.msra.mxu0 0.0
  %3644 = vmatprep.mubr.f32.mxu0 0.0
  %3645 = vmatmul.mubr.f32.gmra.mxu0 %v3578
  %v3646 = vpop.f32.mrf.mxu0
  %v3647 = vadd.f32 0.0, %v3646
  %v3648 = vpop.f32.mrf.mxu0
  %3649 = vdwg.mxu0
  %s3650 = scalar_lea.vmem %s11, 128
  %v3651 = vld [vmem:[%s3650] sm:$0xff]
  %v3652 = vld [vmem:[%s3650 + $0x8] sm:$0xff]
  %v3653 = vld [vmem:[%s3650 + $0x10] sm:$0xff]
  %v3654 = vld [vmem:[%s3650 + $0x18] sm:$0xff]
  %v3655 = vld [vmem:[%s3650 + $0x20] sm:$0xff]
  %v3656 = vld [vmem:[%s3650 + $0x28] sm:$0xff]
  %v3657 = vld [vmem:[%s3650 + $0x30] sm:$0xff]
  %v3658 = vld [vmem:[%s3650 + $0x38] sm:$0xff]
  %v3659 = vld [vmem:[%s3650 + $0x40] sm:$0xff]
  %v3660 = vld [vmem:[%s3650 + $0x48] sm:$0xff]
  %v3661 = vld [vmem:[%s3650 + $0x50] sm:$0xff]
  %v3662 = vld [vmem:[%s3650 + $0x58] sm:$0xff]
  %v3663 = vld [vmem:[%s3650 + $0x60] sm:$0xff]
  %v3664 = vld [vmem:[%s3650 + $0x68] sm:$0xff]
  %v3665 = vld [vmem:[%s3650 + $0x70] sm:$0xff]
  %v3666 = vld [vmem:[%s3650 + $0x78] sm:$0xff]
  %3667 = vmatprep.subr.mxu0 0.0
  %3668 = vmatpush1.msra.mxu0 %v3666
  %3669 = vmatprep.subr.mxu0 0.0
  %3670 = vmatpush1.msra.mxu0 %v3665
  %3671 = vmatprep.subr.mxu0 0.0
  %3672 = vmatpush1.msra.mxu0 %v3664
  %3673 = vmatprep.subr.mxu0 0.0
  %3674 = vmatpush1.msra.mxu0 %v3663
  %3675 = vmatprep.subr.mxu0 0.0
  %3676 = vmatpush1.msra.mxu0 %v3662
  %3677 = vmatprep.subr.mxu0 0.0
  %3678 = vmatpush1.msra.mxu0 %v3661
  %3679 = vmatprep.subr.mxu0 0.0
  %3680 = vmatpush1.msra.mxu0 %v3660
  %3681 = vmatprep.subr.mxu0 0.0
  %3682 = vmatpush1.msra.mxu0 %v3659
  %3683 = vmatprep.subr.mxu0 0.0
  %3684 = vmatpush1.msra.mxu0 %v3658
  %3685 = vmatprep.subr.mxu0 0.0
  %3686 = vmatpush1.msra.mxu0 %v3657
  %3687 = vmatprep.subr.mxu0 0.0
  %3688 = vmatpush1.msra.mxu0 %v3656
  %3689 = vmatprep.subr.mxu0 0.0
  %3690 = vmatpush1.msra.mxu0 %v3655
  %3691 = vmatprep.subr.mxu0 0.0
  %3692 = vmatpush1.msra.mxu0 %v3654
  %3693 = vmatprep.subr.mxu0 0.0
  %3694 = vmatpush1.msra.mxu0 %v3653
  %3695 = vmatprep.subr.mxu0 0.0
  %3696 = vmatpush1.msra.mxu0 %v3652
  %3697 = vmatprep.subr.mxu0 0.0
  %3698 = vmatpush1.msra.mxu0 %v3651
  %3699 = vmatprep.subr.mxu0 0.0
  %3700 = vmatpush2.msra.mxu0 0.0
  %3701 = vmatprep.subr.mxu0 0.0
  %3702 = vmatpush2.msra.mxu0 0.0
  %3703 = vmatprep.subr.mxu0 0.0
  %3704 = vmatpush2.msra.mxu0 0.0
  %3705 = vmatprep.subr.mxu0 0.0
  %3706 = vmatpush2.msra.mxu0 0.0
  %3707 = vmatprep.subr.mxu0 0.0
  %3708 = vmatpush2.msra.mxu0 0.0
  %3709 = vmatprep.subr.mxu0 0.0
  %3710 = vmatpush2.msra.mxu0 0.0
  %3711 = vmatprep.subr.mxu0 0.0
  %3712 = vmatpush2.msra.mxu0 0.0
  %3713 = vmatprep.subr.mxu0 0.0
  %3714 = vmatpush2.msra.mxu0 0.0
  %3715 = vmatprep.subr.mxu0 0.0
  %3716 = vmatpush2.msra.mxu0 0.0
  %3717 = vmatprep.subr.mxu0 0.0
  %3718 = vmatpush2.msra.mxu0 0.0
  %3719 = vmatprep.subr.mxu0 0.0
  %3720 = vmatpush2.msra.mxu0 0.0
  %3721 = vmatprep.subr.mxu0 0.0
  %3722 = vmatpush2.msra.mxu0 0.0
  %3723 = vmatprep.subr.mxu0 0.0
  %3724 = vmatpush2.msra.mxu0 0.0
  %3725 = vmatprep.subr.mxu0 0.0
  %3726 = vmatpush2.msra.mxu0 0.0
  %3727 = vmatprep.subr.mxu0 0.0
  %3728 = vmatpush2.msra.mxu0 0.0
  %3729 = vmatprep.subr.mxu0 0.0
  %3730 = vmatpush2.msra.mxu0 0.0
  %3731 = vmatprep.mubr.f32.mxu0 0.0
  %3732 = vmatmul.mubr.f32.gmra.mxu0 %v3647
  %v3733 = vpop.f32.mrf.mxu0
  %v3734 = vadd.f32 0.0, %v3733
  %v3735 = vpop.f32.mrf.mxu0
  %3736 = vdwg.mxu0
  %v3737 = vadd.f32 %v3574, %v3734
  %s3738 = scalar_lea.vmem %s5, 8
  %v3739 = vld [vmem:[%s3738] sm:$0xf]
  %v3741 = vsel %vm3408, %v3739, 0
  %3743 = vmatprep.subr.mxu0 0.0
  %3744 = vmatpush1.msra.mxu0 0.0
  %3745 = vmatprep.subr.mxu0 0.0
  %3746 = vmatpush1.msra.mxu0 0.0
  %3747 = vmatprep.subr.mxu0 0.0
  %3748 = vmatpush1.msra.mxu0 0.0
  %3749 = vmatprep.subr.mxu0 0.0
  %3750 = vmatpush1.msra.mxu0 0.0
  %3751 = vmatprep.subr.mxu0 0.0
  %3752 = vmatpush1.msra.mxu0 0.0
  %3753 = vmatprep.subr.mxu0 0.0
  %3754 = vmatpush1.msra.mxu0 0.0
  %3755 = vmatprep.subr.mxu0 0.0
  %3756 = vmatpush1.msra.mxu0 0.0
  %3757 = vmatprep.subr.mxu0 0.0
  %3758 = vmatpush1.msra.mxu0 0.0
  %3759 = vmatprep.subr.mxu0 0.0
  %3760 = vmatpush1.msra.mxu0 0.0
  %3761 = vmatprep.subr.mxu0 0.0
  %3762 = vmatpush1.msra.mxu0 0.0
  %3763 = vmatprep.subr.mxu0 0.0
  %3764 = vmatpush1.msra.mxu0 0.0
  %3765 = vmatprep.subr.mxu0 0.0
  %3766 = vmatpush1.msra.mxu0 0.0
  %3767 = vmatprep.subr.mxu0 0.0
  %3768 = vmatpush1.msra.mxu0 0.0
  %3769 = vmatprep.subr.mxu0 0.0
  %3770 = vmatpush1.msra.mxu0 0.0
  %3771 = vmatprep.subr.mxu0 0.0
  %3772 = vmatpush1.msra.mxu0 0.0
  %3773 = vmatprep.subr.mxu0 0.0
  %3774 = vmatpush1.msra.mxu0 %v3405
  %3775 = vmatprep.subr.mxu0 0.0
  %3776 = vmatpush2.msra.mxu0 0.0
  %3777 = vmatprep.subr.mxu0 0.0
  %3778 = vmatpush2.msra.mxu0 0.0
  %3779 = vmatprep.subr.mxu0 0.0
  %3780 = vmatpush2.msra.mxu0 0.0
  %3781 = vmatprep.subr.mxu0 0.0
  %3782 = vmatpush2.msra.mxu0 0.0
  %3783 = vmatprep.subr.mxu0 0.0
  %3784 = vmatpush2.msra.mxu0 0.0
  %3785 = vmatprep.subr.mxu0 0.0
  %3786 = vmatpush2.msra.mxu0 0.0
  %3787 = vmatprep.subr.mxu0 0.0
  %3788 = vmatpush2.msra.mxu0 0.0
  %3789 = vmatprep.subr.mxu0 0.0
  %3790 = vmatpush2.msra.mxu0 0.0
  %3791 = vmatprep.subr.mxu0 0.0
  %3792 = vmatpush2.msra.mxu0 0.0
  %3793 = vmatprep.subr.mxu0 0.0
  %3794 = vmatpush2.msra.mxu0 0.0
  %3795 = vmatprep.subr.mxu0 0.0
  %3796 = vmatpush2.msra.mxu0 0.0
  %3797 = vmatprep.subr.mxu0 0.0
  %3798 = vmatpush2.msra.mxu0 0.0
  %3799 = vmatprep.subr.mxu0 0.0
  %3800 = vmatpush2.msra.mxu0 0.0
  %3801 = vmatprep.subr.mxu0 0.0
  %3802 = vmatpush2.msra.mxu0 0.0
  %3803 = vmatprep.subr.mxu0 0.0
  %3804 = vmatpush2.msra.mxu0 0.0
  %3805 = vmatprep.subr.mxu0 0.0
  %3806 = vmatpush2.msra.mxu0 0.0
  %3807 = vmatprep.mubr.f32.mxu0 0.0
  %3808 = vmatmul.mubr.f32.gmra.mxu0 %v3741
  %v3809 = vpop.f32.mrf.mxu0
  %v3810 = vadd.f32 0.0, %v3809
  %v3811 = vpop.f32.mrf.mxu0
  %3812 = vdwg.mxu0
  %s3813 = scalar_lea.vmem %s11, 256
  %v3814 = vld [vmem:[%s3813] sm:$0xff]
  %v3815 = vld [vmem:[%s3813 + $0x8] sm:$0xff]
  %v3816 = vld [vmem:[%s3813 + $0x10] sm:$0xff]
  %v3817 = vld [vmem:[%s3813 + $0x18] sm:$0xff]
  %v3818 = vld [vmem:[%s3813 + $0x20] sm:$0xff]
  %v3819 = vld [vmem:[%s3813 + $0x28] sm:$0xff]
  %v3820 = vld [vmem:[%s3813 + $0x30] sm:$0xff]
  %v3821 = vld [vmem:[%s3813 + $0x38] sm:$0xff]
  %v3822 = vld [vmem:[%s3813 + $0x40] sm:$0xff]
  %v3823 = vld [vmem:[%s3813 + $0x48] sm:$0xff]
  %v3824 = vld [vmem:[%s3813 + $0x50] sm:$0xff]
  %v3825 = vld [vmem:[%s3813 + $0x58] sm:$0xff]
  %v3826 = vld [vmem:[%s3813 + $0x60] sm:$0xff]
  %v3827 = vld [vmem:[%s3813 + $0x68] sm:$0xff]
  %v3828 = vld [vmem:[%s3813 + $0x70] sm:$0xff]
  %v3829 = vld [vmem:[%s3813 + $0x78] sm:$0xff]
  %3830 = vmatprep.subr.mxu0 0.0
  %3831 = vmatpush1.msra.mxu0 %v3829
  %3832 = vmatprep.subr.mxu0 0.0
  %3833 = vmatpush1.msra.mxu0 %v3828
  %3834 = vmatprep.subr.mxu0 0.0
  %3835 = vmatpush1.msra.mxu0 %v3827
  %3836 = vmatprep.subr.mxu0 0.0
  %3837 = vmatpush1.msra.mxu0 %v3826
  %3838 = vmatprep.subr.mxu0 0.0
  %3839 = vmatpush1.msra.mxu0 %v3825
  %3840 = vmatprep.subr.mxu0 0.0
  %3841 = vmatpush1.msra.mxu0 %v3824
  %3842 = vmatprep.subr.mxu0 0.0
  %3843 = vmatpush1.msra.mxu0 %v3823
  %3844 = vmatprep.subr.mxu0 0.0
  %3845 = vmatpush1.msra.mxu0 %v3822
  %3846 = vmatprep.subr.mxu0 0.0
  %3847 = vmatpush1.msra.mxu0 %v3821
  %3848 = vmatprep.subr.mxu0 0.0
  %3849 = vmatpush1.msra.mxu0 %v3820
  %3850 = vmatprep.subr.mxu0 0.0
  %3851 = vmatpush1.msra.mxu0 %v3819
  %3852 = vmatprep.subr.mxu0 0.0
  %3853 = vmatpush1.msra.mxu0 %v3818
  %3854 = vmatprep.subr.mxu0 0.0
  %3855 = vmatpush1.msra.mxu0 %v3817
  %3856 = vmatprep.subr.mxu0 0.0
  %3857 = vmatpush1.msra.mxu0 %v3816
  %3858 = vmatprep.subr.mxu0 0.0
  %3859 = vmatpush1.msra.mxu0 %v3815
  %3860 = vmatprep.subr.mxu0 0.0
  %3861 = vmatpush1.msra.mxu0 %v3814
  %3862 = vmatprep.subr.mxu0 0.0
  %3863 = vmatpush2.msra.mxu0 0.0
  %3864 = vmatprep.subr.mxu0 0.0
  %3865 = vmatpush2.msra.mxu0 0.0
  %3866 = vmatprep.subr.mxu0 0.0
  %3867 = vmatpush2.msra.mxu0 0.0
  %3868 = vmatprep.subr.mxu0 0.0
  %3869 = vmatpush2.msra.mxu0 0.0
  %3870 = vmatprep.subr.mxu0 0.0
  %3871 = vmatpush2.msra.mxu0 0.0
  %3872 = vmatprep.subr.mxu0 0.0
  %3873 = vmatpush2.msra.mxu0 0.0
  %3874 = vmatprep.subr.mxu0 0.0
  %3875 = vmatpush2.msra.mxu0 0.0
  %3876 = vmatprep.subr.mxu0 0.0
  %3877 = vmatpush2.msra.mxu0 0.0
  %3878 = vmatprep.subr.mxu0 0.0
  %3879 = vmatpush2.msra.mxu0 0.0
  %3880 = vmatprep.subr.mxu0 0.0
  %3881 = vmatpush2.msra.mxu0 0.0
  %3882 = vmatprep.subr.mxu0 0.0
  %3883 = vmatpush2.msra.mxu0 0.0
  %3884 = vmatprep.subr.mxu0 0.0
  %3885 = vmatpush2.msra.mxu0 0.0
  %3886 = vmatprep.subr.mxu0 0.0
  %3887 = vmatpush2.msra.mxu0 0.0
  %3888 = vmatprep.subr.mxu0 0.0
  %3889 = vmatpush2.msra.mxu0 0.0
  %3890 = vmatprep.subr.mxu0 0.0
  %3891 = vmatpush2.msra.mxu0 0.0
  %3892 = vmatprep.subr.mxu0 0.0
  %3893 = vmatpush2.msra.mxu0 0.0
  %3894 = vmatprep.mubr.f32.mxu0 0.0
  %3895 = vmatmul.mubr.f32.gmra.mxu0 %v3810
  %v3896 = vpop.f32.mrf.mxu0
  %v3897 = vadd.f32 0.0, %v3896
  %v3898 = vpop.f32.mrf.mxu0
  %3899 = vdwg.mxu0
  %v3900 = vadd.f32 %v3737, %v3897
  %s3901 = scalar_lea.vmem %s5, 12
  %v3902 = vld [vmem:[%s3901] sm:$0xf]
  %v3904 = vsel %vm3408, %v3902, 0
  %3906 = vmatprep.subr.mxu0 0.0
  %3907 = vmatpush1.msra.mxu0 0.0
  %3908 = vmatprep.subr.mxu0 0.0
  %3909 = vmatpush1.msra.mxu0 0.0
  %3910 = vmatprep.subr.mxu0 0.0
  %3911 = vmatpush1.msra.mxu0 0.0
  %3912 = vmatprep.subr.mxu0 0.0
  %3913 = vmatpush1.msra.mxu0 0.0
  %3914 = vmatprep.subr.mxu0 0.0
  %3915 = vmatpush1.msra.mxu0 0.0
  %3916 = vmatprep.subr.mxu0 0.0
  %3917 = vmatpush1.msra.mxu0 0.0
  %3918 = vmatprep.subr.mxu0 0.0
  %3919 = vmatpush1.msra.mxu0 0.0
  %3920 = vmatprep.subr.mxu0 0.0
  %3921 = vmatpush1.msra.mxu0 0.0
  %3922 = vmatprep.subr.mxu0 0.0
  %3923 = vmatpush1.msra.mxu0 0.0
  %3924 = vmatprep.subr.mxu0 0.0
  %3925 = vmatpush1.msra.mxu0 0.0
  %3926 = vmatprep.subr.mxu0 0.0
  %3927 = vmatpush1.msra.mxu0 0.0
  %3928 = vmatprep.subr.mxu0 0.0
  %3929 = vmatpush1.msra.mxu0 0.0
  %3930 = vmatprep.subr.mxu0 0.0
  %3931 = vmatpush1.msra.mxu0 0.0
  %3932 = vmatprep.subr.mxu0 0.0
  %3933 = vmatpush1.msra.mxu0 0.0
  %3934 = vmatprep.subr.mxu0 0.0
  %3935 = vmatpush1.msra.mxu0 0.0
  %3936 = vmatprep.subr.mxu0 0.0
  %3937 = vmatpush1.msra.mxu0 %v3405
  %3938 = vmatprep.subr.mxu0 0.0
  %3939 = vmatpush2.msra.mxu0 0.0
  %3940 = vmatprep.subr.mxu0 0.0
  %3941 = vmatpush2.msra.mxu0 0.0
  %3942 = vmatprep.subr.mxu0 0.0
  %3943 = vmatpush2.msra.mxu0 0.0
  %3944 = vmatprep.subr.mxu0 0.0
  %3945 = vmatpush2.msra.mxu0 0.0
  %3946 = vmatprep.subr.mxu0 0.0
  %3947 = vmatpush2.msra.mxu0 0.0
  %3948 = vmatprep.subr.mxu0 0.0
  %3949 = vmatpush2.msra.mxu0 0.0
  %3950 = vmatprep.subr.mxu0 0.0
  %3951 = vmatpush2.msra.mxu0 0.0
  %3952 = vmatprep.subr.mxu0 0.0
  %3953 = vmatpush2.msra.mxu0 0.0
  %3954 = vmatprep.subr.mxu0 0.0
  %3955 = vmatpush2.msra.mxu0 0.0
  %3956 = vmatprep.subr.mxu0 0.0
  %3957 = vmatpush2.msra.mxu0 0.0
  %3958 = vmatprep.subr.mxu0 0.0
  %3959 = vmatpush2.msra.mxu0 0.0
  %3960 = vmatprep.subr.mxu0 0.0
  %3961 = vmatpush2.msra.mxu0 0.0
  %3962 = vmatprep.subr.mxu0 0.0
  %3963 = vmatpush2.msra.mxu0 0.0
  %3964 = vmatprep.subr.mxu0 0.0
  %3965 = vmatpush2.msra.mxu0 0.0
  %3966 = vmatprep.subr.mxu0 0.0
  %3967 = vmatpush2.msra.mxu0 0.0
  %3968 = vmatprep.subr.mxu0 0.0
  %3969 = vmatpush2.msra.mxu0 0.0
  %3970 = vmatprep.mubr.f32.mxu0 0.0
  %3971 = vmatmul.mubr.f32.gmra.mxu0 %v3904
  %v3972 = vpop.f32.mrf.mxu0
  %v3973 = vadd.f32 0.0, %v3972
  %v3974 = vpop.f32.mrf.mxu0
  %3975 = vdwg.mxu0
  %s3976 = scalar_lea.vmem %s11, 384
  %v3977 = vld [vmem:[%s3976] sm:$0xff]
  %v3978 = vld [vmem:[%s3976 + $0x8] sm:$0xff]
  %v3979 = vld [vmem:[%s3976 + $0x10] sm:$0xff]
  %v3980 = vld [vmem:[%s3976 + $0x18] sm:$0xff]
  %v3981 = vld [vmem:[%s3976 + $0x20] sm:$0xff]
  %v3982 = vld [vmem:[%s3976 + $0x28] sm:$0xff]
  %v3983 = vld [vmem:[%s3976 + $0x30] sm:$0xff]
  %v3984 = vld [vmem:[%s3976 + $0x38] sm:$0xff]
  %v3985 = vld [vmem:[%s3976 + $0x40] sm:$0xff]
  %v3986 = vld [vmem:[%s3976 + $0x48] sm:$0xff]
  %v3987 = vld [vmem:[%s3976 + $0x50] sm:$0xff]
  %v3988 = vld [vmem:[%s3976 + $0x58] sm:$0xff]
  %v3989 = vld [vmem:[%s3976 + $0x60] sm:$0xff]
  %v3990 = vld [vmem:[%s3976 + $0x68] sm:$0xff]
  %v3991 = vld [vmem:[%s3976 + $0x70] sm:$0xff]
  %v3992 = vld [vmem:[%s3976 + $0x78] sm:$0xff]
  %3993 = vmatprep.subr.mxu0 0.0
  %3994 = vmatpush1.msra.mxu0 %v3992
  %3995 = vmatprep.subr.mxu0 0.0
  %3996 = vmatpush1.msra.mxu0 %v3991
  %3997 = vmatprep.subr.mxu0 0.0
  %3998 = vmatpush1.msra.mxu0 %v3990
  %3999 = vmatprep.subr.mxu0 0.0
  %4000 = vmatpush1.msra.mxu0 %v3989
  %4001 = vmatprep.subr.mxu0 0.0
  %4002 = vmatpush1.msra.mxu0 %v3988
  %4003 = vmatprep.subr.mxu0 0.0
  %4004 = vmatpush1.msra.mxu0 %v3987
  %4005 = vmatprep.subr.mxu0 0.0
  %4006 = vmatpush1.msra.mxu0 %v3986
  %4007 = vmatprep.subr.mxu0 0.0
  %4008 = vmatpush1.msra.mxu0 %v3985
  %4009 = vmatprep.subr.mxu0 0.0
  %4010 = vmatpush1.msra.mxu0 %v3984
  %4011 = vmatprep.subr.mxu0 0.0
  %4012 = vmatpush1.msra.mxu0 %v3983
  %4013 = vmatprep.subr.mxu0 0.0
  %4014 = vmatpush1.msra.mxu0 %v3982
  %4015 = vmatprep.subr.mxu0 0.0
  %4016 = vmatpush1.msra.mxu0 %v3981
  %4017 = vmatprep.subr.mxu0 0.0
  %4018 = vmatpush1.msra.mxu0 %v3980
  %4019 = vmatprep.subr.mxu0 0.0
  %4020 = vmatpush1.msra.mxu0 %v3979
  %4021 = vmatprep.subr.mxu0 0.0
  %4022 = vmatpush1.msra.mxu0 %v3978
  %4023 = vmatprep.subr.mxu0 0.0
  %4024 = vmatpush1.msra.mxu0 %v3977
  %4025 = vmatprep.subr.mxu0 0.0
  %4026 = vmatpush2.msra.mxu0 0.0
  %4027 = vmatprep.subr.mxu0 0.0
  %4028 = vmatpush2.msra.mxu0 0.0
  %4029 = vmatprep.subr.mxu0 0.0
  %4030 = vmatpush2.msra.mxu0 0.0
  %4031 = vmatprep.subr.mxu0 0.0
  %4032 = vmatpush2.msra.mxu0 0.0
  %4033 = vmatprep.subr.mxu0 0.0
  %4034 = vmatpush2.msra.mxu0 0.0
  %4035 = vmatprep.subr.mxu0 0.0
  %4036 = vmatpush2.msra.mxu0 0.0
  %4037 = vmatprep.subr.mxu0 0.0
  %4038 = vmatpush2.msra.mxu0 0.0
  %4039 = vmatprep.subr.mxu0 0.0
  %4040 = vmatpush2.msra.mxu0 0.0
  %4041 = vmatprep.subr.mxu0 0.0
  %4042 = vmatpush2.msra.mxu0 0.0
  %4043 = vmatprep.subr.mxu0 0.0
  %4044 = vmatpush2.msra.mxu0 0.0
  %4045 = vmatprep.subr.mxu0 0.0
  %4046 = vmatpush2.msra.mxu0 0.0
  %4047 = vmatprep.subr.mxu0 0.0
  %4048 = vmatpush2.msra.mxu0 0.0
  %4049 = vmatprep.subr.mxu0 0.0
  %4050 = vmatpush2.msra.mxu0 0.0
  %4051 = vmatprep.subr.mxu0 0.0
  %4052 = vmatpush2.msra.mxu0 0.0
  %4053 = vmatprep.subr.mxu0 0.0
  %4054 = vmatpush2.msra.mxu0 0.0
  %4055 = vmatprep.subr.mxu0 0.0
  %4056 = vmatpush2.msra.mxu0 0.0
  %4057 = vmatprep.mubr.f32.mxu0 0.0
  %4058 = vmatmul.mubr.f32.gmra.mxu0 %v3973
  %v4059 = vpop.f32.mrf.mxu0
  %v4060 = vadd.f32 0.0, %v4059
  %v4061 = vpop.f32.mrf.mxu0
  %4062 = vdwg.mxu0
  %v4063 = vadd.f32 %v3900, %v4060
  %vm4064 = vcmp.gt.f32.partialorder %v4063, 0.0
  %v4065 = vmul.f32 %v4063, 0.01
  %v4066 = vsel %vm4064, %v4063, %v4065
  %v4067 = vld [vmem:[%s18] sm:$0x1]
  %v4068 = vld [vmem:[%s6] sm:$0x3]
  %vm4069 = vcmask 31744
  %v4071 = vsel %vm4069, %v4068, 0
  %vm4073 = vcmask 1043456
  %v4075 = vsel %vm4073, %v4066, 0
  %4077 = vmatprep.subr.mxu0 0.0
  %4078 = vmatpush1.msra.mxu0 0.0
  %4079 = vmatprep.subr.mxu0 0.0
  %4080 = vmatpush1.msra.mxu0 0.0
  %4081 = vmatprep.subr.mxu0 0.0
  %4082 = vmatpush1.msra.mxu0 0.0
  %4083 = vmatprep.subr.mxu0 0.0
  %4084 = vmatpush1.msra.mxu0 0.0
  %4085 = vmatprep.subr.mxu0 0.0
  %4086 = vmatpush1.msra.mxu0 0.0
  %4087 = vmatprep.subr.mxu0 0.0
  %4088 = vmatpush1.msra.mxu0 0.0
  %4089 = vmatprep.subr.mxu0 0.0
  %4090 = vmatpush1.msra.mxu0 0.0
  %4091 = vmatprep.subr.mxu0 0.0
  %4092 = vmatpush1.msra.mxu0 0.0
  %4093 = vmatprep.subr.mxu0 0.0
  %4094 = vmatpush1.msra.mxu0 0.0
  %4095 = vmatprep.subr.mxu0 0.0
  %4096 = vmatpush1.msra.mxu0 0.0
  %4097 = vmatprep.subr.mxu0 0.0
  %4098 = vmatpush1.msra.mxu0 0.0
  %4099 = vmatprep.subr.mxu0 0.0
  %4100 = vmatpush1.msra.mxu0 0.0
  %4101 = vmatprep.subr.mxu0 0.0
  %4102 = vmatpush1.msra.mxu0 0.0
  %4103 = vmatprep.subr.mxu0 0.0
  %4104 = vmatpush1.msra.mxu0 0.0
  %4105 = vmatprep.subr.mxu0 0.0
  %4106 = vmatpush1.msra.mxu0 0.0
  %4107 = vmatprep.subr.mxu0 0.0
  %4108 = vmatpush1.msra.mxu0 %v4075
  %4109 = vmatprep.subr.mxu0 0.0
  %4110 = vmatpush2.msra.mxu0 0.0
  %4111 = vmatprep.subr.mxu0 0.0
  %4112 = vmatpush2.msra.mxu0 0.0
  %4113 = vmatprep.subr.mxu0 0.0
  %4114 = vmatpush2.msra.mxu0 0.0
  %4115 = vmatprep.subr.mxu0 0.0
  %4116 = vmatpush2.msra.mxu0 0.0
  %4117 = vmatprep.subr.mxu0 0.0
  %4118 = vmatpush2.msra.mxu0 0.0
  %4119 = vmatprep.subr.mxu0 0.0
  %4120 = vmatpush2.msra.mxu0 0.0
  %4121 = vmatprep.subr.mxu0 0.0
  %4122 = vmatpush2.msra.mxu0 0.0
  %4123 = vmatprep.subr.mxu0 0.0
  %4124 = vmatpush2.msra.mxu0 0.0
  %4125 = vmatprep.subr.mxu0 0.0
  %4126 = vmatpush2.msra.mxu0 0.0
  %4127 = vmatprep.subr.mxu0 0.0
  %4128 = vmatpush2.msra.mxu0 0.0
  %4129 = vmatprep.subr.mxu0 0.0
  %4130 = vmatpush2.msra.mxu0 0.0
  %4131 = vmatprep.subr.mxu0 0.0
  %4132 = vmatpush2.msra.mxu0 0.0
  %4133 = vmatprep.subr.mxu0 0.0
  %4134 = vmatpush2.msra.mxu0 0.0
  %4135 = vmatprep.subr.mxu0 0.0
  %4136 = vmatpush2.msra.mxu0 0.0
  %4137 = vmatprep.subr.mxu0 0.0
  %4138 = vmatpush2.msra.mxu0 0.0
  %4139 = vmatprep.subr.mxu0 0.0
  %4140 = vmatpush2.msra.mxu0 0.0
  %4141 = vmatprep.mubr.f32.mxu0 0.0
  %4142 = vmatmul.mubr.f32.gmra.mxu0 %v4071
  %v4143 = vpop.f32.mrf.mxu0
  %v4144 = vadd.f32 0.0, %v4143
  %v4145 = vpop.f32.mrf.mxu0
  %4146 = vdwg.mxu0
  %v4147 = vld [vmem:[%s12] sm:$0xff]
  %v4148 = vld [vmem:[%s12 + $0x8] sm:$0xff]
  %v4149 = vld [vmem:[%s12 + $0x10] sm:$0xff]
  %v4150 = vld [vmem:[%s12 + $0x18] sm:$0xff]
  %v4151 = vld [vmem:[%s12 + $0x20] sm:$0xff]
  %v4152 = vld [vmem:[%s12 + $0x28] sm:$0xff]
  %v4153 = vld [vmem:[%s12 + $0x30] sm:$0xff]
  %v4154 = vld [vmem:[%s12 + $0x38] sm:$0xff]
  %v4155 = vld [vmem:[%s12 + $0x40] sm:$0xff]
  %v4156 = vld [vmem:[%s12 + $0x48] sm:$0xff]
  %v4157 = vld [vmem:[%s12 + $0x50] sm:$0xff]
  %v4158 = vld [vmem:[%s12 + $0x58] sm:$0xff]
  %v4159 = vld [vmem:[%s12 + $0x60] sm:$0xff]
  %v4160 = vld [vmem:[%s12 + $0x68] sm:$0xff]
  %v4161 = vld [vmem:[%s12 + $0x70] sm:$0xff]
  %v4162 = vld [vmem:[%s12 + $0x78] sm:$0xff]
  %4163 = vmatprep.subr.mxu0 0.0
  %4164 = vmatpush1.msra.mxu0 %v4162
  %4165 = vmatprep.subr.mxu0 0.0
  %4166 = vmatpush1.msra.mxu0 %v4161
  %4167 = vmatprep.subr.mxu0 0.0
  %4168 = vmatpush1.msra.mxu0 %v4160
  %4169 = vmatprep.subr.mxu0 0.0
  %4170 = vmatpush1.msra.mxu0 %v4159
  %4171 = vmatprep.subr.mxu0 0.0
  %4172 = vmatpush1.msra.mxu0 %v4158
  %4173 = vmatprep.subr.mxu0 0.0
  %4174 = vmatpush1.msra.mxu0 %v4157
  %4175 = vmatprep.subr.mxu0 0.0
  %4176 = vmatpush1.msra.mxu0 %v4156
  %4177 = vmatprep.subr.mxu0 0.0
  %4178 = vmatpush1.msra.mxu0 %v4155
  %4179 = vmatprep.subr.mxu0 0.0
  %4180 = vmatpush1.msra.mxu0 %v4154
  %4181 = vmatprep.subr.mxu0 0.0
  %4182 = vmatpush1.msra.mxu0 %v4153
  %4183 = vmatprep.subr.mxu0 0.0
  %4184 = vmatpush1.msra.mxu0 %v4152
  %4185 = vmatprep.subr.mxu0 0.0
  %4186 = vmatpush1.msra.mxu0 %v4151
  %4187 = vmatprep.subr.mxu0 0.0
  %4188 = vmatpush1.msra.mxu0 %v4150
  %4189 = vmatprep.subr.mxu0 0.0
  %4190 = vmatpush1.msra.mxu0 %v4149
  %4191 = vmatprep.subr.mxu0 0.0
  %4192 = vmatpush1.msra.mxu0 %v4148
  %4193 = vmatprep.subr.mxu0 0.0
  %4194 = vmatpush1.msra.mxu0 %v4147
  %4195 = vmatprep.subr.mxu0 0.0
  %4196 = vmatpush2.msra.mxu0 0.0
  %4197 = vmatprep.subr.mxu0 0.0
  %4198 = vmatpush2.msra.mxu0 0.0
  %4199 = vmatprep.subr.mxu0 0.0
  %4200 = vmatpush2.msra.mxu0 0.0
  %4201 = vmatprep.subr.mxu0 0.0
  %4202 = vmatpush2.msra.mxu0 0.0
  %4203 = vmatprep.subr.mxu0 0.0
  %4204 = vmatpush2.msra.mxu0 0.0
  %4205 = vmatprep.subr.mxu0 0.0
  %4206 = vmatpush2.msra.mxu0 0.0
  %4207 = vmatprep.subr.mxu0 0.0
  %4208 = vmatpush2.msra.mxu0 0.0
  %4209 = vmatprep.subr.mxu0 0.0
  %4210 = vmatpush2.msra.mxu0 0.0
  %4211 = vmatprep.subr.mxu0 0.0
  %4212 = vmatpush2.msra.mxu0 0.0
  %4213 = vmatprep.subr.mxu0 0.0
  %4214 = vmatpush2.msra.mxu0 0.0
  %4215 = vmatprep.subr.mxu0 0.0
  %4216 = vmatpush2.msra.mxu0 0.0
  %4217 = vmatprep.subr.mxu0 0.0
  %4218 = vmatpush2.msra.mxu0 0.0
  %4219 = vmatprep.subr.mxu0 0.0
  %4220 = vmatpush2.msra.mxu0 0.0
  %4221 = vmatprep.subr.mxu0 0.0
  %4222 = vmatpush2.msra.mxu0 0.0
  %4223 = vmatprep.subr.mxu0 0.0
  %4224 = vmatpush2.msra.mxu0 0.0
  %4225 = vmatprep.subr.mxu0 0.0
  %4226 = vmatpush2.msra.mxu0 0.0
  %4227 = vmatprep.mubr.f32.mxu0 0.0
  %4228 = vmatmul.mubr.f32.gmra.mxu0 %v4144
  %v4229 = vpop.f32.mrf.mxu0
  %v4230 = vadd.f32 0.0, %v4229
  %v4231 = vpop.f32.mrf.mxu0
  %4232 = vdwg.mxu0
  %v4234 = vlaneseq
  %v4235 = vshrl.u32 %v4234, 7
  %v4236 = vsub.s32 0, %v4235
  %v4237 = vrot.slane %v4067, %v4236
  %v4239 = vadd.f32 %v4237, %v4230
  %s4240 = scalar_lea.vmem %s6, 2
  %v4241 = vld [vmem:[%s4240] sm:$0x3]
  %v4243 = vsel %vm4069, %v4241, 0
  %4245 = vmatprep.subr.mxu0 0.0
  %4246 = vmatpush1.msra.mxu0 0.0
  %4247 = vmatprep.subr.mxu0 0.0
  %4248 = vmatpush1.msra.mxu0 0.0
  %4249 = vmatprep.subr.mxu0 0.0
  %4250 = vmatpush1.msra.mxu0 0.0
  %4251 = vmatprep.subr.mxu0 0.0
  %4252 = vmatpush1.msra.mxu0 0.0
  %4253 = vmatprep.subr.mxu0 0.0
  %4254 = vmatpush1.msra.mxu0 0.0
  %4255 = vmatprep.subr.mxu0 0.0
  %4256 = vmatpush1.msra.mxu0 0.0
  %4257 = vmatprep.subr.mxu0 0.0
  %4258 = vmatpush1.msra.mxu0 0.0
  %4259 = vmatprep.subr.mxu0 0.0
  %4260 = vmatpush1.msra.mxu0 0.0
  %4261 = vmatprep.subr.mxu0 0.0
  %4262 = vmatpush1.msra.mxu0 0.0
  %4263 = vmatprep.subr.mxu0 0.0
  %4264 = vmatpush1.msra.mxu0 0.0
  %4265 = vmatprep.subr.mxu0 0.0
  %4266 = vmatpush1.msra.mxu0 0.0
  %4267 = vmatprep.subr.mxu0 0.0
  %4268 = vmatpush1.msra.mxu0 0.0
  %4269 = vmatprep.subr.mxu0 0.0
  %4270 = vmatpush1.msra.mxu0 0.0
  %4271 = vmatprep.subr.mxu0 0.0
  %4272 = vmatpush1.msra.mxu0 0.0
  %4273 = vmatprep.subr.mxu0 0.0
  %4274 = vmatpush1.msra.mxu0 0.0
  %4275 = vmatprep.subr.mxu0 0.0
  %4276 = vmatpush1.msra.mxu0 %v4075
  %4277 = vmatprep.subr.mxu0 0.0
  %4278 = vmatpush2.msra.mxu0 0.0
  %4279 = vmatprep.subr.mxu0 0.0
  %4280 = vmatpush2.msra.mxu0 0.0
  %4281 = vmatprep.subr.mxu0 0.0
  %4282 = vmatpush2.msra.mxu0 0.0
  %4283 = vmatprep.subr.mxu0 0.0
  %4284 = vmatpush2.msra.mxu0 0.0
  %4285 = vmatprep.subr.mxu0 0.0
  %4286 = vmatpush2.msra.mxu0 0.0
  %4287 = vmatprep.subr.mxu0 0.0
  %4288 = vmatpush2.msra.mxu0 0.0
  %4289 = vmatprep.subr.mxu0 0.0
  %4290 = vmatpush2.msra.mxu0 0.0
  %4291 = vmatprep.subr.mxu0 0.0
  %4292 = vmatpush2.msra.mxu0 0.0
  %4293 = vmatprep.subr.mxu0 0.0
  %4294 = vmatpush2.msra.mxu0 0.0
  %4295 = vmatprep.subr.mxu0 0.0
  %4296 = vmatpush2.msra.mxu0 0.0
  %4297 = vmatprep.subr.mxu0 0.0
  %4298 = vmatpush2.msra.mxu0 0.0
  %4299 = vmatprep.subr.mxu0 0.0
  %4300 = vmatpush2.msra.mxu0 0.0
  %4301 = vmatprep.subr.mxu0 0.0
  %4302 = vmatpush2.msra.mxu0 0.0
  %4303 = vmatprep.subr.mxu0 0.0
  %4304 = vmatpush2.msra.mxu0 0.0
  %4305 = vmatprep.subr.mxu0 0.0
  %4306 = vmatpush2.msra.mxu0 0.0
  %4307 = vmatprep.subr.mxu0 0.0
  %4308 = vmatpush2.msra.mxu0 0.0
  %4309 = vmatprep.mubr.f32.mxu0 0.0
  %4310 = vmatmul.mubr.f32.gmra.mxu0 %v4243
  %v4311 = vpop.f32.mrf.mxu0
  %v4312 = vadd.f32 0.0, %v4311
  %v4313 = vpop.f32.mrf.mxu0
  %4314 = vdwg.mxu0
  %s4315 = scalar_lea.vmem %s12, 128
  %v4316 = vld [vmem:[%s4315] sm:$0xff]
  %v4317 = vld [vmem:[%s4315 + $0x8] sm:$0xff]
  %v4318 = vld [vmem:[%s4315 + $0x10] sm:$0xff]
  %v4319 = vld [vmem:[%s4315 + $0x18] sm:$0xff]
  %v4320 = vld [vmem:[%s4315 + $0x20] sm:$0xff]
  %v4321 = vld [vmem:[%s4315 + $0x28] sm:$0xff]
  %v4322 = vld [vmem:[%s4315 + $0x30] sm:$0xff]
  %v4323 = vld [vmem:[%s4315 + $0x38] sm:$0xff]
  %v4324 = vld [vmem:[%s4315 + $0x40] sm:$0xff]
  %v4325 = vld [vmem:[%s4315 + $0x48] sm:$0xff]
  %v4326 = vld [vmem:[%s4315 + $0x50] sm:$0xff]
  %v4327 = vld [vmem:[%s4315 + $0x58] sm:$0xff]
  %v4328 = vld [vmem:[%s4315 + $0x60] sm:$0xff]
  %v4329 = vld [vmem:[%s4315 + $0x68] sm:$0xff]
  %v4330 = vld [vmem:[%s4315 + $0x70] sm:$0xff]
  %v4331 = vld [vmem:[%s4315 + $0x78] sm:$0xff]
  %4332 = vmatprep.subr.mxu0 0.0
  %4333 = vmatpush1.msra.mxu0 %v4331
  %4334 = vmatprep.subr.mxu0 0.0
  %4335 = vmatpush1.msra.mxu0 %v4330
  %4336 = vmatprep.subr.mxu0 0.0
  %4337 = vmatpush1.msra.mxu0 %v4329
  %4338 = vmatprep.subr.mxu0 0.0
  %4339 = vmatpush1.msra.mxu0 %v4328
  %4340 = vmatprep.subr.mxu0 0.0
  %4341 = vmatpush1.msra.mxu0 %v4327
  %4342 = vmatprep.subr.mxu0 0.0
  %4343 = vmatpush1.msra.mxu0 %v4326
  %4344 = vmatprep.subr.mxu0 0.0
  %4345 = vmatpush1.msra.mxu0 %v4325
  %4346 = vmatprep.subr.mxu0 0.0
  %4347 = vmatpush1.msra.mxu0 %v4324
  %4348 = vmatprep.subr.mxu0 0.0
  %4349 = vmatpush1.msra.mxu0 %v4323
  %4350 = vmatprep.subr.mxu0 0.0
  %4351 = vmatpush1.msra.mxu0 %v4322
  %4352 = vmatprep.subr.mxu0 0.0
  %4353 = vmatpush1.msra.mxu0 %v4321
  %4354 = vmatprep.subr.mxu0 0.0
  %4355 = vmatpush1.msra.mxu0 %v4320
  %4356 = vmatprep.subr.mxu0 0.0
  %4357 = vmatpush1.msra.mxu0 %v4319
  %4358 = vmatprep.subr.mxu0 0.0
  %4359 = vmatpush1.msra.mxu0 %v4318
  %4360 = vmatprep.subr.mxu0 0.0
  %4361 = vmatpush1.msra.mxu0 %v4317
  %4362 = vmatprep.subr.mxu0 0.0
  %4363 = vmatpush1.msra.mxu0 %v4316
  %4364 = vmatprep.subr.mxu0 0.0
  %4365 = vmatpush2.msra.mxu0 0.0
  %4366 = vmatprep.subr.mxu0 0.0
  %4367 = vmatpush2.msra.mxu0 0.0
  %4368 = vmatprep.subr.mxu0 0.0
  %4369 = vmatpush2.msra.mxu0 0.0
  %4370 = vmatprep.subr.mxu0 0.0
  %4371 = vmatpush2.msra.mxu0 0.0
  %4372 = vmatprep.subr.mxu0 0.0
  %4373 = vmatpush2.msra.mxu0 0.0
  %4374 = vmatprep.subr.mxu0 0.0
  %4375 = vmatpush2.msra.mxu0 0.0
  %4376 = vmatprep.subr.mxu0 0.0
  %4377 = vmatpush2.msra.mxu0 0.0
  %4378 = vmatprep.subr.mxu0 0.0
  %4379 = vmatpush2.msra.mxu0 0.0
  %4380 = vmatprep.subr.mxu0 0.0
  %4381 = vmatpush2.msra.mxu0 0.0
  %4382 = vmatprep.subr.mxu0 0.0
  %4383 = vmatpush2.msra.mxu0 0.0
  %4384 = vmatprep.subr.mxu0 0.0
  %4385 = vmatpush2.msra.mxu0 0.0
  %4386 = vmatprep.subr.mxu0 0.0
  %4387 = vmatpush2.msra.mxu0 0.0
  %4388 = vmatprep.subr.mxu0 0.0
  %4389 = vmatpush2.msra.mxu0 0.0
  %4390 = vmatprep.subr.mxu0 0.0
  %4391 = vmatpush2.msra.mxu0 0.0
  %4392 = vmatprep.subr.mxu0 0.0
  %4393 = vmatpush2.msra.mxu0 0.0
  %4394 = vmatprep.subr.mxu0 0.0
  %4395 = vmatpush2.msra.mxu0 0.0
  %4396 = vmatprep.mubr.f32.mxu0 0.0
  %4397 = vmatmul.mubr.f32.gmra.mxu0 %v4312
  %v4398 = vpop.f32.mrf.mxu0
  %v4399 = vadd.f32 0.0, %v4398
  %v4400 = vpop.f32.mrf.mxu0
  %4401 = vdwg.mxu0
  %v4402 = vadd.f32 %v4239, %v4399
  %vm4403 = vcmp.gt.f32.partialorder %v4402, 0.0
  %v4404 = vmul.f32 %v4402, 0.01
  %v4405 = vsel %vm4403, %v4402, %v4404
  %v4406 = vld [vmem:[%s19] sm:$0xff]
  %v4407 = vld [vmem:[%s19 + $0x8] sm:$0xff]
  %v4408 = vld [vmem:[%s19 + $0x10] sm:$0xff]
  %v4409 = vld [vmem:[%s19 + $0x18] sm:$0xff]
  %v4410 = vld [vmem:[%s19 + $0x20] sm:$0xff]
  %v4411 = vld [vmem:[%s19 + $0x28] sm:$0xff]
  %v4412 = vld [vmem:[%s19 + $0x30] sm:$0xff]
  %v4413 = vld [vmem:[%s19 + $0x38] sm:$0xff]
  %v4414 = vld [vmem:[%s19 + $0x40] sm:$0xff]
  %v4415 = vld [vmem:[%s19 + $0x48] sm:$0xff]
  %v4416 = vld [vmem:[%s19 + $0x50] sm:$0xff]
  %v4417 = vld [vmem:[%s19 + $0x58] sm:$0xff]
  %v4418 = vld [vmem:[%s19 + $0x60] sm:$0xff]
  %v4419 = vld [vmem:[%s19 + $0x68] sm:$0xff]
  %v4420 = vld [vmem:[%s19 + $0x70] sm:$0xff]
  %v4421 = vld [vmem:[%s19 + $0x78] sm:$0xff]
  %v4422 = vld [vmem:[%s20] sm:$0x1]
  %v4424 = vlaneseq
  %v4425 = vshrl.u32 %v4424, 7
  %v4426 = vsub.s32 0, %v4425
  %v4427 = vrot.slane %v4422, %v4426
  %4429 = vmatprep.subr.mxu0 0.0
  %4430 = vmatpush1.msra.mxu0 %v4421
  %4431 = vmatprep.subr.mxu0 0.0
  %4432 = vmatpush1.msra.mxu0 %v4420
  %4433 = vmatprep.subr.mxu0 0.0
  %4434 = vmatpush1.msra.mxu0 %v4419
  %4435 = vmatprep.subr.mxu0 0.0
  %4436 = vmatpush1.msra.mxu0 %v4418
  %4437 = vmatprep.subr.mxu0 0.0
  %4438 = vmatpush1.msra.mxu0 %v4417
  %4439 = vmatprep.subr.mxu0 0.0
  %4440 = vmatpush1.msra.mxu0 %v4416
  %4441 = vmatprep.subr.mxu0 0.0
  %4442 = vmatpush1.msra.mxu0 %v4415
  %4443 = vmatprep.subr.mxu0 0.0
  %4444 = vmatpush1.msra.mxu0 %v4414
  %4445 = vmatprep.subr.mxu0 0.0
  %4446 = vmatpush1.msra.mxu0 %v4413
  %4447 = vmatprep.subr.mxu0 0.0
  %4448 = vmatpush1.msra.mxu0 %v4412
  %4449 = vmatprep.subr.mxu0 0.0
  %4450 = vmatpush1.msra.mxu0 %v4411
  %4451 = vmatprep.subr.mxu0 0.0
  %4452 = vmatpush1.msra.mxu0 %v4410
  %4453 = vmatprep.subr.mxu0 0.0
  %4454 = vmatpush1.msra.mxu0 %v4409
  %4455 = vmatprep.subr.mxu0 0.0
  %4456 = vmatpush1.msra.mxu0 %v4408
  %4457 = vmatprep.subr.mxu0 0.0
  %4458 = vmatpush1.msra.mxu0 %v4407
  %4459 = vmatprep.subr.mxu0 0.0
  %4460 = vmatpush1.msra.mxu0 %v4406
  %4461 = vmatprep.subr.mxu0 0.0
  %4462 = vmatpush2.msra.mxu0 0.0
  %4463 = vmatprep.subr.mxu0 0.0
  %4464 = vmatpush2.msra.mxu0 0.0
  %4465 = vmatprep.subr.mxu0 0.0
  %4466 = vmatpush2.msra.mxu0 0.0
  %4467 = vmatprep.subr.mxu0 0.0
  %4468 = vmatpush2.msra.mxu0 0.0
  %4469 = vmatprep.subr.mxu0 0.0
  %4470 = vmatpush2.msra.mxu0 0.0
  %4471 = vmatprep.subr.mxu0 0.0
  %4472 = vmatpush2.msra.mxu0 0.0
  %4473 = vmatprep.subr.mxu0 0.0
  %4474 = vmatpush2.msra.mxu0 0.0
  %4475 = vmatprep.subr.mxu0 0.0
  %4476 = vmatpush2.msra.mxu0 0.0
  %4477 = vmatprep.subr.mxu0 0.0
  %4478 = vmatpush2.msra.mxu0 0.0
  %4479 = vmatprep.subr.mxu0 0.0
  %4480 = vmatpush2.msra.mxu0 0.0
  %4481 = vmatprep.subr.mxu0 0.0
  %4482 = vmatpush2.msra.mxu0 0.0
  %4483 = vmatprep.subr.mxu0 0.0
  %4484 = vmatpush2.msra.mxu0 0.0
  %4485 = vmatprep.subr.mxu0 0.0
  %4486 = vmatpush2.msra.mxu0 0.0
  %4487 = vmatprep.subr.mxu0 0.0
  %4488 = vmatpush2.msra.mxu0 0.0
  %4489 = vmatprep.subr.mxu0 0.0
  %4490 = vmatpush2.msra.mxu0 0.0
  %4491 = vmatprep.subr.mxu0 0.0
  %4492 = vmatpush2.msra.mxu0 0.0
  %4493 = vmatprep.mubr.f32.mxu0 0.0
  %4494 = vmatmul.mubr.f32.gmra.mxu0 %v4405
  %v4495 = vpop.f32.mrf.mxu0
  %v4496 = vadd.f32 %v4427, %v4495
  %v4497 = vpop.f32.mrf.mxu0
  %4498 = vdwg.mxu0
  %v4499 = vxor.u32 %v4496, 2147483648
  %v4500 = vmul.f32 %v4499, 1.442695
  %v4501 = vpow.pop %v4500
  %v4502 = vadd.f32 %v4501, 1.0
  %v4503 = vrcp.pop %v4502
  %v4504 = vmul.f32 1.0, %v4503
  %v4505 = vld [vmem:[%s21] sm:$0xff]
  %v4506 = vld [vmem:[%s21 + $0x8] sm:$0xff]
  %v4507 = vld [vmem:[%s21 + $0x10] sm:$0xff]
  %v4508 = vld [vmem:[%s21 + $0x18] sm:$0xff]
  %v4509 = vld [vmem:[%s21 + $0x20] sm:$0xff]
  %v4510 = vld [vmem:[%s21 + $0x28] sm:$0xff]
  %v4511 = vld [vmem:[%s21 + $0x30] sm:$0xff]
  %v4512 = vld [vmem:[%s21 + $0x38] sm:$0xff]
  %v4513 = vld [vmem:[%s22] sm:$0x1]
  %v4515 = vlaneseq
  %v4516 = vshrl.u32 %v4515, 7
  %v4517 = vsub.s32 0, %v4516
  %v4518 = vrot.slane %v4513, %v4517
  %v4521 = vsel %vm224, %v4504, 0
  %4523 = vmatprep.subr.mxu0 0.0
  %4524 = vmatpush1.msra.mxu0 0.0
  %4525 = vmatprep.subr.mxu0 0.0
  %4526 = vmatpush1.msra.mxu0 0.0
  %4527 = vmatprep.subr.mxu0 0.0
  %4528 = vmatpush1.msra.mxu0 0.0
  %4529 = vmatprep.subr.mxu0 0.0
  %4530 = vmatpush1.msra.mxu0 0.0
  %4531 = vmatprep.subr.mxu0 0.0
  %4532 = vmatpush1.msra.mxu0 0.0
  %4533 = vmatprep.subr.mxu0 0.0
  %4534 = vmatpush1.msra.mxu0 0.0
  %4535 = vmatprep.subr.mxu0 0.0
  %4536 = vmatpush1.msra.mxu0 0.0
  %4537 = vmatprep.subr.mxu0 0.0
  %4538 = vmatpush1.msra.mxu0 0.0
  %4539 = vmatprep.subr.mxu0 0.0
  %4540 = vmatpush1.msra.mxu0 %v4512
  %4541 = vmatprep.subr.mxu0 0.0
  %4542 = vmatpush1.msra.mxu0 %v4511
  %4543 = vmatprep.subr.mxu0 0.0
  %4544 = vmatpush1.msra.mxu0 %v4510
  %4545 = vmatprep.subr.mxu0 0.0
  %4546 = vmatpush1.msra.mxu0 %v4509
  %4547 = vmatprep.subr.mxu0 0.0
  %4548 = vmatpush1.msra.mxu0 %v4508
  %4549 = vmatprep.subr.mxu0 0.0
  %4550 = vmatpush1.msra.mxu0 %v4507
  %4551 = vmatprep.subr.mxu0 0.0
  %4552 = vmatpush1.msra.mxu0 %v4506
  %4553 = vmatprep.subr.mxu0 0.0
  %4554 = vmatpush1.msra.mxu0 %v4505
  %4555 = vmatprep.subr.mxu0 0.0
  %4556 = vmatpush2.msra.mxu0 0.0
  %4557 = vmatprep.subr.mxu0 0.0
  %4558 = vmatpush2.msra.mxu0 0.0
  %4559 = vmatprep.subr.mxu0 0.0
  %4560 = vmatpush2.msra.mxu0 0.0
  %4561 = vmatprep.subr.mxu0 0.0
  %4562 = vmatpush2.msra.mxu0 0.0
  %4563 = vmatprep.subr.mxu0 0.0
  %4564 = vmatpush2.msra.mxu0 0.0
  %4565 = vmatprep.subr.mxu0 0.0
  %4566 = vmatpush2.msra.mxu0 0.0
  %4567 = vmatprep.subr.mxu0 0.0
  %4568 = vmatpush2.msra.mxu0 0.0
  %4569 = vmatprep.subr.mxu0 0.0
  %4570 = vmatpush2.msra.mxu0 0.0
  %4571 = vmatprep.subr.mxu0 0.0
  %4572 = vmatpush2.msra.mxu0 0.0
  %4573 = vmatprep.subr.mxu0 0.0
  %4574 = vmatpush2.msra.mxu0 0.0
  %4575 = vmatprep.subr.mxu0 0.0
  %4576 = vmatpush2.msra.mxu0 0.0
  %4577 = vmatprep.subr.mxu0 0.0
  %4578 = vmatpush2.msra.mxu0 0.0
  %4579 = vmatprep.subr.mxu0 0.0
  %4580 = vmatpush2.msra.mxu0 0.0
  %4581 = vmatprep.subr.mxu0 0.0
  %4582 = vmatpush2.msra.mxu0 0.0
  %4583 = vmatprep.subr.mxu0 0.0
  %4584 = vmatpush2.msra.mxu0 0.0
  %4585 = vmatprep.subr.mxu0 0.0
  %4586 = vmatpush2.msra.mxu0 0.0
  %4587 = vmatprep.mubr.f32.mxu0 0.0
  %4588 = vmatmul.mubr.f32.gmra.mxu0 %v4521
  %v4589 = vpop.f32.mrf.mxu0
  %v4590 = vadd.f32 %v4518, %v4589
  %v4591 = vpop.f32.mrf.mxu0
  %4592 = vdwg.mxu0
  %v4593 = vmax.f32 %v4590, 0.0
  %v4594 = vld [vmem:[%s23] sm:$0xff]
  %v4595 = vld [vmem:[%s23 + $0x8] sm:$0xff]
  %v4596 = vld [vmem:[%s23 + $0x10] sm:$0xff]
  %v4597 = vld [vmem:[%s23 + $0x18] sm:$0xff]
  %v4598 = vld [vmem:[%s23 + $0x20] sm:$0xff]
  %v4599 = vld [vmem:[%s23 + $0x28] sm:$0xff]
  %v4600 = vld [vmem:[%s23 + $0x30] sm:$0xff]
  %v4601 = vld [vmem:[%s23 + $0x38] sm:$0xff]
  %v4602 = vld [vmem:[%s23 + $0x40] sm:$0xff]
  %v4603 = vld [vmem:[%s23 + $0x48] sm:$0xff]
  %v4604 = vld [vmem:[%s23 + $0x50] sm:$0xff]
  %v4605 = vld [vmem:[%s23 + $0x58] sm:$0xff]
  %v4606 = vld [vmem:[%s24] sm:$0x1]
  %v4608 = vlaneseq
  %v4609 = vshrl.u32 %v4608, 7
  %v4610 = vsub.s32 0, %v4609
  %v4611 = vrot.slane %v4606, %v4610
  %vm4613 = vcmask 785408
  %v4615 = vsel %vm4613, %v4593, 0
  %4617 = vmatprep.subr.mxu0 0.0
  %4618 = vmatpush1.msra.mxu0 0.0
  %4619 = vmatprep.subr.mxu0 0.0
  %4620 = vmatpush1.msra.mxu0 0.0
  %4621 = vmatprep.subr.mxu0 0.0
  %4622 = vmatpush1.msra.mxu0 0.0
  %4623 = vmatprep.subr.mxu0 0.0
  %4624 = vmatpush1.msra.mxu0 0.0
  %4625 = vmatprep.subr.mxu0 0.0
  %4626 = vmatpush1.msra.mxu0 %v4605
  %4627 = vmatprep.subr.mxu0 0.0
  %4628 = vmatpush1.msra.mxu0 %v4604
  %4629 = vmatprep.subr.mxu0 0.0
  %4630 = vmatpush1.msra.mxu0 %v4603
  %4631 = vmatprep.subr.mxu0 0.0
  %4632 = vmatpush1.msra.mxu0 %v4602
  %4633 = vmatprep.subr.mxu0 0.0
  %4634 = vmatpush1.msra.mxu0 %v4601
  %4635 = vmatprep.subr.mxu0 0.0
  %4636 = vmatpush1.msra.mxu0 %v4600
  %4637 = vmatprep.subr.mxu0 0.0
  %4638 = vmatpush1.msra.mxu0 %v4599
  %4639 = vmatprep.subr.mxu0 0.0
  %4640 = vmatpush1.msra.mxu0 %v4598
  %4641 = vmatprep.subr.mxu0 0.0
  %4642 = vmatpush1.msra.mxu0 %v4597
  %4643 = vmatprep.subr.mxu0 0.0
  %4644 = vmatpush1.msra.mxu0 %v4596
  %4645 = vmatprep.subr.mxu0 0.0
  %4646 = vmatpush1.msra.mxu0 %v4595
  %4647 = vmatprep.subr.mxu0 0.0
  %4648 = vmatpush1.msra.mxu0 %v4594
  %4649 = vmatprep.subr.mxu0 0.0
  %4650 = vmatpush2.msra.mxu0 0.0
  %4651 = vmatprep.subr.mxu0 0.0
  %4652 = vmatpush2.msra.mxu0 0.0
  %4653 = vmatprep.subr.mxu0 0.0
  %4654 = vmatpush2.msra.mxu0 0.0
  %4655 = vmatprep.subr.mxu0 0.0
  %4656 = vmatpush2.msra.mxu0 0.0
  %4657 = vmatprep.subr.mxu0 0.0
  %4658 = vmatpush2.msra.mxu0 0.0
  %4659 = vmatprep.subr.mxu0 0.0
  %4660 = vmatpush2.msra.mxu0 0.0
  %4661 = vmatprep.subr.mxu0 0.0
  %4662 = vmatpush2.msra.mxu0 0.0
  %4663 = vmatprep.subr.mxu0 0.0
  %4664 = vmatpush2.msra.mxu0 0.0
  %4665 = vmatprep.subr.mxu0 0.0
  %4666 = vmatpush2.msra.mxu0 0.0
  %4667 = vmatprep.subr.mxu0 0.0
  %4668 = vmatpush2.msra.mxu0 0.0
  %4669 = vmatprep.subr.mxu0 0.0
  %4670 = vmatpush2.msra.mxu0 0.0
  %4671 = vmatprep.subr.mxu0 0.0
  %4672 = vmatpush2.msra.mxu0 0.0
  %4673 = vmatprep.subr.mxu0 0.0
  %4674 = vmatpush2.msra.mxu0 0.0
  %4675 = vmatprep.subr.mxu0 0.0
  %4676 = vmatpush2.msra.mxu0 0.0
  %4677 = vmatprep.subr.mxu0 0.0
  %4678 = vmatpush2.msra.mxu0 0.0
  %4679 = vmatprep.subr.mxu0 0.0
  %4680 = vmatpush2.msra.mxu0 0.0
  %4681 = vmatprep.mubr.f32.mxu0 0.0
  %4682 = vmatmul.mubr.f32.gmra.mxu0 %v4615
  %v4683 = vpop.f32.mrf.mxu0
  %v4684 = vadd.f32 %v4611, %v4683
  %v4685 = vpop.f32.mrf.mxu0
  %4686 = vdwg.mxu0
  %v4687 = vmax.f32 %v4684, 0.0
  %v4688 = vld [vmem:[%s25] sm:$0xff]
  %v4689 = vld [vmem:[%s25 + $0x8] sm:$0xff]
  %v4690 = vld [vmem:[%s25 + $0x10] sm:$0xff]
  %v4691 = vld [vmem:[%s25 + $0x18] sm:$0xff]
  %v4692 = vld [vmem:[%s25 + $0x20] sm:$0xff]
  %v4693 = vld [vmem:[%s25 + $0x28] sm:$0xff]
  %v4694 = vld [vmem:[%s25 + $0x30] sm:$0xff]
  %v4695 = vld [vmem:[%s25 + $0x38] sm:$0xff]
  %v4696 = vld [vmem:[%s25 + $0x40] sm:$0xff]
  %v4697 = vld [vmem:[%s25 + $0x48] sm:$0xff]
  %v4698 = vld [vmem:[%s25 + $0x50] sm:$0xff]
  %v4699 = vld [vmem:[%s25 + $0x58] sm:$0xff]
  %v4700 = vld [vmem:[%s26] sm:$0x1]
  %v4702 = vlaneseq
  %v4703 = vshrl.u32 %v4702, 7
  %v4704 = vsub.s32 0, %v4703
  %v4705 = vrot.slane %v4700, %v4704
  %v4708 = vsel %vm4613, %v4687, 0
  %4710 = vmatprep.subr.mxu0 0.0
  %4711 = vmatpush1.msra.mxu0 0.0
  %4712 = vmatprep.subr.mxu0 0.0
  %4713 = vmatpush1.msra.mxu0 0.0
  %4714 = vmatprep.subr.mxu0 0.0
  %4715 = vmatpush1.msra.mxu0 0.0
  %4716 = vmatprep.subr.mxu0 0.0
  %4717 = vmatpush1.msra.mxu0 0.0
  %4718 = vmatprep.subr.mxu0 0.0
  %4719 = vmatpush1.msra.mxu0 %v4699
  %4720 = vmatprep.subr.mxu0 0.0
  %4721 = vmatpush1.msra.mxu0 %v4698
  %4722 = vmatprep.subr.mxu0 0.0
  %4723 = vmatpush1.msra.mxu0 %v4697
  %4724 = vmatprep.subr.mxu0 0.0
  %4725 = vmatpush1.msra.mxu0 %v4696
  %4726 = vmatprep.subr.mxu0 0.0
  %4727 = vmatpush1.msra.mxu0 %v4695
  %4728 = vmatprep.subr.mxu0 0.0
  %4729 = vmatpush1.msra.mxu0 %v4694
  %4730 = vmatprep.subr.mxu0 0.0
  %4731 = vmatpush1.msra.mxu0 %v4693
  %4732 = vmatprep.subr.mxu0 0.0
  %4733 = vmatpush1.msra.mxu0 %v4692
  %4734 = vmatprep.subr.mxu0 0.0
  %4735 = vmatpush1.msra.mxu0 %v4691
  %4736 = vmatprep.subr.mxu0 0.0
  %4737 = vmatpush1.msra.mxu0 %v4690
  %4738 = vmatprep.subr.mxu0 0.0
  %4739 = vmatpush1.msra.mxu0 %v4689
  %4740 = vmatprep.subr.mxu0 0.0
  %4741 = vmatpush1.msra.mxu0 %v4688
  %4742 = vmatprep.subr.mxu0 0.0
  %4743 = vmatpush2.msra.mxu0 0.0
  %4744 = vmatprep.subr.mxu0 0.0
  %4745 = vmatpush2.msra.mxu0 0.0
  %4746 = vmatprep.subr.mxu0 0.0
  %4747 = vmatpush2.msra.mxu0 0.0
  %4748 = vmatprep.subr.mxu0 0.0
  %4749 = vmatpush2.msra.mxu0 0.0
  %4750 = vmatprep.subr.mxu0 0.0
  %4751 = vmatpush2.msra.mxu0 0.0
  %4752 = vmatprep.subr.mxu0 0.0
  %4753 = vmatpush2.msra.mxu0 0.0
  %4754 = vmatprep.subr.mxu0 0.0
  %4755 = vmatpush2.msra.mxu0 0.0
  %4756 = vmatprep.subr.mxu0 0.0
  %4757 = vmatpush2.msra.mxu0 0.0
  %4758 = vmatprep.subr.mxu0 0.0
  %4759 = vmatpush2.msra.mxu0 0.0
  %4760 = vmatprep.subr.mxu0 0.0
  %4761 = vmatpush2.msra.mxu0 0.0
  %4762 = vmatprep.subr.mxu0 0.0
  %4763 = vmatpush2.msra.mxu0 0.0
  %4764 = vmatprep.subr.mxu0 0.0
  %4765 = vmatpush2.msra.mxu0 0.0
  %4766 = vmatprep.subr.mxu0 0.0
  %4767 = vmatpush2.msra.mxu0 0.0
  %4768 = vmatprep.subr.mxu0 0.0
  %4769 = vmatpush2.msra.mxu0 0.0
  %4770 = vmatprep.subr.mxu0 0.0
  %4771 = vmatpush2.msra.mxu0 0.0
  %4772 = vmatprep.subr.mxu0 0.0
  %4773 = vmatpush2.msra.mxu0 0.0
  %4774 = vmatprep.mubr.f32.mxu0 0.0
  %4775 = vmatmul.mubr.f32.gmra.mxu0 %v4708
  %v4776 = vpop.f32.mrf.mxu0
  %v4777 = vadd.f32 %v4705, %v4776
  %v4778 = vpop.f32.mrf.mxu0
  %4779 = vdwg.mxu0
  %v4780 = vxor.u32 %v4777, 2147483648
  %v4781 = vmul.f32 %v4780, 1.442695
  %v4782 = vpow.pop %v4781
  %v4783 = vadd.f32 %v4782, 1.0
  %v4784 = vrcp.pop %v4783
  %v4785 = vmul.f32 1.0, %v4784
  %vm4786 = vcmask 17408
  %4787 = vst.msk [vmem:[%s27] sm:$0x3] %vm4786, %v4785
  // Predicated region
  $region110: #{reward_gen_forward.1} parent=0 // pred_check
    _
  $region111: #{reward_gen_forward.1} parent=0 // pred_check_branch
    %4789 = sbr.rel (0) target = $region113
  $region112: #{reward_gen_forward.1} parent=0 // pred_region
    _
  $region113: #{reward_gen_forward.1} parent=0 // pred_fallthru
    _
  // Predicated region
  $region114: #{reward_gen_forward.1} parent=0 // pred_check
    _
  $region115: #{reward_gen_forward.1} parent=0 // pred_check_branch
    %4791 = sbr.rel (0) target = $region117
  $region116: #{reward_gen_forward.1} parent=0 // pred_region
    _
  $region117: #{reward_gen_forward.1} parent=0 // pred_fallthru
    _

</llo_original>
